<compile_context>
chip_gen: v7x
topology: tpu7x:2x2x1
jax: 0.10.0
libtpu: 0.0.40
codegen_flags: <defaults>
</compile_context>

<pallas_src>
import jax
import jax.numpy as jnp
import numpy as np
from jax.experimental import pallas as pl
from jax.experimental.pallas import tpu as pltpu  # noqa: F401  (TPU backend)


# ----------------------------------------------------------------------------
# Fused Pallas kernel: 2-layer LSTM + inter-layer LayerNorm, whole sequence.
# ----------------------------------------------------------------------------
def rnn_encoder_kernel(emb_ref, wx0_ref, whh0_ref, b0_ref,
                       wx1_ref, whh1_ref, b1_ref,
                       gamma_ref, beta_ref,
                       mb_ref, hn_ref, cn_ref):
    """Fused 2-layer LSTM encoder with inter-layer LayerNorm.

    emb_ref   : (B, T, D)   batch-first input (whole array resident in VMEM)
    wx0_ref   : (D, 4H)     layer-0 input projection  W_ih^T (i/f/o cols *0.5)
    whh0_ref  : (H, 4H)     layer-0 recurrent weights W_hh^T (i/f/o cols *0.5)
    b0_ref    : (1, 4H)     layer-0 combined bias (b_ih+b_hh, i/f/o cols *0.5)
    wx1_ref   : (H, 4H)     layer-1 input projection
    whh1_ref  : (H, 4H)     layer-1 recurrent weights
    b1_ref    : (1, 4H)     layer-1 combined bias
    gamma_ref : (1, H)      LayerNorm weight (eps = 1e-6)
    beta_ref  : (1, H)      LayerNorm bias
    mb_ref    : (B, T, H)   memory bank (last layer hidden states, batch-first)
    hn_ref    : (1, B, H)   final hidden state of last layer
    cn_ref    : (1, B, H)   final cell state of last layer
    """
    B, T, D = emb_ref.shape
    H = hn_ref.shape[-1]

    # Loop-invariant operands loaded once (reused across the unrolled loop).
    whh0 = whh0_ref[...]
    wx1 = wx1_ref[...]
    whh1 = whh1_ref[...]
    b1 = b1_ref[...]
    gamma = gamma_ref[...]
    beta = beta_ref[...]

    # ---- Hoisted layer-0 input projection (off the recurrence chain) -------
    # One (B*T, D) @ (D, 4H) matmul + bias, reshaped back to (B, T, 4H) so
    # each step takes a static sublane slice.
    x_all = emb_ref[...].reshape(B * T, D)
    gx0 = (jnp.dot(x_all, wx0_ref[...], preferred_element_type=jnp.float32)
           + b0_ref[...]).reshape(B, T, 4 * H)

    def lstm_gates(gates, c):
        # i/f/o gate columns were pre-scaled by 0.5 on the host, so a single
        # full-width (B, 4H=128 lanes) tanh yields tanh(z/2) there and
        # sigmoid(z) = 0.5*tanh(z/2) + 0.5 is a cheap VPU FMA; the g column is
        # unscaled so tanh(z) is read directly.
        t_all = jnp.tanh(gates)
        s_all = 0.5 * t_all + 0.5
        i_g = s_all[:, 0 * H:1 * H]
        f_g = s_all[:, 1 * H:2 * H]
        g_g = t_all[:, 2 * H:3 * H]
        o_g = s_all[:, 3 * H:4 * H]
        c_new = f_g * c + i_g * g_g
        h_new = o_g * jnp.tanh(c_new)
        return h_new, c_new

    zeros = jnp.zeros((B, H), jnp.float32)
    h0, c0, h1, c1 = zeros, zeros, zeros, zeros
    inv_h = jnp.float32(1.0 / H)

    # T is a static shape (=8): the loop is fully unrolled at trace time, so
    # every time-step slice below is a static sublane offset.
    for t in range(T):
        # ---- layer 0: only the recurrent matmul sits on the serial chain ----
        g0 = gx0[:, t, :] + jnp.dot(h0, whh0,
                                    preferred_element_type=jnp.float32)
        h0, c0 = lstm_gates(g0, c0)

        # ---- Dropout(p=0.0) = identity; LayerNorm(H, eps=1e-6) -------------
        # Independent sums so the two cross-lane reductions overlap on the
        # XLUs; gamma*rsqrt folded into one scale.
        mu = jnp.sum(h0, axis=-1, keepdims=True) * inv_h
        ms = jnp.sum(h0 * h0, axis=-1, keepdims=True) * inv_h
        scale = gamma * jax.lax.rsqrt(ms - mu * mu + 1e-6)
        xn = h0 * scale + (beta - mu * scale)

        # ---- layer 1: two matmuls, no lane concat ---------------------------
        # h1 @ whh1 depends only on step t-1, so it overlaps with the layer-0
        # and LayerNorm work of step t; only xn @ wx1 stays on the chain.
        g1 = (jnp.dot(xn, wx1, preferred_element_type=jnp.float32)
              + jnp.dot(h1, whh1, preferred_element_type=jnp.float32)
              + b1)
        h1, c1 = lstm_gates(g1, c1)

        # Memory bank built directly in its batch-first output block.
        mb_ref[:, t, :] = h1

    # Final states written once, after the loop.
    hn_ref[0] = h1
    cn_ref[0] = c1


# ----------------------------------------------------------------------------
# Wrapper
# ----------------------------------------------------------------------------
def rnn_encoder_forward(emb, kparams):
    """emb: (B, T, D) batch-first. Returns ((h_n, c_n), memory_bank)."""
    B, T, _ = emb.shape
    wx0, whh0, b0, wx1, whh1, b1, gamma, beta = kparams
    H = gamma.shape[-1]
    memory_bank, h_n, c_n = pl.pallas_call(
        rnn_encoder_kernel,
        out_shape=(jax.ShapeDtypeStruct((B, T, H), jnp.float32),
                   jax.ShapeDtypeStruct((1, B, H), jnp.float32),
                   jax.ShapeDtypeStruct((1, B, H), jnp.float32)),
    )(emb.astype(jnp.float32), wx0, whh0, b0, wx1, whh1, b1, gamma, beta)
    # use_last=True -> encoder_final is the last layer's (h_n, c_n), (1, B, H).
    # memory_bank.size(1) == emb.size(1) here, so no zero-padding branch.
    return (h_n, c_n), memory_bank


def pack_kernel_params(params):
    """Pre-split/pre-transpose/pre-scale PyTorch-layout LSTM weights.

    PyTorch: gates = x @ W_ih^T + h @ W_hh^T + b_ih + b_hh, gate order [i,f,g,o].
    Kernel : gates = x @ Wx + h @ Whh + b  with Wx = W_ih^T, Whh = W_hh^T,
             b = b_ih + b_hh, and the i/f/o columns of Wx, Whh, b scaled by
             0.5 so sigmoid can be recovered from a single tanh in-kernel
             (sigmoid(z) = 0.5*tanh(z/2) + 0.5).
    """
    H = params["ln_gamma"].shape[-1]
    col_scale = jnp.concatenate([
        jnp.full((H,), 0.5, jnp.float32),   # i
        jnp.full((H,), 0.5, jnp.float32),   # f
        jnp.ones((H,), jnp.float32),        # g (stays tanh)
        jnp.full((H,), 0.5, jnp.float32),   # o
    ], axis=0)                              # (4H,)
    packed = []
    for layer in params["layers"]:
        wx = layer["w_ih"].T * col_scale                              # (Din,4H)
        whh = layer["w_hh"].T * col_scale                             # (H, 4H)
        b = ((layer["b_ih"] + layer["b_hh"]) * col_scale)[None, :]    # (1, 4H)
        packed.append((wx.astype(jnp.float32), whh.astype(jnp.float32),
                       b.astype(jnp.float32)))
    (wx0, whh0, b0), (wx1, whh1, b1) = packed
    gamma = params["ln_gamma"][None, :].astype(jnp.float32)
    beta = params["ln_beta"][None, :].astype(jnp.float32)
    return (wx0, whh0, b0, wx1, whh1, b1, gamma, beta)


# ----------------------------------------------------------------------------
# Pure-JAX reference (emulates the PyTorch module; for correctness check)
# ----------------------------------------------------------------------------
def reference_forward(emb, params):
    x = jnp.transpose(emb, (1, 0, 2)).astype(jnp.float32)   # time-major (T,B,D)
    h_n = c_n = None
    for i, layer in enumerate(params["layers"]):
        if i != 0:
            mu = jnp.mean(x, axis=-1, keepdims=True)
            var = jnp.mean((x - mu) ** 2, axis=-1, keepdims=True)
            x = ((x - mu) * jax.lax.rsqrt(var + 1e-6)
                 * params["ln_gamma"] + params["ln_beta"])
        w_ih, w_hh = layer["w_ih"], layer["w_hh"]
        b = layer["b_ih"] + layer["b_hh"]
        H = w_hh.shape[1]
        B = x.shape[1]

        def step(carry, x_t, w_ih=w_ih, w_hh=w_hh, b=b, H=H):
            h, c = carry
            g = jnp.dot(x_t, w_ih.T) + jnp.dot(h, w_hh.T) + b
            i_g = jax.nn.sigmoid(g[:, 0 * H:1 * H])
            f_g = jax.nn.sigmoid(g[:, 1 * H:2 * H])
            g_g = jnp.tanh(g[:, 2 * H:3 * H])
            o_g = jax.nn.sigmoid(g[:, 3 * H:4 * H])
            c = f_g * c + i_g * g_g
            h = o_g * jnp.tanh(c)
            return (h, c), h

        init = (jnp.zeros((B, H), jnp.float32), jnp.zeros((B, H), jnp.float32))
        (h_n, c_n), x = jax.lax.scan(step, init, x)
    return (h_n[None], c_n[None]), jnp.transpose(x, (1, 0, 2))


# ----------------------------------------------------------------------------
# Deterministic parameter construction (matches the module's init scheme)
# ----------------------------------------------------------------------------
def make_params(key, input_size, hidden_size, num_layers):
    ortho = jax.nn.initializers.orthogonal()   # nn.init.orthogonal_ on weights
    bound = 1.0 / np.sqrt(hidden_size)          # PyTorch LSTM bias default init
    layers = []
    for i in range(num_layers):
        d_in = input_size if i == 0 else hidden_size
        key, k1, k2, k3, k4 = jax.random.split(key, 5)
        layers.append({
            "w_ih": ortho(k1, (4 * hidden_size, d_in), jnp.float32),
            "w_hh": ortho(k2, (4 * hidden_size, hidden_size), jnp.float32),
            "b_ih": jax.random.uniform(k3, (4 * hidden_size,), jnp.float32,
                                       -bound, bound),
            "b_hh": jax.random.uniform(k4, (4 * hidden_size,), jnp.float32,
                                       -bound, bound),
        })
    return {
        "layers": layers,
        "ln_gamma": jnp.ones((hidden_size,), jnp.float32),   # LayerNorm defaults
        "ln_beta": jnp.zeros((hidden_size,), jnp.float32),
    }


# TODO(synk): packed-sequence (lengths) handling and the use_bridge Linear+ReLU
# bridge are not exercised by this config (lengths=None, use_bridge=False) and
# are omitted.

if __name__ == "__main__":
    B, T, D, HID, NLAYERS = 2, 8, 16, 32, 2   # hidden_size=32, unidirectional

    key = jax.random.PRNGKey(0)
    key, k_emb, k_par = jax.random.split(key, 3)
    emb = jax.random.normal(k_emb, (B, T, D), jnp.float32)
    params = make_params(k_par, D, HID, NLAYERS)
    kparams = pack_kernel_params(params)

    fwd = jax.jit(rnn_encoder_forward)
    (h_n, c_n), memory_bank = fwd(emb, kparams)
    jax.block_until_ready((h_n, c_n, memory_bank))

    (h_ref, c_ref), mb_ref = reference_forward(emb, params)
    np.testing.assert_allclose(np.asarray(memory_bank), np.asarray(mb_ref),
                               rtol=1e-3, atol=1e-3)
    np.testing.assert_allclose(np.asarray(h_n), np.asarray(h_ref),
                               rtol=1e-3, atol=1e-3)
    np.testing.assert_allclose(np.asarray(c_n), np.asarray(c_ref),
                               rtol=1e-3, atol=1e-3)

    assert h_n.shape == (1, B, HID) and c_n.shape == (1, B, HID)
    assert memory_bank.shape == (B, T, HID)
    print("KERNEL_OK")
</pallas_src>

<mosaic_0001>
module attributes {stable_mosaic.version = 11 : i64} {
  func.func @rnn_encoder_kernel(%arg0: memref<2x8x16xf32, #tpu.memory_space<vmem>>, %arg1: memref<16x128xf32, #tpu.memory_space<vmem>>, %arg2: memref<32x128xf32, #tpu.memory_space<vmem>>, %arg3: memref<1x128xf32, #tpu.memory_space<vmem>>, %arg4: memref<32x128xf32, #tpu.memory_space<vmem>>, %arg5: memref<32x128xf32, #tpu.memory_space<vmem>>, %arg6: memref<1x128xf32, #tpu.memory_space<vmem>>, %arg7: memref<1x32xf32, #tpu.memory_space<vmem>>, %arg8: memref<1x32xf32, #tpu.memory_space<vmem>>, %arg9: memref<2x8x32xf32, #tpu.memory_space<vmem>>, %arg10: memref<1x2x32xf32, #tpu.memory_space<vmem>>, %arg11: memref<1x2x32xf32, #tpu.memory_space<vmem>>) attributes {dimension_semantics = [], scalar_prefetch = 0 : i64, scratch_operands = 0 : i64, tpu.core_type = #tpu.core_type<tc>} {
    %c0 = arith.constant 0 : index
    %c0_0 = arith.constant 0 : index
    %0 = vector.load %arg2[%c0, %c0_0] : memref<32x128xf32, #tpu.memory_space<vmem>>, vector<32x128xf32>
    %c0_1 = arith.constant 0 : index
    %c0_2 = arith.constant 0 : index
    %1 = vector.load %arg4[%c0_1, %c0_2] : memref<32x128xf32, #tpu.memory_space<vmem>>, vector<32x128xf32>
    %c0_3 = arith.constant 0 : index
    %c0_4 = arith.constant 0 : index
    %2 = vector.load %arg5[%c0_3, %c0_4] : memref<32x128xf32, #tpu.memory_space<vmem>>, vector<32x128xf32>
    %c0_5 = arith.constant 0 : index
    %c0_6 = arith.constant 0 : index
    %3 = vector.load %arg6[%c0_5, %c0_6] : memref<1x128xf32, #tpu.memory_space<vmem>>, vector<1x128xf32>
    %c0_7 = arith.constant 0 : index
    %c0_8 = arith.constant 0 : index
    %4 = vector.load %arg7[%c0_7, %c0_8] : memref<1x32xf32, #tpu.memory_space<vmem>>, vector<1x32xf32>
    %c0_9 = arith.constant 0 : index
    %c0_10 = arith.constant 0 : index
    %5 = vector.load %arg8[%c0_9, %c0_10] : memref<1x32xf32, #tpu.memory_space<vmem>>, vector<1x32xf32>
    %c0_11 = arith.constant 0 : index
    %c0_12 = arith.constant 0 : index
    %c0_13 = arith.constant 0 : index
    %6 = vector.load %arg0[%c0_11, %c0_12, %c0_13] : memref<2x8x16xf32, #tpu.memory_space<vmem>>, vector<2x8x16xf32>
    %7 = vector.shape_cast %6 : vector<2x8x16xf32> to vector<16x16xf32>
    %c0_14 = arith.constant 0 : index
    %c0_15 = arith.constant 0 : index
    %8 = vector.load %arg1[%c0_14, %c0_15] : memref<16x128xf32, #tpu.memory_space<vmem>>, vector<16x128xf32>
    %cst = arith.constant dense<0.000000e+00> : vector<16x128xf32>
    %9 = tpu.matmul %7, %8, %cst {dimension_numbers = #tpu.dot_dimension_numbers<[1], [0], [0], [1], [0, 0, 1, 1], [], []>} : vector<16x16xf32>, vector<16x128xf32>, vector<16x128xf32> -> vector<16x128xf32>
    %c0_16 = arith.constant 0 : index
    %c0_17 = arith.constant 0 : index
    %10 = vector.load %arg3[%c0_16, %c0_17] : memref<1x128xf32, #tpu.memory_space<vmem>>, vector<1x128xf32>
    %11 = vector.broadcast %10 : vector<1x128xf32> to vector<16x128xf32>
    %12 = arith.addf %9, %11 : vector<16x128xf32>
    %13 = vector.shape_cast %12 : vector<16x128xf32> to vector<2x8x128xf32>
    %cst_18 = arith.constant 0.000000e+00 : f32
    %14 = vector.broadcast %cst_18 : f32 to vector<2x32xf32>
    %15 = vector.extract_strided_slice %13 {offsets = [0, 0, 0], sizes = [2, 1, 128], strides = [1, 1, 1]} : vector<2x8x128xf32> to vector<2x1x128xf32>
    %16 = vector.shape_cast %15 : vector<2x1x128xf32> to vector<2x128xf32>
    %cst_19 = arith.constant dense<0.000000e+00> : vector<2x128xf32>
    %17 = tpu.matmul %14, %0, %cst_19 {dimension_numbers = #tpu.dot_dimension_numbers<[1], [0], [0], [1], [0, 0, 1, 1], [], []>} : vector<2x32xf32>, vector<32x128xf32>, vector<2x128xf32> -> vector<2x128xf32>
    %18 = arith.addf %16, %17 : vector<2x128xf32>
    %19 = math.tanh %18 : vector<2x128xf32>
    %cst_20 = arith.constant 5.000000e-01 : f32
    %20 = vector.broadcast %cst_20 : f32 to vector<2x128xf32>
    %21 = arith.mulf %20, %19 : vector<2x128xf32>
    %cst_21 = arith.constant 5.000000e-01 : f32
    %22 = vector.broadcast %cst_21 : f32 to vector<2x128xf32>
    %23 = arith.addf %21, %22 : vector<2x128xf32>
    %24 = vector.extract_strided_slice %23 {offsets = [0, 0], sizes = [2, 32], strides = [1, 1]} : vector<2x128xf32> to vector<2x32xf32>
    %25 = vector.extract_strided_slice %23 {offsets = [0, 32], sizes = [2, 32], strides = [1, 1]} : vector<2x128xf32> to vector<2x32xf32>
    %26 = vector.extract_strided_slice %19 {offsets = [0, 64], sizes = [2, 32], strides = [1, 1]} : vector<2x128xf32> to vector<2x32xf32>
    %27 = vector.extract_strided_slice %23 {offsets = [0, 96], sizes = [2, 32], strides = [1, 1]} : vector<2x128xf32> to vector<2x32xf32>
    %28 = arith.mulf %25, %14 : vector<2x32xf32>
    %29 = arith.mulf %24, %26 : vector<2x32xf32>
    %30 = arith.addf %28, %29 : vector<2x32xf32>
    %31 = math.tanh %30 : vector<2x32xf32>
    %32 = arith.mulf %27, %31 : vector<2x32xf32>
    %cst_22 = arith.constant dense<0.000000e+00> : vector<2xf32>
    %33 = vector.multi_reduction <add>, %32, %cst_22 [1] : vector<2x32xf32> to vector<2xf32>
    %34 = vector.shape_cast %33 : vector<2xf32> to vector<2x1xf32>
    %cst_23 = arith.constant 3.125000e-02 : f32
    %35 = vector.broadcast %cst_23 : f32 to vector<2x1xf32>
    %36 = arith.mulf %34, %35 : vector<2x1xf32>
    %37 = arith.mulf %32, %32 : vector<2x32xf32>
    %cst_24 = arith.constant dense<0.000000e+00> : vector<2xf32>
    %38 = vector.multi_reduction <add>, %37, %cst_24 [1] : vector<2x32xf32> to vector<2xf32>
    %39 = vector.shape_cast %38 : vector<2xf32> to vector<2x1xf32>
    %cst_25 = arith.constant 3.125000e-02 : f32
    %40 = vector.broadcast %cst_25 : f32 to vector<2x1xf32>
    %41 = arith.mulf %39, %40 : vector<2x1xf32>
    %42 = arith.mulf %36, %36 : vector<2x1xf32>
    %43 = arith.subf %41, %42 : vector<2x1xf32>
    %cst_26 = arith.constant 9.99999997E-7 : f32
    %44 = vector.broadcast %cst_26 : f32 to vector<2x1xf32>
    %45 = arith.addf %43, %44 : vector<2x1xf32>
    %46 = math.rsqrt %45 : vector<2x1xf32>
    %47 = vector.broadcast %4 : vector<1x32xf32> to vector<2x32xf32>
    %48 = vector.broadcast %46 : vector<2x1xf32> to vector<2x32xf32>
    %49 = arith.mulf %47, %48 : vector<2x32xf32>
    %50 = arith.mulf %32, %49 : vector<2x32xf32>
    %51 = vector.broadcast %36 : vector<2x1xf32> to vector<2x32xf32>
    %52 = arith.mulf %51, %49 : vector<2x32xf32>
    %53 = vector.broadcast %5 : vector<1x32xf32> to vector<2x32xf32>
    %54 = arith.subf %53, %52 : vector<2x32xf32>
    %55 = arith.addf %50, %54 : vector<2x32xf32>
    %cst_27 = arith.constant dense<0.000000e+00> : vector<2x128xf32>
    %56 = tpu.matmul %55, %1, %cst_27 {dimension_numbers = #tpu.dot_dimension_numbers<[1], [0], [0], [1], [0, 0, 1, 1], [], []>} : vector<2x32xf32>, vector<32x128xf32>, vector<2x128xf32> -> vector<2x128xf32>
    %cst_28 = arith.constant dense<0.000000e+00> : vector<2x128xf32>
    %57 = tpu.matmul %14, %2, %cst_28 {dimension_numbers = #tpu.dot_dimension_numbers<[1], [0], [0], [1], [0, 0, 1, 1], [], []>} : vector<2x32xf32>, vector<32x128xf32>, vector<2x128xf32> -> vector<2x128xf32>
    %58 = arith.addf %56, %57 : vector<2x128xf32>
    %59 = vector.broadcast %3 : vector<1x128xf32> to vector<2x128xf32>
    %60 = arith.addf %58, %59 : vector<2x128xf32>
    %61 = math.tanh %60 : vector<2x128xf32>
    %cst_29 = arith.constant 5.000000e-01 : f32
    %62 = vector.broadcast %cst_29 : f32 to vector<2x128xf32>
    %63 = arith.mulf %62, %61 : vector<2x128xf32>
    %cst_30 = arith.constant 5.000000e-01 : f32
    %64 = vector.broadcast %cst_30 : f32 to vector<2x128xf32>
    %65 = arith.addf %63, %64 : vector<2x128xf32>
    %66 = vector.extract_strided_slice %65 {offsets = [0, 0], sizes = [2, 32], strides = [1, 1]} : vector<2x128xf32> to vector<2x32xf32>
    %67 = vector.extract_strided_slice %65 {offsets = [0, 32], sizes = [2, 32], strides = [1, 1]} : vector<2x128xf32> to vector<2x32xf32>
    %68 = vector.extract_strided_slice %61 {offsets = [0, 64], sizes = [2, 32], strides = [1, 1]} : vector<2x128xf32> to vector<2x32xf32>
    %69 = vector.extract_strided_slice %65 {offsets = [0, 96], sizes = [2, 32], strides = [1, 1]} : vector<2x128xf32> to vector<2x32xf32>
    %70 = arith.mulf %67, %14 : vector<2x32xf32>
    %71 = arith.mulf %66, %68 : vector<2x32xf32>
    %72 = arith.addf %70, %71 : vector<2x32xf32>
    %73 = math.tanh %72 : vector<2x32xf32>
    %74 = arith.mulf %69, %73 : vector<2x32xf32>
    %c0_31 = arith.constant 0 : index
    %c0_32 = arith.constant 0 : index
    %c0_33 = arith.constant 0 : index
    %75 = vector.load %arg9[%c0_31, %c0_32, %c0_33] : memref<2x8x32xf32, #tpu.memory_space<vmem>>, vector<2x1x32xf32>
    %76 = vector.shape_cast %75 : vector<2x1x32xf32> to vector<2x32xf32>
    %77 = vector.shape_cast %74 : vector<2x32xf32> to vector<2x1x32xf32>
    tpu.vector_store %arg9[%c0_31, %c0_32, %c0_33], %77 {strides = array<i32>} : memref<2x8x32xf32, #tpu.memory_space<vmem>>, vector<2x1x32xf32>,
    %78 = vector.extract_strided_slice %13 {offsets = [0, 1, 0], sizes = [2, 1, 128], strides = [1, 1, 1]} : vector<2x8x128xf32> to vector<2x1x128xf32>
    %79 = vector.shape_cast %78 : vector<2x1x128xf32> to vector<2x128xf32>
    %cst_34 = arith.constant dense<0.000000e+00> : vector<2x128xf32>
    %80 = tpu.matmul %32, %0, %cst_34 {dimension_numbers = #tpu.dot_dimension_numbers<[1], [0], [0], [1], [0, 0, 1, 1], [], []>} : vector<2x32xf32>, vector<32x128xf32>, vector<2x128xf32> -> vector<2x128xf32>
    %81 = arith.addf %79, %80 : vector<2x128xf32>
    %82 = math.tanh %81 : vector<2x128xf32>
    %cst_35 = arith.constant 5.000000e-01 : f32
    %83 = vector.broadcast %cst_35 : f32 to vector<2x128xf32>
    %84 = arith.mulf %83, %82 : vector<2x128xf32>
    %cst_36 = arith.constant 5.000000e-01 : f32
    %85 = vector.broadcast %cst_36 : f32 to vector<2x128xf32>
    %86 = arith.addf %84, %85 : vector<2x128xf32>
    %87 = vector.extract_strided_slice %86 {offsets = [0, 0], sizes = [2, 32], strides = [1, 1]} : vector<2x128xf32> to vector<2x32xf32>
    %88 = vector.extract_strided_slice %86 {offsets = [0, 32], sizes = [2, 32], strides = [1, 1]} : vector<2x128xf32> to vector<2x32xf32>
    %89 = vector.extract_strided_slice %82 {offsets = [0, 64], sizes = [2, 32], strides = [1, 1]} : vector<2x128xf32> to vector<2x32xf32>
    %90 = vector.extract_strided_slice %86 {offsets = [0, 96], sizes = [2, 32], strides = [1, 1]} : vector<2x128xf32> to vector<2x32xf32>
    %91 = arith.mulf %88, %30 : vector<2x32xf32>
    %92 = arith.mulf %87, %89 : vector<2x32xf32>
    %93 = arith.addf %91, %92 : vector<2x32xf32>
    %94 = math.tanh %93 : vector<2x32xf32>
    %95 = arith.mulf %90, %94 : vector<2x32xf32>
    %cst_37 = arith.constant dense<0.000000e+00> : vector<2xf32>
    %96 = vector.multi_reduction <add>, %95, %cst_37 [1] : vector<2x32xf32> to vector<2xf32>
    %97 = vector.shape_cast %96 : vector<2xf32> to vector<2x1xf32>
    %cst_38 = arith.constant 3.125000e-02 : f32
    %98 = vector.broadcast %cst_38 : f32 to vector<2x1xf32>
    %99 = arith.mulf %97, %98 : vector<2x1xf32>
    %100 = arith.mulf %95, %95 : vector<2x32xf32>
    %cst_39 = arith.constant dense<0.000000e+00> : vector<2xf32>
    %101 = vector.multi_reduction <add>, %100, %cst_39 [1] : vector<2x32xf32> to vector<2xf32>
    %102 = vector.shape_cast %101 : vector<2xf32> to vector<2x1xf32>
    %cst_40 = arith.constant 3.125000e-02 : f32
    %103 = vector.broadcast %cst_40 : f32 to vector<2x1xf32>
    %104 = arith.mulf %102, %103 : vector<2x1xf32>
    %105 = arith.mulf %99, %99 : vector<2x1xf32>
    %106 = arith.subf %104, %105 : vector<2x1xf32>
    %cst_41 = arith.constant 9.99999997E-7 : f32
    %107 = vector.broadcast %cst_41 : f32 to vector<2x1xf32>
    %108 = arith.addf %106, %107 : vector<2x1xf32>
    %109 = math.rsqrt %108 : vector<2x1xf32>
    %110 = vector.broadcast %4 : vector<1x32xf32> to vector<2x32xf32>
    %111 = vector.broadcast %109 : vector<2x1xf32> to vector<2x32xf32>
    %112 = arith.mulf %110, %111 : vector<2x32xf32>
    %113 = arith.mulf %95, %112 : vector<2x32xf32>
    %114 = vector.broadcast %99 : vector<2x1xf32> to vector<2x32xf32>
    %115 = arith.mulf %114, %112 : vector<2x32xf32>
    %116 = vector.broadcast %5 : vector<1x32xf32> to vector<2x32xf32>
    %117 = arith.subf %116, %115 : vector<2x32xf32>
    %118 = arith.addf %113, %117 : vector<2x32xf32>
    %cst_42 = arith.constant dense<0.000000e+00> : vector<2x128xf32>
    %119 = tpu.matmul %118, %1, %cst_42 {dimension_numbers = #tpu.dot_dimension_numbers<[1], [0], [0], [1], [0, 0, 1, 1], [], []>} : vector<2x32xf32>, vector<32x128xf32>, vector<2x128xf32> -> vector<2x128xf32>
    %cst_43 = arith.constant dense<0.000000e+00> : vector<2x128xf32>
    %120 = tpu.matmul %74, %2, %cst_43 {dimension_numbers = #tpu.dot_dimension_numbers<[1], [0], [0], [1], [0, 0, 1, 1], [], []>} : vector<2x32xf32>, vector<32x128xf32>, vector<2x128xf32> -> vector<2x128xf32>
    %121 = arith.addf %119, %120 : vector<2x128xf32>
    %122 = vector.broadcast %3 : vector<1x128xf32> to vector<2x128xf32>
    %123 = arith.addf %121, %122 : vector<2x128xf32>
    %124 = math.tanh %123 : vector<2x128xf32>
    %cst_44 = arith.constant 5.000000e-01 : f32
    %125 = vector.broadcast %cst_44 : f32 to vector<2x128xf32>
    %126 = arith.mulf %125, %124 : vector<2x128xf32>
    %cst_45 = arith.constant 5.000000e-01 : f32
    %127 = vector.broadcast %cst_45 : f32 to vector<2x128xf32>
    %128 = arith.addf %126, %127 : vector<2x128xf32>
    %129 = vector.extract_strided_slice %128 {offsets = [0, 0], sizes = [2, 32], strides = [1, 1]} : vector<2x128xf32> to vector<2x32xf32>
    %130 = vector.extract_strided_slice %128 {offsets = [0, 32], sizes = [2, 32], strides = [1, 1]} : vector<2x128xf32> to vector<2x32xf32>
    %131 = vector.extract_strided_slice %124 {offsets = [0, 64], sizes = [2, 32], strides = [1, 1]} : vector<2x128xf32> to vector<2x32xf32>
    %132 = vector.extract_strided_slice %128 {offsets = [0, 96], sizes = [2, 32], strides = [1, 1]} : vector<2x128xf32> to vector<2x32xf32>
    %133 = arith.mulf %130, %72 : vector<2x32xf32>
    %134 = arith.mulf %129, %131 : vector<2x32xf32>
    %135 = arith.addf %133, %134 : vector<2x32xf32>
    %136 = math.tanh %135 : vector<2x32xf32>
    %137 = arith.mulf %132, %136 : vector<2x32xf32>
    %c0_46 = arith.constant 0 : index
    %c1 = arith.constant 1 : index
    %c0_47 = arith.constant 0 : index
    %138 = vector.load %arg9[%c0_46, %c1, %c0_47] : memref<2x8x32xf32, #tpu.memory_space<vmem>>, vector<2x1x32xf32>
    %139 = vector.shape_cast %138 : vector<2x1x32xf32> to vector<2x32xf32>
    %140 = vector.shape_cast %137 : vector<2x32xf32> to vector<2x1x32xf32>
    tpu.vector_store %arg9[%c0_46, %c1, %c0_47], %140 {strides = array<i32>} : memref<2x8x32xf32, #tpu.memory_space<vmem>>, vector<2x1x32xf32>,
    %141 = vector.extract_strided_slice %13 {offsets = [0, 2, 0], sizes = [2, 1, 128], strides = [1, 1, 1]} : vector<2x8x128xf32> to vector<2x1x128xf32>
    %142 = vector.shape_cast %141 : vector<2x1x128xf32> to vector<2x128xf32>
    %cst_48 = arith.constant dense<0.000000e+00> : vector<2x128xf32>
    %143 = tpu.matmul %95, %0, %cst_48 {dimension_numbers = #tpu.dot_dimension_numbers<[1], [0], [0], [1], [0, 0, 1, 1], [], []>} : vector<2x32xf32>, vector<32x128xf32>, vector<2x128xf32> -> vector<2x128xf32>
    %144 = arith.addf %142, %143 : vector<2x128xf32>
    %145 = math.tanh %144 : vector<2x128xf32>
    %cst_49 = arith.constant 5.000000e-01 : f32
    %146 = vector.broadcast %cst_49 : f32 to vector<2x128xf32>
    %147 = arith.mulf %146, %145 : vector<2x128xf32>
    %cst_50 = arith.constant 5.000000e-01 : f32
    %148 = vector.broadcast %cst_50 : f32 to vector<2x128xf32>
    %149 = arith.addf %147, %148 : vector<2x128xf32>
    %150 = vector.extract_strided_slice %149 {offsets = [0, 0], sizes = [2, 32], strides = [1, 1]} : vector<2x128xf32> to vector<2x32xf32>
    %151 = vector.extract_strided_slice %149 {offsets = [0, 32], sizes = [2, 32], strides = [1, 1]} : vector<2x128xf32> to vector<2x32xf32>
    %152 = vector.extract_strided_slice %145 {offsets = [0, 64], sizes = [2, 32], strides = [1, 1]} : vector<2x128xf32> to vector<2x32xf32>
    %153 = vector.extract_strided_slice %149 {offsets = [0, 96], sizes = [2, 32], strides = [1, 1]} : vector<2x128xf32> to vector<2x32xf32>
    %154 = arith.mulf %151, %93 : vector<2x32xf32>
    %155 = arith.mulf %150, %152 : vector<2x32xf32>
    %156 = arith.addf %154, %155 : vector<2x32xf32>
    %157 = math.tanh %156 : vector<2x32xf32>
    %158 = arith.mulf %153, %157 : vector<2x32xf32>
    %cst_51 = arith.constant dense<0.000000e+00> : vector<2xf32>
    %159 = vector.multi_reduction <add>, %158, %cst_51 [1] : vector<2x32xf32> to vector<2xf32>
    %160 = vector.shape_cast %159 : vector<2xf32> to vector<2x1xf32>
    %cst_52 = arith.constant 3.125000e-02 : f32
    %161 = vector.broadcast %cst_52 : f32 to vector<2x1xf32>
    %162 = arith.mulf %160, %161 : vector<2x1xf32>
    %163 = arith.mulf %158, %158 : vector<2x32xf32>
    %cst_53 = arith.constant dense<0.000000e+00> : vector<2xf32>
    %164 = vector.multi_reduction <add>, %163, %cst_53 [1] : vector<2x32xf32> to vector<2xf32>
    %165 = vector.shape_cast %164 : vector<2xf32> to vector<2x1xf32>
    %cst_54 = arith.constant 3.125000e-02 : f32
    %166 = vector.broadcast %cst_54 : f32 to vector<2x1xf32>
    %167 = arith.mulf %165, %166 : vector<2x1xf32>
    %168 = arith.mulf %162, %162 : vector<2x1xf32>
    %169 = arith.subf %167, %168 : vector<2x1xf32>
    %cst_55 = arith.constant 9.99999997E-7 : f32
    %170 = vector.broadcast %cst_55 : f32 to vector<2x1xf32>
    %171 = arith.addf %169, %170 : vector<2x1xf32>
    %172 = math.rsqrt %171 : vector<2x1xf32>
    %173 = vector.broadcast %4 : vector<1x32xf32> to vector<2x32xf32>
    %174 = vector.broadcast %172 : vector<2x1xf32> to vector<2x32xf32>
    %175 = arith.mulf %173, %174 : vector<2x32xf32>
    %176 = arith.mulf %158, %175 : vector<2x32xf32>
    %177 = vector.broadcast %162 : vector<2x1xf32> to vector<2x32xf32>
    %178 = arith.mulf %177, %175 : vector<2x32xf32>
    %179 = vector.broadcast %5 : vector<1x32xf32> to vector<2x32xf32>
    %180 = arith.subf %179, %178 : vector<2x32xf32>
    %181 = arith.addf %176, %180 : vector<2x32xf32>
    %cst_56 = arith.constant dense<0.000000e+00> : vector<2x128xf32>
    %182 = tpu.matmul %181, %1, %cst_56 {dimension_numbers = #tpu.dot_dimension_numbers<[1], [0], [0], [1], [0, 0, 1, 1], [], []>} : vector<2x32xf32>, vector<32x128xf32>, vector<2x128xf32> -> vector<2x128xf32>
    %cst_57 = arith.constant dense<0.000000e+00> : vector<2x128xf32>
    %183 = tpu.matmul %137, %2, %cst_57 {dimension_numbers = #tpu.dot_dimension_numbers<[1], [0], [0], [1], [0, 0, 1, 1], [], []>} : vector<2x32xf32>, vector<32x128xf32>, vector<2x128xf32> -> vector<2x128xf32>
    %184 = arith.addf %182, %183 : vector<2x128xf32>
    %185 = vector.broadcast %3 : vector<1x128xf32> to vector<2x128xf32>
    %186 = arith.addf %184, %185 : vector<2x128xf32>
    %187 = math.tanh %186 : vector<2x128xf32>
    %cst_58 = arith.constant 5.000000e-01 : f32
    %188 = vector.broadcast %cst_58 : f32 to vector<2x128xf32>
    %189 = arith.mulf %188, %187 : vector<2x128xf32>
    %cst_59 = arith.constant 5.000000e-01 : f32
    %190 = vector.broadcast %cst_59 : f32 to vector<2x128xf32>
    %191 = arith.addf %189, %190 : vector<2x128xf32>
    %192 = vector.extract_strided_slice %191 {offsets = [0, 0], sizes = [2, 32], strides = [1, 1]} : vector<2x128xf32> to vector<2x32xf32>
    %193 = vector.extract_strided_slice %191 {offsets = [0, 32], sizes = [2, 32], strides = [1, 1]} : vector<2x128xf32> to vector<2x32xf32>
    %194 = vector.extract_strided_slice %187 {offsets = [0, 64], sizes = [2, 32], strides = [1, 1]} : vector<2x128xf32> to vector<2x32xf32>
    %195 = vector.extract_strided_slice %191 {offsets = [0, 96], sizes = [2, 32], strides = [1, 1]} : vector<2x128xf32> to vector<2x32xf32>
    %196 = arith.mulf %193, %135 : vector<2x32xf32>
    %197 = arith.mulf %192, %194 : vector<2x32xf32>
    %198 = arith.addf %196, %197 : vector<2x32xf32>
    %199 = math.tanh %198 : vector<2x32xf32>
    %200 = arith.mulf %195, %199 : vector<2x32xf32>
    %c0_60 = arith.constant 0 : index
    %c2 = arith.constant 2 : index
    %c0_61 = arith.constant 0 : index
    %201 = vector.load %arg9[%c0_60, %c2, %c0_61] : memref<2x8x32xf32, #tpu.memory_space<vmem>>, vector<2x1x32xf32>
    %202 = vector.shape_cast %201 : vector<2x1x32xf32> to vector<2x32xf32>
    %203 = vector.shape_cast %200 : vector<2x32xf32> to vector<2x1x32xf32>
    tpu.vector_store %arg9[%c0_60, %c2, %c0_61], %203 {strides = array<i32>} : memref<2x8x32xf32, #tpu.memory_space<vmem>>, vector<2x1x32xf32>,
    %204 = vector.extract_strided_slice %13 {offsets = [0, 3, 0], sizes = [2, 1, 128], strides = [1, 1, 1]} : vector<2x8x128xf32> to vector<2x1x128xf32>
    %205 = vector.shape_cast %204 : vector<2x1x128xf32> to vector<2x128xf32>
    %cst_62 = arith.constant dense<0.000000e+00> : vector<2x128xf32>
    %206 = tpu.matmul %158, %0, %cst_62 {dimension_numbers = #tpu.dot_dimension_numbers<[1], [0], [0], [1], [0, 0, 1, 1], [], []>} : vector<2x32xf32>, vector<32x128xf32>, vector<2x128xf32> -> vector<2x128xf32>
    %207 = arith.addf %205, %206 : vector<2x128xf32>
    %208 = math.tanh %207 : vector<2x128xf32>
    %cst_63 = arith.constant 5.000000e-01 : f32
    %209 = vector.broadcast %cst_63 : f32 to vector<2x128xf32>
    %210 = arith.mulf %209, %208 : vector<2x128xf32>
    %cst_64 = arith.constant 5.000000e-01 : f32
    %211 = vector.broadcast %cst_64 : f32 to vector<2x128xf32>
    %212 = arith.addf %210, %211 : vector<2x128xf32>
    %213 = vector.extract_strided_slice %212 {offsets = [0, 0], sizes = [2, 32], strides = [1, 1]} : vector<2x128xf32> to vector<2x32xf32>
    %214 = vector.extract_strided_slice %212 {offsets = [0, 32], sizes = [2, 32], strides = [1, 1]} : vector<2x128xf32> to vector<2x32xf32>
    %215 = vector.extract_strided_slice %208 {offsets = [0, 64], sizes = [2, 32], strides = [1, 1]} : vector<2x128xf32> to vector<2x32xf32>
    %216 = vector.extract_strided_slice %212 {offsets = [0, 96], sizes = [2, 32], strides = [1, 1]} : vector<2x128xf32> to vector<2x32xf32>
    %217 = arith.mulf %214, %156 : vector<2x32xf32>
    %218 = arith.mulf %213, %215 : vector<2x32xf32>
    %219 = arith.addf %217, %218 : vector<2x32xf32>
    %220 = math.tanh %219 : vector<2x32xf32>
    %221 = arith.mulf %216, %220 : vector<2x32xf32>
    %cst_65 = arith.constant dense<0.000000e+00> : vector<2xf32>
    %222 = vector.multi_reduction <add>, %221, %cst_65 [1] : vector<2x32xf32> to vector<2xf32>
    %223 = vector.shape_cast %222 : vector<2xf32> to vector<2x1xf32>
    %cst_66 = arith.constant 3.125000e-02 : f32
    %224 = vector.broadcast %cst_66 : f32 to vector<2x1xf32>
    %225 = arith.mulf %223, %224 : vector<2x1xf32>
    %226 = arith.mulf %221, %221 : vector<2x32xf32>
    %cst_67 = arith.constant dense<0.000000e+00> : vector<2xf32>
    %227 = vector.multi_reduction <add>, %226, %cst_67 [1] : vector<2x32xf32> to vector<2xf32>
    %228 = vector.shape_cast %227 : vector<2xf32> to vector<2x1xf32>
    %cst_68 = arith.constant 3.125000e-02 : f32
    %229 = vector.broadcast %cst_68 : f32 to vector<2x1xf32>
    %230 = arith.mulf %228, %229 : vector<2x1xf32>
    %231 = arith.mulf %225, %225 : vector<2x1xf32>
    %232 = arith.subf %230, %231 : vector<2x1xf32>
    %cst_69 = arith.constant 9.99999997E-7 : f32
    %233 = vector.broadcast %cst_69 : f32 to vector<2x1xf32>
    %234 = arith.addf %232, %233 : vector<2x1xf32>
    %235 = math.rsqrt %234 : vector<2x1xf32>
    %236 = vector.broadcast %4 : vector<1x32xf32> to vector<2x32xf32>
    %237 = vector.broadcast %235 : vector<2x1xf32> to vector<2x32xf32>
    %238 = arith.mulf %236, %237 : vector<2x32xf32>
    %239 = arith.mulf %221, %238 : vector<2x32xf32>
    %240 = vector.broadcast %225 : vector<2x1xf32> to vector<2x32xf32>
    %241 = arith.mulf %240, %238 : vector<2x32xf32>
    %242 = vector.broadcast %5 : vector<1x32xf32> to vector<2x32xf32>
    %243 = arith.subf %242, %241 : vector<2x32xf32>
    %244 = arith.addf %239, %243 : vector<2x32xf32>
    %cst_70 = arith.constant dense<0.000000e+00> : vector<2x128xf32>
    %245 = tpu.matmul %244, %1, %cst_70 {dimension_numbers = #tpu.dot_dimension_numbers<[1], [0], [0], [1], [0, 0, 1, 1], [], []>} : vector<2x32xf32>, vector<32x128xf32>, vector<2x128xf32> -> vector<2x128xf32>
    %cst_71 = arith.constant dense<0.000000e+00> : vector<2x128xf32>
    %246 = tpu.matmul %200, %2, %cst_71 {dimension_numbers = #tpu.dot_dimension_numbers<[1], [0], [0], [1], [0, 0, 1, 1], [], []>} : vector<2x32xf32>, vector<32x128xf32>, vector<2x128xf32> -> vector<2x128xf32>
    %247 = arith.addf %245, %246 : vector<2x128xf32>
    %248 = vector.broadcast %3 : vector<1x128xf32> to vector<2x128xf32>
    %249 = arith.addf %247, %248 : vector<2x128xf32>
    %250 = math.tanh %249 : vector<2x128xf32>
    %cst_72 = arith.constant 5.000000e-01 : f32
    %251 = vector.broadcast %cst_72 : f32 to vector<2x128xf32>
    %252 = arith.mulf %251, %250 : vector<2x128xf32>
    %cst_73 = arith.constant 5.000000e-01 : f32
    %253 = vector.broadcast %cst_73 : f32 to vector<2x128xf32>
    %254 = arith.addf %252, %253 : vector<2x128xf32>
    %255 = vector.extract_strided_slice %254 {offsets = [0, 0], sizes = [2, 32], strides = [1, 1]} : vector<2x128xf32> to vector<2x32xf32>
    %256 = vector.extract_strided_slice %254 {offsets = [0, 32], sizes = [2, 32], strides = [1, 1]} : vector<2x128xf32> to vector<2x32xf32>
    %257 = vector.extract_strided_slice %250 {offsets = [0, 64], sizes = [2, 32], strides = [1, 1]} : vector<2x128xf32> to vector<2x32xf32>
    %258 = vector.extract_strided_slice %254 {offsets = [0, 96], sizes = [2, 32], strides = [1, 1]} : vector<2x128xf32> to vector<2x32xf32>
    %259 = arith.mulf %256, %198 : vector<2x32xf32>
    %260 = arith.mulf %255, %257 : vector<2x32xf32>
    %261 = arith.addf %259, %260 : vector<2x32xf32>
    %262 = math.tanh %261 : vector<2x32xf32>
    %263 = arith.mulf %258, %262 : vector<2x32xf32>
    %c0_74 = arith.constant 0 : index
    %c3 = arith.constant 3 : index
    %c0_75 = arith.constant 0 : index
    %264 = vector.load %arg9[%c0_74, %c3, %c0_75] : memref<2x8x32xf32, #tpu.memory_space<vmem>>, vector<2x1x32xf32>
    %265 = vector.shape_cast %264 : vector<2x1x32xf32> to vector<2x32xf32>
    %266 = vector.shape_cast %263 : vector<2x32xf32> to vector<2x1x32xf32>
    tpu.vector_store %arg9[%c0_74, %c3, %c0_75], %266 {strides = array<i32>} : memref<2x8x32xf32, #tpu.memory_space<vmem>>, vector<2x1x32xf32>,
    %267 = vector.extract_strided_slice %13 {offsets = [0, 4, 0], sizes = [2, 1, 128], strides = [1, 1, 1]} : vector<2x8x128xf32> to vector<2x1x128xf32>
    %268 = vector.shape_cast %267 : vector<2x1x128xf32> to vector<2x128xf32>
    %cst_76 = arith.constant dense<0.000000e+00> : vector<2x128xf32>
    %269 = tpu.matmul %221, %0, %cst_76 {dimension_numbers = #tpu.dot_dimension_numbers<[1], [0], [0], [1], [0, 0, 1, 1], [], []>} : vector<2x32xf32>, vector<32x128xf32>, vector<2x128xf32> -> vector<2x128xf32>
    %270 = arith.addf %268, %269 : vector<2x128xf32>
    %271 = math.tanh %270 : vector<2x128xf32>
    %cst_77 = arith.constant 5.000000e-01 : f32
    %272 = vector.broadcast %cst_77 : f32 to vector<2x128xf32>
    %273 = arith.mulf %272, %271 : vector<2x128xf32>
    %cst_78 = arith.constant 5.000000e-01 : f32
    %274 = vector.broadcast %cst_78 : f32 to vector<2x128xf32>
    %275 = arith.addf %273, %274 : vector<2x128xf32>
    %276 = vector.extract_strided_slice %275 {offsets = [0, 0], sizes = [2, 32], strides = [1, 1]} : vector<2x128xf32> to vector<2x32xf32>
    %277 = vector.extract_strided_slice %275 {offsets = [0, 32], sizes = [2, 32], strides = [1, 1]} : vector<2x128xf32> to vector<2x32xf32>
    %278 = vector.extract_strided_slice %271 {offsets = [0, 64], sizes = [2, 32], strides = [1, 1]} : vector<2x128xf32> to vector<2x32xf32>
    %279 = vector.extract_strided_slice %275 {offsets = [0, 96], sizes = [2, 32], strides = [1, 1]} : vector<2x128xf32> to vector<2x32xf32>
    %280 = arith.mulf %277, %219 : vector<2x32xf32>
    %281 = arith.mulf %276, %278 : vector<2x32xf32>
    %282 = arith.addf %280, %281 : vector<2x32xf32>
    %283 = math.tanh %282 : vector<2x32xf32>
    %284 = arith.mulf %279, %283 : vector<2x32xf32>
    %cst_79 = arith.constant dense<0.000000e+00> : vector<2xf32>
    %285 = vector.multi_reduction <add>, %284, %cst_79 [1] : vector<2x32xf32> to vector<2xf32>
    %286 = vector.shape_cast %285 : vector<2xf32> to vector<2x1xf32>
    %cst_80 = arith.constant 3.125000e-02 : f32
    %287 = vector.broadcast %cst_80 : f32 to vector<2x1xf32>
    %288 = arith.mulf %286, %287 : vector<2x1xf32>
    %289 = arith.mulf %284, %284 : vector<2x32xf32>
    %cst_81 = arith.constant dense<0.000000e+00> : vector<2xf32>
    %290 = vector.multi_reduction <add>, %289, %cst_81 [1] : vector<2x32xf32> to vector<2xf32>
    %291 = vector.shape_cast %290 : vector<2xf32> to vector<2x1xf32>
    %cst_82 = arith.constant 3.125000e-02 : f32
    %292 = vector.broadcast %cst_82 : f32 to vector<2x1xf32>
    %293 = arith.mulf %291, %292 : vector<2x1xf32>
    %294 = arith.mulf %288, %288 : vector<2x1xf32>
    %295 = arith.subf %293, %294 : vector<2x1xf32>
    %cst_83 = arith.constant 9.99999997E-7 : f32
    %296 = vector.broadcast %cst_83 : f32 to vector<2x1xf32>
    %297 = arith.addf %295, %296 : vector<2x1xf32>
    %298 = math.rsqrt %297 : vector<2x1xf32>
    %299 = vector.broadcast %4 : vector<1x32xf32> to vector<2x32xf32>
    %300 = vector.broadcast %298 : vector<2x1xf32> to vector<2x32xf32>
    %301 = arith.mulf %299, %300 : vector<2x32xf32>
    %302 = arith.mulf %284, %301 : vector<2x32xf32>
    %303 = vector.broadcast %288 : vector<2x1xf32> to vector<2x32xf32>
    %304 = arith.mulf %303, %301 : vector<2x32xf32>
    %305 = vector.broadcast %5 : vector<1x32xf32> to vector<2x32xf32>
    %306 = arith.subf %305, %304 : vector<2x32xf32>
    %307 = arith.addf %302, %306 : vector<2x32xf32>
    %cst_84 = arith.constant dense<0.000000e+00> : vector<2x128xf32>
    %308 = tpu.matmul %307, %1, %cst_84 {dimension_numbers = #tpu.dot_dimension_numbers<[1], [0], [0], [1], [0, 0, 1, 1], [], []>} : vector<2x32xf32>, vector<32x128xf32>, vector<2x128xf32> -> vector<2x128xf32>
    %cst_85 = arith.constant dense<0.000000e+00> : vector<2x128xf32>
    %309 = tpu.matmul %263, %2, %cst_85 {dimension_numbers = #tpu.dot_dimension_numbers<[1], [0], [0], [1], [0, 0, 1, 1], [], []>} : vector<2x32xf32>, vector<32x128xf32>, vector<2x128xf32> -> vector<2x128xf32>
    %310 = arith.addf %308, %309 : vector<2x128xf32>
    %311 = vector.broadcast %3 : vector<1x128xf32> to vector<2x128xf32>
    %312 = arith.addf %310, %311 : vector<2x128xf32>
    %313 = math.tanh %312 : vector<2x128xf32>
    %cst_86 = arith.constant 5.000000e-01 : f32
    %314 = vector.broadcast %cst_86 : f32 to vector<2x128xf32>
    %315 = arith.mulf %314, %313 : vector<2x128xf32>
    %cst_87 = arith.constant 5.000000e-01 : f32
    %316 = vector.broadcast %cst_87 : f32 to vector<2x128xf32>
    %317 = arith.addf %315, %316 : vector<2x128xf32>
    %318 = vector.extract_strided_slice %317 {offsets = [0, 0], sizes = [2, 32], strides = [1, 1]} : vector<2x128xf32> to vector<2x32xf32>
    %319 = vector.extract_strided_slice %317 {offsets = [0, 32], sizes = [2, 32], strides = [1, 1]} : vector<2x128xf32> to vector<2x32xf32>
    %320 = vector.extract_strided_slice %313 {offsets = [0, 64], sizes = [2, 32], strides = [1, 1]} : vector<2x128xf32> to vector<2x32xf32>
    %321 = vector.extract_strided_slice %317 {offsets = [0, 96], sizes = [2, 32], strides = [1, 1]} : vector<2x128xf32> to vector<2x32xf32>
    %322 = arith.mulf %319, %261 : vector<2x32xf32>
    %323 = arith.mulf %318, %320 : vector<2x32xf32>
    %324 = arith.addf %322, %323 : vector<2x32xf32>
    %325 = math.tanh %324 : vector<2x32xf32>
    %326 = arith.mulf %321, %325 : vector<2x32xf32>
    %c0_88 = arith.constant 0 : index
    %c4 = arith.constant 4 : index
    %c0_89 = arith.constant 0 : index
    %327 = vector.load %arg9[%c0_88, %c4, %c0_89] : memref<2x8x32xf32, #tpu.memory_space<vmem>>, vector<2x1x32xf32>
    %328 = vector.shape_cast %327 : vector<2x1x32xf32> to vector<2x32xf32>
    %329 = vector.shape_cast %326 : vector<2x32xf32> to vector<2x1x32xf32>
    tpu.vector_store %arg9[%c0_88, %c4, %c0_89], %329 {strides = array<i32>} : memref<2x8x32xf32, #tpu.memory_space<vmem>>, vector<2x1x32xf32>,
    %330 = vector.extract_strided_slice %13 {offsets = [0, 5, 0], sizes = [2, 1, 128], strides = [1, 1, 1]} : vector<2x8x128xf32> to vector<2x1x128xf32>
    %331 = vector.shape_cast %330 : vector<2x1x128xf32> to vector<2x128xf32>
    %cst_90 = arith.constant dense<0.000000e+00> : vector<2x128xf32>
    %332 = tpu.matmul %284, %0, %cst_90 {dimension_numbers = #tpu.dot_dimension_numbers<[1], [0], [0], [1], [0, 0, 1, 1], [], []>} : vector<2x32xf32>, vector<32x128xf32>, vector<2x128xf32> -> vector<2x128xf32>
    %333 = arith.addf %331, %332 : vector<2x128xf32>
    %334 = math.tanh %333 : vector<2x128xf32>
    %cst_91 = arith.constant 5.000000e-01 : f32
    %335 = vector.broadcast %cst_91 : f32 to vector<2x128xf32>
    %336 = arith.mulf %335, %334 : vector<2x128xf32>
    %cst_92 = arith.constant 5.000000e-01 : f32
    %337 = vector.broadcast %cst_92 : f32 to vector<2x128xf32>
    %338 = arith.addf %336, %337 : vector<2x128xf32>
    %339 = vector.extract_strided_slice %338 {offsets = [0, 0], sizes = [2, 32], strides = [1, 1]} : vector<2x128xf32> to vector<2x32xf32>
    %340 = vector.extract_strided_slice %338 {offsets = [0, 32], sizes = [2, 32], strides = [1, 1]} : vector<2x128xf32> to vector<2x32xf32>
    %341 = vector.extract_strided_slice %334 {offsets = [0, 64], sizes = [2, 32], strides = [1, 1]} : vector<2x128xf32> to vector<2x32xf32>
    %342 = vector.extract_strided_slice %338 {offsets = [0, 96], sizes = [2, 32], strides = [1, 1]} : vector<2x128xf32> to vector<2x32xf32>
    %343 = arith.mulf %340, %282 : vector<2x32xf32>
    %344 = arith.mulf %339, %341 : vector<2x32xf32>
    %345 = arith.addf %343, %344 : vector<2x32xf32>
    %346 = math.tanh %345 : vector<2x32xf32>
    %347 = arith.mulf %342, %346 : vector<2x32xf32>
    %cst_93 = arith.constant dense<0.000000e+00> : vector<2xf32>
    %348 = vector.multi_reduction <add>, %347, %cst_93 [1] : vector<2x32xf32> to vector<2xf32>
    %349 = vector.shape_cast %348 : vector<2xf32> to vector<2x1xf32>
    %cst_94 = arith.constant 3.125000e-02 : f32
    %350 = vector.broadcast %cst_94 : f32 to vector<2x1xf32>
    %351 = arith.mulf %349, %350 : vector<2x1xf32>
    %352 = arith.mulf %347, %347 : vector<2x32xf32>
    %cst_95 = arith.constant dense<0.000000e+00> : vector<2xf32>
    %353 = vector.multi_reduction <add>, %352, %cst_95 [1] : vector<2x32xf32> to vector<2xf32>
    %354 = vector.shape_cast %353 : vector<2xf32> to vector<2x1xf32>
    %cst_96 = arith.constant 3.125000e-02 : f32
    %355 = vector.broadcast %cst_96 : f32 to vector<2x1xf32>
    %356 = arith.mulf %354, %355 : vector<2x1xf32>
    %357 = arith.mulf %351, %351 : vector<2x1xf32>
    %358 = arith.subf %356, %357 : vector<2x1xf32>
    %cst_97 = arith.constant 9.99999997E-7 : f32
    %359 = vector.broadcast %cst_97 : f32 to vector<2x1xf32>
    %360 = arith.addf %358, %359 : vector<2x1xf32>
    %361 = math.rsqrt %360 : vector<2x1xf32>
    %362 = vector.broadcast %4 : vector<1x32xf32> to vector<2x32xf32>
    %363 = vector.broadcast %361 : vector<2x1xf32> to vector<2x32xf32>
    %364 = arith.mulf %362, %363 : vector<2x32xf32>
    %365 = arith.mulf %347, %364 : vector<2x32xf32>
    %366 = vector.broadcast %351 : vector<2x1xf32> to vector<2x32xf32>
    %367 = arith.mulf %366, %364 : vector<2x32xf32>
    %368 = vector.broadcast %5 : vector<1x32xf32> to vector<2x32xf32>
    %369 = arith.subf %368, %367 : vector<2x32xf32>
    %370 = arith.addf %365, %369 : vector<2x32xf32>
    %cst_98 = arith.constant dense<0.000000e+00> : vector<2x128xf32>
    %371 = tpu.matmul %370, %1, %cst_98 {dimension_numbers = #tpu.dot_dimension_numbers<[1], [0], [0], [1], [0, 0, 1, 1], [], []>} : vector<2x32xf32>, vector<32x128xf32>, vector<2x128xf32> -> vector<2x128xf32>
    %cst_99 = arith.constant dense<0.000000e+00> : vector<2x128xf32>
    %372 = tpu.matmul %326, %2, %cst_99 {dimension_numbers = #tpu.dot_dimension_numbers<[1], [0], [0], [1], [0, 0, 1, 1], [], []>} : vector<2x32xf32>, vector<32x128xf32>, vector<2x128xf32> -> vector<2x128xf32>
    %373 = arith.addf %371, %372 : vector<2x128xf32>
    %374 = vector.broadcast %3 : vector<1x128xf32> to vector<2x128xf32>
    %375 = arith.addf %373, %374 : vector<2x128xf32>
    %376 = math.tanh %375 : vector<2x128xf32>
    %cst_100 = arith.constant 5.000000e-01 : f32
    %377 = vector.broadcast %cst_100 : f32 to vector<2x128xf32>
    %378 = arith.mulf %377, %376 : vector<2x128xf32>
    %cst_101 = arith.constant 5.000000e-01 : f32
    %379 = vector.broadcast %cst_101 : f32 to vector<2x128xf32>
    %380 = arith.addf %378, %379 : vector<2x128xf32>
    %381 = vector.extract_strided_slice %380 {offsets = [0, 0], sizes = [2, 32], strides = [1, 1]} : vector<2x128xf32> to vector<2x32xf32>
    %382 = vector.extract_strided_slice %380 {offsets = [0, 32], sizes = [2, 32], strides = [1, 1]} : vector<2x128xf32> to vector<2x32xf32>
    %383 = vector.extract_strided_slice %376 {offsets = [0, 64], sizes = [2, 32], strides = [1, 1]} : vector<2x128xf32> to vector<2x32xf32>
    %384 = vector.extract_strided_slice %380 {offsets = [0, 96], sizes = [2, 32], strides = [1, 1]} : vector<2x128xf32> to vector<2x32xf32>
    %385 = arith.mulf %382, %324 : vector<2x32xf32>
    %386 = arith.mulf %381, %383 : vector<2x32xf32>
    %387 = arith.addf %385, %386 : vector<2x32xf32>
    %388 = math.tanh %387 : vector<2x32xf32>
    %389 = arith.mulf %384, %388 : vector<2x32xf32>
    %c0_102 = arith.constant 0 : index
    %c5 = arith.constant 5 : index
    %c0_103 = arith.constant 0 : index
    %390 = vector.load %arg9[%c0_102, %c5, %c0_103] : memref<2x8x32xf32, #tpu.memory_space<vmem>>, vector<2x1x32xf32>
    %391 = vector.shape_cast %390 : vector<2x1x32xf32> to vector<2x32xf32>
    %392 = vector.shape_cast %389 : vector<2x32xf32> to vector<2x1x32xf32>
    tpu.vector_store %arg9[%c0_102, %c5, %c0_103], %392 {strides = array<i32>} : memref<2x8x32xf32, #tpu.memory_space<vmem>>, vector<2x1x32xf32>,
    %393 = vector.extract_strided_slice %13 {offsets = [0, 6, 0], sizes = [2, 1, 128], strides = [1, 1, 1]} : vector<2x8x128xf32> to vector<2x1x128xf32>
    %394 = vector.shape_cast %393 : vector<2x1x128xf32> to vector<2x128xf32>
    %cst_104 = arith.constant dense<0.000000e+00> : vector<2x128xf32>
    %395 = tpu.matmul %347, %0, %cst_104 {dimension_numbers = #tpu.dot_dimension_numbers<[1], [0], [0], [1], [0, 0, 1, 1], [], []>} : vector<2x32xf32>, vector<32x128xf32>, vector<2x128xf32> -> vector<2x128xf32>
    %396 = arith.addf %394, %395 : vector<2x128xf32>
    %397 = math.tanh %396 : vector<2x128xf32>
    %cst_105 = arith.constant 5.000000e-01 : f32
    %398 = vector.broadcast %cst_105 : f32 to vector<2x128xf32>
    %399 = arith.mulf %398, %397 : vector<2x128xf32>
    %cst_106 = arith.constant 5.000000e-01 : f32
    %400 = vector.broadcast %cst_106 : f32 to vector<2x128xf32>
    %401 = arith.addf %399, %400 : vector<2x128xf32>
    %402 = vector.extract_strided_slice %401 {offsets = [0, 0], sizes = [2, 32], strides = [1, 1]} : vector<2x128xf32> to vector<2x32xf32>
    %403 = vector.extract_strided_slice %401 {offsets = [0, 32], sizes = [2, 32], strides = [1, 1]} : vector<2x128xf32> to vector<2x32xf32>
    %404 = vector.extract_strided_slice %397 {offsets = [0, 64], sizes = [2, 32], strides = [1, 1]} : vector<2x128xf32> to vector<2x32xf32>
    %405 = vector.extract_strided_slice %401 {offsets = [0, 96], sizes = [2, 32], strides = [1, 1]} : vector<2x128xf32> to vector<2x32xf32>
    %406 = arith.mulf %403, %345 : vector<2x32xf32>
    %407 = arith.mulf %402, %404 : vector<2x32xf32>
    %408 = arith.addf %406, %407 : vector<2x32xf32>
    %409 = math.tanh %408 : vector<2x32xf32>
    %410 = arith.mulf %405, %409 : vector<2x32xf32>
    %cst_107 = arith.constant dense<0.000000e+00> : vector<2xf32>
    %411 = vector.multi_reduction <add>, %410, %cst_107 [1] : vector<2x32xf32> to vector<2xf32>
    %412 = vector.shape_cast %411 : vector<2xf32> to vector<2x1xf32>
    %cst_108 = arith.constant 3.125000e-02 : f32
    %413 = vector.broadcast %cst_108 : f32 to vector<2x1xf32>
    %414 = arith.mulf %412, %413 : vector<2x1xf32>
    %415 = arith.mulf %410, %410 : vector<2x32xf32>
    %cst_109 = arith.constant dense<0.000000e+00> : vector<2xf32>
    %416 = vector.multi_reduction <add>, %415, %cst_109 [1] : vector<2x32xf32> to vector<2xf32>
    %417 = vector.shape_cast %416 : vector<2xf32> to vector<2x1xf32>
    %cst_110 = arith.constant 3.125000e-02 : f32
    %418 = vector.broadcast %cst_110 : f32 to vector<2x1xf32>
    %419 = arith.mulf %417, %418 : vector<2x1xf32>
    %420 = arith.mulf %414, %414 : vector<2x1xf32>
    %421 = arith.subf %419, %420 : vector<2x1xf32>
    %cst_111 = arith.constant 9.99999997E-7 : f32
    %422 = vector.broadcast %cst_111 : f32 to vector<2x1xf32>
    %423 = arith.addf %421, %422 : vector<2x1xf32>
    %424 = math.rsqrt %423 : vector<2x1xf32>
    %425 = vector.broadcast %4 : vector<1x32xf32> to vector<2x32xf32>
    %426 = vector.broadcast %424 : vector<2x1xf32> to vector<2x32xf32>
    %427 = arith.mulf %425, %426 : vector<2x32xf32>
    %428 = arith.mulf %410, %427 : vector<2x32xf32>
    %429 = vector.broadcast %414 : vector<2x1xf32> to vector<2x32xf32>
    %430 = arith.mulf %429, %427 : vector<2x32xf32>
    %431 = vector.broadcast %5 : vector<1x32xf32> to vector<2x32xf32>
    %432 = arith.subf %431, %430 : vector<2x32xf32>
    %433 = arith.addf %428, %432 : vector<2x32xf32>
    %cst_112 = arith.constant dense<0.000000e+00> : vector<2x128xf32>
    %434 = tpu.matmul %433, %1, %cst_112 {dimension_numbers = #tpu.dot_dimension_numbers<[1], [0], [0], [1], [0, 0, 1, 1], [], []>} : vector<2x32xf32>, vector<32x128xf32>, vector<2x128xf32> -> vector<2x128xf32>
    %cst_113 = arith.constant dense<0.000000e+00> : vector<2x128xf32>
    %435 = tpu.matmul %389, %2, %cst_113 {dimension_numbers = #tpu.dot_dimension_numbers<[1], [0], [0], [1], [0, 0, 1, 1], [], []>} : vector<2x32xf32>, vector<32x128xf32>, vector<2x128xf32> -> vector<2x128xf32>
    %436 = arith.addf %434, %435 : vector<2x128xf32>
    %437 = vector.broadcast %3 : vector<1x128xf32> to vector<2x128xf32>
    %438 = arith.addf %436, %437 : vector<2x128xf32>
    %439 = math.tanh %438 : vector<2x128xf32>
    %cst_114 = arith.constant 5.000000e-01 : f32
    %440 = vector.broadcast %cst_114 : f32 to vector<2x128xf32>
    %441 = arith.mulf %440, %439 : vector<2x128xf32>
    %cst_115 = arith.constant 5.000000e-01 : f32
    %442 = vector.broadcast %cst_115 : f32 to vector<2x128xf32>
    %443 = arith.addf %441, %442 : vector<2x128xf32>
    %444 = vector.extract_strided_slice %443 {offsets = [0, 0], sizes = [2, 32], strides = [1, 1]} : vector<2x128xf32> to vector<2x32xf32>
    %445 = vector.extract_strided_slice %443 {offsets = [0, 32], sizes = [2, 32], strides = [1, 1]} : vector<2x128xf32> to vector<2x32xf32>
    %446 = vector.extract_strided_slice %439 {offsets = [0, 64], sizes = [2, 32], strides = [1, 1]} : vector<2x128xf32> to vector<2x32xf32>
    %447 = vector.extract_strided_slice %443 {offsets = [0, 96], sizes = [2, 32], strides = [1, 1]} : vector<2x128xf32> to vector<2x32xf32>
    %448 = arith.mulf %445, %387 : vector<2x32xf32>
    %449 = arith.mulf %444, %446 : vector<2x32xf32>
    %450 = arith.addf %448, %449 : vector<2x32xf32>
    %451 = math.tanh %450 : vector<2x32xf32>
    %452 = arith.mulf %447, %451 : vector<2x32xf32>
    %c0_116 = arith.constant 0 : index
    %c6 = arith.constant 6 : index
    %c0_117 = arith.constant 0 : index
    %453 = vector.load %arg9[%c0_116, %c6, %c0_117] : memref<2x8x32xf32, #tpu.memory_space<vmem>>, vector<2x1x32xf32>
    %454 = vector.shape_cast %453 : vector<2x1x32xf32> to vector<2x32xf32>
    %455 = vector.shape_cast %452 : vector<2x32xf32> to vector<2x1x32xf32>
    tpu.vector_store %arg9[%c0_116, %c6, %c0_117], %455 {strides = array<i32>} : memref<2x8x32xf32, #tpu.memory_space<vmem>>, vector<2x1x32xf32>,
    %456 = vector.extract_strided_slice %13 {offsets = [0, 7, 0], sizes = [2, 1, 128], strides = [1, 1, 1]} : vector<2x8x128xf32> to vector<2x1x128xf32>
    %457 = vector.shape_cast %456 : vector<2x1x128xf32> to vector<2x128xf32>
    %cst_118 = arith.constant dense<0.000000e+00> : vector<2x128xf32>
    %458 = tpu.matmul %410, %0, %cst_118 {dimension_numbers = #tpu.dot_dimension_numbers<[1], [0], [0], [1], [0, 0, 1, 1], [], []>} : vector<2x32xf32>, vector<32x128xf32>, vector<2x128xf32> -> vector<2x128xf32>
    %459 = arith.addf %457, %458 : vector<2x128xf32>
    %460 = math.tanh %459 : vector<2x128xf32>
    %cst_119 = arith.constant 5.000000e-01 : f32
    %461 = vector.broadcast %cst_119 : f32 to vector<2x128xf32>
    %462 = arith.mulf %461, %460 : vector<2x128xf32>
    %cst_120 = arith.constant 5.000000e-01 : f32
    %463 = vector.broadcast %cst_120 : f32 to vector<2x128xf32>
    %464 = arith.addf %462, %463 : vector<2x128xf32>
    %465 = vector.extract_strided_slice %464 {offsets = [0, 0], sizes = [2, 32], strides = [1, 1]} : vector<2x128xf32> to vector<2x32xf32>
    %466 = vector.extract_strided_slice %464 {offsets = [0, 32], sizes = [2, 32], strides = [1, 1]} : vector<2x128xf32> to vector<2x32xf32>
    %467 = vector.extract_strided_slice %460 {offsets = [0, 64], sizes = [2, 32], strides = [1, 1]} : vector<2x128xf32> to vector<2x32xf32>
    %468 = vector.extract_strided_slice %464 {offsets = [0, 96], sizes = [2, 32], strides = [1, 1]} : vector<2x128xf32> to vector<2x32xf32>
    %469 = arith.mulf %466, %408 : vector<2x32xf32>
    %470 = arith.mulf %465, %467 : vector<2x32xf32>
    %471 = arith.addf %469, %470 : vector<2x32xf32>
    %472 = math.tanh %471 : vector<2x32xf32>
    %473 = arith.mulf %468, %472 : vector<2x32xf32>
    %cst_121 = arith.constant dense<0.000000e+00> : vector<2xf32>
    %474 = vector.multi_reduction <add>, %473, %cst_121 [1] : vector<2x32xf32> to vector<2xf32>
    %475 = vector.shape_cast %474 : vector<2xf32> to vector<2x1xf32>
    %cst_122 = arith.constant 3.125000e-02 : f32
    %476 = vector.broadcast %cst_122 : f32 to vector<2x1xf32>
    %477 = arith.mulf %475, %476 : vector<2x1xf32>
    %478 = arith.mulf %473, %473 : vector<2x32xf32>
    %cst_123 = arith.constant dense<0.000000e+00> : vector<2xf32>
    %479 = vector.multi_reduction <add>, %478, %cst_123 [1] : vector<2x32xf32> to vector<2xf32>
    %480 = vector.shape_cast %479 : vector<2xf32> to vector<2x1xf32>
    %cst_124 = arith.constant 3.125000e-02 : f32
    %481 = vector.broadcast %cst_124 : f32 to vector<2x1xf32>
    %482 = arith.mulf %480, %481 : vector<2x1xf32>
    %483 = arith.mulf %477, %477 : vector<2x1xf32>
    %484 = arith.subf %482, %483 : vector<2x1xf32>
    %cst_125 = arith.constant 9.99999997E-7 : f32
    %485 = vector.broadcast %cst_125 : f32 to vector<2x1xf32>
    %486 = arith.addf %484, %485 : vector<2x1xf32>
    %487 = math.rsqrt %486 : vector<2x1xf32>
    %488 = vector.broadcast %4 : vector<1x32xf32> to vector<2x32xf32>
    %489 = vector.broadcast %487 : vector<2x1xf32> to vector<2x32xf32>
    %490 = arith.mulf %488, %489 : vector<2x32xf32>
    %491 = arith.mulf %473, %490 : vector<2x32xf32>
    %492 = vector.broadcast %477 : vector<2x1xf32> to vector<2x32xf32>
    %493 = arith.mulf %492, %490 : vector<2x32xf32>
    %494 = vector.broadcast %5 : vector<1x32xf32> to vector<2x32xf32>
    %495 = arith.subf %494, %493 : vector<2x32xf32>
    %496 = arith.addf %491, %495 : vector<2x32xf32>
    %cst_126 = arith.constant dense<0.000000e+00> : vector<2x128xf32>
    %497 = tpu.matmul %496, %1, %cst_126 {dimension_numbers = #tpu.dot_dimension_numbers<[1], [0], [0], [1], [0, 0, 1, 1], [], []>} : vector<2x32xf32>, vector<32x128xf32>, vector<2x128xf32> -> vector<2x128xf32>
    %cst_127 = arith.constant dense<0.000000e+00> : vector<2x128xf32>
    %498 = tpu.matmul %452, %2, %cst_127 {dimension_numbers = #tpu.dot_dimension_numbers<[1], [0], [0], [1], [0, 0, 1, 1], [], []>} : vector<2x32xf32>, vector<32x128xf32>, vector<2x128xf32> -> vector<2x128xf32>
    %499 = arith.addf %497, %498 : vector<2x128xf32>
    %500 = vector.broadcast %3 : vector<1x128xf32> to vector<2x128xf32>
    %501 = arith.addf %499, %500 : vector<2x128xf32>
    %502 = math.tanh %501 : vector<2x128xf32>
    %cst_128 = arith.constant 5.000000e-01 : f32
    %503 = vector.broadcast %cst_128 : f32 to vector<2x128xf32>
    %504 = arith.mulf %503, %502 : vector<2x128xf32>
    %cst_129 = arith.constant 5.000000e-01 : f32
    %505 = vector.broadcast %cst_129 : f32 to vector<2x128xf32>
    %506 = arith.addf %504, %505 : vector<2x128xf32>
    %507 = vector.extract_strided_slice %506 {offsets = [0, 0], sizes = [2, 32], strides = [1, 1]} : vector<2x128xf32> to vector<2x32xf32>
    %508 = vector.extract_strided_slice %506 {offsets = [0, 32], sizes = [2, 32], strides = [1, 1]} : vector<2x128xf32> to vector<2x32xf32>
    %509 = vector.extract_strided_slice %502 {offsets = [0, 64], sizes = [2, 32], strides = [1, 1]} : vector<2x128xf32> to vector<2x32xf32>
    %510 = vector.extract_strided_slice %506 {offsets = [0, 96], sizes = [2, 32], strides = [1, 1]} : vector<2x128xf32> to vector<2x32xf32>
    %511 = arith.mulf %508, %450 : vector<2x32xf32>
    %512 = arith.mulf %507, %509 : vector<2x32xf32>
    %513 = arith.addf %511, %512 : vector<2x32xf32>
    %514 = math.tanh %513 : vector<2x32xf32>
    %515 = arith.mulf %510, %514 : vector<2x32xf32>
    %c0_130 = arith.constant 0 : index
    %c7 = arith.constant 7 : index
    %c0_131 = arith.constant 0 : index
    %516 = vector.load %arg9[%c0_130, %c7, %c0_131] : memref<2x8x32xf32, #tpu.memory_space<vmem>>, vector<2x1x32xf32>
    %517 = vector.shape_cast %516 : vector<2x1x32xf32> to vector<2x32xf32>
    %518 = vector.shape_cast %515 : vector<2x32xf32> to vector<2x1x32xf32>
    tpu.vector_store %arg9[%c0_130, %c7, %c0_131], %518 {strides = array<i32>} : memref<2x8x32xf32, #tpu.memory_space<vmem>>, vector<2x1x32xf32>,
    %c0_132 = arith.constant 0 : index
    %c0_133 = arith.constant 0 : index
    %c0_134 = arith.constant 0 : index
    %519 = vector.load %arg10[%c0_132, %c0_133, %c0_134] : memref<1x2x32xf32, #tpu.memory_space<vmem>>, vector<1x2x32xf32>
    %520 = vector.shape_cast %519 : vector<1x2x32xf32> to vector<2x32xf32>
    %521 = vector.shape_cast %515 : vector<2x32xf32> to vector<1x2x32xf32>
    tpu.vector_store %arg10[%c0_132, %c0_133, %c0_134], %521 {strides = array<i32>} : memref<1x2x32xf32, #tpu.memory_space<vmem>>, vector<1x2x32xf32>,
    %c0_135 = arith.constant 0 : index
    %c0_136 = arith.constant 0 : index
    %c0_137 = arith.constant 0 : index
    %522 = vector.load %arg11[%c0_135, %c0_136, %c0_137] : memref<1x2x32xf32, #tpu.memory_space<vmem>>, vector<1x2x32xf32>
    %523 = vector.shape_cast %522 : vector<1x2x32xf32> to vector<2x32xf32>
    %524 = vector.shape_cast %513 : vector<2x32xf32> to vector<1x2x32xf32>
    tpu.vector_store %arg11[%c0_135, %c0_136, %c0_137], %524 {strides = array<i32>} : memref<1x2x32xf32, #tpu.memory_space<vmem>>, vector<1x2x32xf32>,
    return
  }
}

</mosaic_0001>

<llo_original>
// kernel: rnn_encoder_forward.1
$region0: #{rnn_encoder_forward.1}
  #allocation0 [shape = 'u32[]', space=smem, size = 0x4, offset = 0x4, fixed_abs, tag = 'smem constant byte address 0x4 - core index']
  #allocation1 [shape = 'u32[144,128]{1,0:T(1,128)}', space=vmem, size = 0x12000, scoped, tag = 'internal scratch']
  %s0 = inlined_call_operand.hbm [shape: f32[2,8,16], index: 0, kind: input, shape index: {}]
  %s1 = inlined_call_operand.hbm [shape: f32[16,128], index: 1, kind: input, shape index: {}]
  %s2 = inlined_call_operand.hbm [shape: f32[32,128], index: 2, kind: input, shape index: {}]
  %s3 = inlined_call_operand.vmem [shape: f32[1,128], index: 3, kind: input, shape index: {}]
  %s4 = inlined_call_operand.hbm [shape: f32[32,128], index: 4, kind: input, shape index: {}]
  %s5 = inlined_call_operand.hbm [shape: f32[32,128], index: 5, kind: input, shape index: {}]
  %s6 = inlined_call_operand.vmem [shape: f32[1,128], index: 6, kind: input, shape index: {}]
  %s7 = inlined_call_operand.vmem [shape: f32[1,32], index: 7, kind: input, shape index: {}]
  %s8 = inlined_call_operand.vmem [shape: f32[1,32], index: 8, kind: input, shape index: {}]
  %s9 = inlined_call_operand.hbm [shape: f32[2,8,32], index: 9, kind: output, shape index: {0}]
  %s10 = inlined_call_operand.hbm [shape: f32[1,2,32], index: 10, kind: output, shape index: {1}]
  %s11 = inlined_call_operand.hbm [shape: f32[1,2,32], index: 11, kind: output, shape index: {2}]
  %12 = xla_tuple %s9, %s10, %s11
  %s13 = sld [smem:[#allocation0]]
  $region82: #{rnn_encoder_forward.1} parent=0
    _
  %s15 = ssub.s32 1, %s13
  %s16 = scalar_select 0, %s15, %s13
  $region1: #{rnn_encoder_forward.1} parent=0
    #allocation2 [shape = 'u8[8192]{0}', space=vmem, size = 0x2000, scoped, tag = 'input window, operand 0, single buffered']
    #allocation3 [shape = 's32[1]{0}', space=sflag, size = 0x4, scoped, tag = 'scoped memory for rnn_encoder_forward.1']
    #allocation4 [shape = 's32[1]{0}', space=sflag, size = 0x4, scoped, tag = 'scoped memory for rnn_encoder_forward.1']
    #allocation5 [shape = 'u8[8192]{0}', space=vmem, size = 0x2000, scoped, tag = 'input window, operand 1, single buffered']
    #allocation6 [shape = 's32[1]{0}', space=sflag, size = 0x4, scoped, tag = 'scoped memory for rnn_encoder_forward.1']
    #allocation7 [shape = 'u8[16384]{0}', space=vmem, size = 0x4000, scoped, tag = 'input window, operand 2, single buffered']
    #allocation8 [shape = 'u8[16384]{0}', space=vmem, size = 0x4000, scoped, tag = 'input window, operand 4, single buffered']
    #allocation9 [shape = 's32[1]{0}', space=sflag, size = 0x4, scoped, tag = 'scoped memory for rnn_encoder_forward.1']
    #allocation10 [shape = 'u8[16384]{0}', space=vmem, size = 0x4000, scoped, tag = 'input window, operand 5, single buffered']
    #allocation11 [shape = 'u8[8192]{0}', space=vmem, size = 0x2000, scoped, tag = 'output window, operand 0, single buffered']
    #allocation12 [shape = 'u8[1024]{0}', space=vmem, size = 0x400, scoped, tag = 'output window, operand 1, single buffered']
    #allocation13 [shape = 's32[1]{0}', space=sflag, size = 0x4, scoped, tag = 'scoped memory for rnn_encoder_forward.1']
    #allocation14 [shape = 'u8[1024]{0}', space=vmem, size = 0x400, scoped, tag = 'output window, operand 2, single buffered']
    %17 = vsyncpa [#allocation3], 0
    %18 = vsyncpa [#allocation6], 0
    %19 = vsyncpa [#allocation9], 0
    %20 = vsyncpa [#allocation4], 0
    %21 = vsyncpa [#allocation13], 0
    // Predicated region
    $region2: #{rnn_encoder_forward.1} parent=1 // pred_check
      _
    $region3: #{rnn_encoder_forward.1} parent=1 // pred_check_branch
      %23 = sbr.rel (0) target = $region5
    $region4: #{rnn_encoder_forward.1} parent=1 // pred_region
      %s25 = ssub.s32 256, 256
      %26 = vsyncadd [#allocation3], %s25
      %s27 = sshll.u32 [#allocation2], 4
      %s28 = int_to_ptr.vmem [resolvable:$true] %s27
      %33 = dma.hbm_to_vmem [thread:$0]  %s0, 256, %s28, [#allocation3], 128, 128, 8
    $region5: #{rnn_encoder_forward.1} parent=1 // pred_fallthru
      _
    // Predicated region
    $region6: #{rnn_encoder_forward.1} parent=1 // pred_check
      _
    $region7: #{rnn_encoder_forward.1} parent=1 // pred_check_branch
      %35 = sbr.rel (0) target = $region9
    $region8: #{rnn_encoder_forward.1} parent=1 // pred_region
      %s37 = ssub.s32 256, 256
      %38 = vsyncadd [#allocation6], %s37
      %s39 = sshll.u32 [#allocation5], 4
      %s40 = int_to_ptr.vmem [resolvable:$true] %s39
      %45 = dma.hbm_to_vmem [thread:$0]  %s1, 256, %s40, [#allocation6], 128, 128, 8
    $region9: #{rnn_encoder_forward.1} parent=1 // pred_fallthru
      _
    // Predicated region
    $region10: #{rnn_encoder_forward.1} parent=1 // pred_check
      _
    $region11: #{rnn_encoder_forward.1} parent=1 // pred_check_branch
      %47 = sbr.rel (0) target = $region13
    $region12: #{rnn_encoder_forward.1} parent=1 // pred_region
      %s49 = ssub.s32 512, 512
      %50 = vsyncadd [#allocation6], %s49
      %s51 = sshll.u32 [#allocation7], 4
      %s52 = int_to_ptr.vmem [resolvable:$true] %s51
      %57 = dma.hbm_to_vmem [thread:$0]  %s2, 512, %s52, [#allocation6], 128, 128, 8
    $region13: #{rnn_encoder_forward.1} parent=1 // pred_fallthru
      _
    // Predicated region
    $region14: #{rnn_encoder_forward.1} parent=1 // pred_check
      _
    $region15: #{rnn_encoder_forward.1} parent=1 // pred_check_branch
      %59 = sbr.rel (0) target = $region17
    $region16: #{rnn_encoder_forward.1} parent=1 // pred_region
      _
    $region17: #{rnn_encoder_forward.1} parent=1 // pred_fallthru
      _
    // Predicated region
    $region18: #{rnn_encoder_forward.1} parent=1 // pred_check
      _
    $region19: #{rnn_encoder_forward.1} parent=1 // pred_check_branch
      %61 = sbr.rel (0) target = $region21
    $region20: #{rnn_encoder_forward.1} parent=1 // pred_region
      %s63 = ssub.s32 512, 512
      %64 = vsyncadd [#allocation9], %s63
      %s65 = sshll.u32 [#allocation8], 4
      %s66 = int_to_ptr.vmem [resolvable:$true] %s65
      %71 = dma.hbm_to_vmem [thread:$0]  %s4, 512, %s66, [#allocation9], 128, 128, 8
    $region21: #{rnn_encoder_forward.1} parent=1 // pred_fallthru
      _
    // Predicated region
    $region22: #{rnn_encoder_forward.1} parent=1 // pred_check
      _
    $region23: #{rnn_encoder_forward.1} parent=1 // pred_check_branch
      %73 = sbr.rel (0) target = $region25
    $region24: #{rnn_encoder_forward.1} parent=1 // pred_region
      %s75 = ssub.s32 512, 512
      %76 = vsyncadd [#allocation9], %s75
      %s77 = sshll.u32 [#allocation10], 4
      %s78 = int_to_ptr.vmem [resolvable:$true] %s77
      %83 = dma.hbm_to_vmem [thread:$0]  %s5, 512, %s78, [#allocation9], 128, 128, 8
    $region25: #{rnn_encoder_forward.1} parent=1 // pred_fallthru
      _
    // Predicated region
    $region26: #{rnn_encoder_forward.1} parent=1 // pred_check
      _
    $region27: #{rnn_encoder_forward.1} parent=1 // pred_check_branch
      %85 = sbr.rel (0) target = $region29
    $region28: #{rnn_encoder_forward.1} parent=1 // pred_region
      _
    $region29: #{rnn_encoder_forward.1} parent=1 // pred_fallthru
      _
    // Predicated region
    $region30: #{rnn_encoder_forward.1} parent=1 // pred_check
      _
    $region31: #{rnn_encoder_forward.1} parent=1 // pred_check_branch
      %87 = sbr.rel (0) target = $region33
    $region32: #{rnn_encoder_forward.1} parent=1 // pred_region
      _
    $region33: #{rnn_encoder_forward.1} parent=1 // pred_fallthru
      _
    // Predicated region
    $region34: #{rnn_encoder_forward.1} parent=1 // pred_check
      _
    $region35: #{rnn_encoder_forward.1} parent=1 // pred_check_branch
      %89 = sbr.rel (0) target = $region37
    $region36: #{rnn_encoder_forward.1} parent=1 // pred_region
      _
    $region37: #{rnn_encoder_forward.1} parent=1 // pred_fallthru
      _
    // Predicated region
    $region38: #{rnn_encoder_forward.1} parent=1 // pred_check
      _
    $region39: #{rnn_encoder_forward.1} parent=1 // pred_check_branch
      %91 = sbr.rel (0) target = $region41
    $region40: #{rnn_encoder_forward.1} parent=1 // pred_region
      %92 = dma.done [#allocation3], 256
    $region41: #{rnn_encoder_forward.1} parent=1 // pred_fallthru
      _
    // Predicated region
    $region42: #{rnn_encoder_forward.1} parent=1 // pred_check
      _
    $region43: #{rnn_encoder_forward.1} parent=1 // pred_check_branch
      %94 = sbr.rel (0) target = $region45
    $region44: #{rnn_encoder_forward.1} parent=1 // pred_region
      %95 = dma.done [#allocation6], 256
    $region45: #{rnn_encoder_forward.1} parent=1 // pred_fallthru
      _
    // Predicated region
    $region46: #{rnn_encoder_forward.1} parent=1 // pred_check
      _
    $region47: #{rnn_encoder_forward.1} parent=1 // pred_check_branch
      %97 = sbr.rel (0) target = $region49
    $region48: #{rnn_encoder_forward.1} parent=1 // pred_region
      %98 = dma.done [#allocation6], 512
    $region49: #{rnn_encoder_forward.1} parent=1 // pred_fallthru
      _
    // Predicated region
    $region50: #{rnn_encoder_forward.1} parent=1 // pred_check
      _
    $region51: #{rnn_encoder_forward.1} parent=1 // pred_check_branch
      %100 = sbr.rel (0) target = $region53
    $region52: #{rnn_encoder_forward.1} parent=1 // pred_region
      %101 = dma.done [#allocation9], 512
    $region53: #{rnn_encoder_forward.1} parent=1 // pred_fallthru
      _
    // Predicated region
    $region54: #{rnn_encoder_forward.1} parent=1 // pred_check
      _
    $region55: #{rnn_encoder_forward.1} parent=1 // pred_check_branch
      %103 = sbr.rel (0) target = $region57
    $region56: #{rnn_encoder_forward.1} parent=1 // pred_region
      %104 = dma.done [#allocation9], 512
    $region57: #{rnn_encoder_forward.1} parent=1 // pred_fallthru
      _
    %v105 = vld [vmem:[#allocation7] sm:$0xff]
    %v106 = vld [vmem:[#allocation7 + $0x8] sm:$0xff]
    %v107 = vld [vmem:[#allocation7 + $0x10] sm:$0xff]
    %v108 = vld [vmem:[#allocation7 + $0x18] sm:$0xff]
    %v109 = vld [vmem:[#allocation8] sm:$0xff]
    %v110 = vld [vmem:[#allocation8 + $0x8] sm:$0xff]
    %v111 = vld [vmem:[#allocation8 + $0x10] sm:$0xff]
    %v112 = vld [vmem:[#allocation8 + $0x18] sm:$0xff]
    %v113 = vld [vmem:[#allocation10] sm:$0xff]
    %v114 = vld [vmem:[#allocation10 + $0x8] sm:$0xff]
    %v115 = vld [vmem:[#allocation10 + $0x10] sm:$0xff]
    %v116 = vld [vmem:[#allocation10 + $0x18] sm:$0xff]
    %v117 = vld [vmem:[%s6] sm:$0x1]
    %v118 = vld [vmem:[%s7] sm:$0x1]
    %v119 = vld [vmem:[%s8] sm:$0x1]
    %v120 = vld [vmem:[#allocation2] sm:$0xff]
    %v121 = vld [vmem:[#allocation2 + $0x8] sm:$0xff]
    %v122 = vld [vmem:[#allocation5] sm:$0xff]
    %v123 = vld [vmem:[#allocation5 + $0x8] sm:$0xff]
    %v124 = vld [vmem:[%s3] sm:$0x1]
    %v126 = vlaneseq
    %v127 = vshrl.u32 %v126, 7
    %v128 = vsub.s32 0, %v127
    %v129 = vrot.slane %v124, %v128
    %vm131 = vcmask 130048
    %v133 = vsel %vm131, %v120, 0
    %v136 = vsel %vm131, %v121, 0
    %138 = vmatprep.subr.mxu0 0.0
    %139 = vmatpush1.msra.mxu0 %v122
    %140 = vmatprep.subr.mxu0 0.0
    %141 = vmatpush1.msra.mxu0 %v123
    %142 = vmatprep.subr.mxu0 0.0
    %143 = vmatpush1.msra.mxu0 0.0
    %144 = vmatprep.subr.mxu0 0.0
    %145 = vmatpush1.msra.mxu0 0.0
    %146 = vmatprep.subr.mxu0 0.0
    %147 = vmatpush1.msra.mxu0 0.0
    %148 = vmatprep.subr.mxu0 0.0
    %149 = vmatpush1.msra.mxu0 0.0
    %150 = vmatprep.subr.mxu0 0.0
    %151 = vmatpush1.msra.mxu0 0.0
    %152 = vmatprep.subr.mxu0 0.0
    %153 = vmatpush1.msra.mxu0 0.0
    %154 = vmatprep.subr.mxu0 0.0
    %155 = vmatpush1.msra.mxu0 0.0
    %156 = vmatprep.subr.mxu0 0.0
    %157 = vmatpush1.msra.mxu0 0.0
    %158 = vmatprep.subr.mxu0 0.0
    %159 = vmatpush1.msra.mxu0 0.0
    %160 = vmatprep.subr.mxu0 0.0
    %161 = vmatpush1.msra.mxu0 0.0
    %162 = vmatprep.subr.mxu0 0.0
    %163 = vmatpush1.msra.mxu0 0.0
    %164 = vmatprep.subr.mxu0 0.0
    %165 = vmatpush1.msra.mxu0 0.0
    %166 = vmatprep.subr.mxu0 0.0
    %167 = vmatpush1.msra.mxu0 0.0
    %168 = vmatprep.subr.mxu0 0.0
    %169 = vmatpush1.msra.mxu0 0.0
    %170 = vmatprep.subr.mxu0 0.0
    %171 = vmatpush1.msra.mxu0 0.0
    %172 = vmatprep.subr.mxu0 0.0
    %173 = vmatpush1.msra.mxu0 0.0
    %174 = vmatprep.subr.mxu0 0.0
    %175 = vmatpush1.msra.mxu0 0.0
    %176 = vmatprep.subr.mxu0 0.0
    %177 = vmatpush1.msra.mxu0 0.0
    %178 = vmatprep.subr.mxu0 0.0
    %179 = vmatpush1.msra.mxu0 0.0
    %180 = vmatprep.subr.mxu0 0.0
    %181 = vmatpush1.msra.mxu0 0.0
    %182 = vmatprep.subr.mxu0 0.0
    %183 = vmatpush1.msra.mxu0 0.0
    %184 = vmatprep.subr.mxu0 0.0
    %185 = vmatpush1.msra.mxu0 0.0
    %186 = vmatprep.subr.mxu0 0.0
    %187 = vmatpush1.msra.mxu0 0.0
    %188 = vmatprep.subr.mxu0 0.0
    %189 = vmatpush1.msra.mxu0 0.0
    %190 = vmatprep.subr.mxu0 0.0
    %191 = vmatpush1.msra.mxu0 0.0
    %192 = vmatprep.subr.mxu0 0.0
    %193 = vmatpush1.msra.mxu0 0.0
    %194 = vmatprep.subr.mxu0 0.0
    %195 = vmatpush1.msra.mxu0 0.0
    %196 = vmatprep.subr.mxu0 0.0
    %197 = vmatpush1.msra.mxu0 0.0
    %198 = vmatprep.subr.mxu0 0.0
    %199 = vmatpush1.msra.mxu0 0.0
    %200 = vmatprep.subr.mxu0 0.0
    %201 = vmatpush1.msra.mxu0 0.0
    %202 = vmatprep.mubr.f32.mxu0 0.0
    %203 = vmatmul.mubr.f32.gmra.mrb[0].mxu0 %v133
    %v204 = vpop.f32.mrb[0].mxu0
    %v205 = vadd.f32 %v129, %v204
    %v206 = vpop.f32.mrb[0].mxu0
    %207 = vmatprep.mubr.f32.mxu0 0.0
    %208 = vmatmul.mubr.f32.gmra.mrb[0].mxu0 %v136
    %v209 = vpop.f32.mrb[0].mxu0
    %v210 = vadd.f32 %v129, %v209
    %v211 = vpop.f32.mrb[0].mxu0
    %212 = vdwg.mxu0
    %vm213 = vcmask 261120
    %v215 = vsel %vm213, 0.0, 0
    %217 = vmatprep.subr.mxu0 0.0
    %218 = vmatpush1.msra.mxu0 %v105
    %219 = vmatprep.subr.mxu0 0.0
    %220 = vmatpush1.msra.mxu0 %v106
    %221 = vmatprep.subr.mxu0 0.0
    %222 = vmatpush1.msra.mxu0 %v107
    %223 = vmatprep.subr.mxu0 0.0
    %224 = vmatpush1.msra.mxu0 %v108
    %225 = vmatprep.subr.mxu0 0.0
    %226 = vmatpush1.msra.mxu0 0.0
    %227 = vmatprep.subr.mxu0 0.0
    %228 = vmatpush1.msra.mxu0 0.0
    %229 = vmatprep.subr.mxu0 0.0
    %230 = vmatpush1.msra.mxu0 0.0
    %231 = vmatprep.subr.mxu0 0.0
    %232 = vmatpush1.msra.mxu0 0.0
    %233 = vmatprep.subr.mxu0 0.0
    %234 = vmatpush1.msra.mxu0 0.0
    %235 = vmatprep.subr.mxu0 0.0
    %236 = vmatpush1.msra.mxu0 0.0
    %237 = vmatprep.subr.mxu0 0.0
    %238 = vmatpush1.msra.mxu0 0.0
    %239 = vmatprep.subr.mxu0 0.0
    %240 = vmatpush1.msra.mxu0 0.0
    %241 = vmatprep.subr.mxu0 0.0
    %242 = vmatpush1.msra.mxu0 0.0
    %243 = vmatprep.subr.mxu0 0.0
    %244 = vmatpush1.msra.mxu0 0.0
    %245 = vmatprep.subr.mxu0 0.0
    %246 = vmatpush1.msra.mxu0 0.0
    %247 = vmatprep.subr.mxu0 0.0
    %248 = vmatpush1.msra.mxu0 0.0
    %249 = vmatprep.subr.mxu0 0.0
    %250 = vmatpush1.msra.mxu0 0.0
    %251 = vmatprep.subr.mxu0 0.0
    %252 = vmatpush1.msra.mxu0 0.0
    %253 = vmatprep.subr.mxu0 0.0
    %254 = vmatpush1.msra.mxu0 0.0
    %255 = vmatprep.subr.mxu0 0.0
    %256 = vmatpush1.msra.mxu0 0.0
    %257 = vmatprep.subr.mxu0 0.0
    %258 = vmatpush1.msra.mxu0 0.0
    %259 = vmatprep.subr.mxu0 0.0
    %260 = vmatpush1.msra.mxu0 0.0
    %261 = vmatprep.subr.mxu0 0.0
    %262 = vmatpush1.msra.mxu0 0.0
    %263 = vmatprep.subr.mxu0 0.0
    %264 = vmatpush1.msra.mxu0 0.0
    %265 = vmatprep.subr.mxu0 0.0
    %266 = vmatpush1.msra.mxu0 0.0
    %267 = vmatprep.subr.mxu0 0.0
    %268 = vmatpush1.msra.mxu0 0.0
    %269 = vmatprep.subr.mxu0 0.0
    %270 = vmatpush1.msra.mxu0 0.0
    %271 = vmatprep.subr.mxu0 0.0
    %272 = vmatpush1.msra.mxu0 0.0
    %273 = vmatprep.subr.mxu0 0.0
    %274 = vmatpush1.msra.mxu0 0.0
    %275 = vmatprep.subr.mxu0 0.0
    %276 = vmatpush1.msra.mxu0 0.0
    %277 = vmatprep.subr.mxu0 0.0
    %278 = vmatpush1.msra.mxu0 0.0
    %279 = vmatprep.subr.mxu0 0.0
    %280 = vmatpush1.msra.mxu0 0.0
    %281 = vmatprep.mubr.f32.mxu0 0.0
    %282 = vmatmul.mubr.f32.gmra.mrb[0].mxu0 %v215
    %v283 = vpop.f32.mrb[0].mxu0
    %v284 = vadd.f32 0.0, %v283
    %v285 = vpop.f32.mrb[0].mxu0
    %286 = vdwg.mxu0
    %v288 = vrot.slane %v284, 1
    %v291 = vadd.f32 %v205, %v284
    %v292 = vadd.f32 %v210, %v288
    %v293 = vtanh.pop %v291
    %v294 = vtanh.pop %v292
    %v295 = vmul.f32 %v293, 0.5
    %v296 = vmul.f32 %v294, 0.5
    %v297 = vadd.f32 %v295, 0.5
    %v298 = vadd.f32 %v296, 0.5
    %v299 = vmul.f32 %v297, 0.0
    %v300 = vmul.f32 %v298, 0.0
    %303 = vrot.lane.b32.xlu0 %v293, 64
    %v304 = vpop.permute.xlu0 %303
    %305 = vrot.lane.b32.xlu0 %v294, 64
    %v306 = vpop.permute.xlu0 %305
    %v309 = vmul.f32 %v297, %v304
    %v310 = vmul.f32 %v298, %v306
    %313 = vrot.lane.b32.xlu0 %v309, 32
    %v314 = vpop.permute.xlu0 %313
    %315 = vrot.lane.b32.xlu0 %v310, 32
    %v316 = vpop.permute.xlu0 %315
    %v319 = vadd.f32 %v299, %v314
    %v320 = vadd.f32 %v300, %v316
    %v321 = vtanh.pop %v319
    %v322 = vtanh.pop %v320
    %325 = vrot.lane.b32.xlu0 %v321, 64
    %v326 = vpop.permute.xlu0 %325
    %327 = vrot.lane.b32.xlu0 %v322, 64
    %v328 = vpop.permute.xlu0 %327
    %v331 = vmul.f32 %v297, %v326
    %v332 = vmul.f32 %v298, %v328
    %v335 = vrot.slane %v332, 7
    %vm336 = vcmask 1041409
    %v337 = vsel %vm336, %v335, %v331
    %338 = vrot.lane.b32.xlu0 %v337, 32
    %v339 = vpop.permute.xlu0 %338
    %vm341 = vcmask 254976
    %v342 = vsel %vm341, %v339, 0.0
    %343 = vadd.xlane.f32.xlu0 %v342
    %v344 = vpop.xlane.xlu0 %343
    %v345 = vmul.f32 %v344, 0.03125
    %v346 = vmul.f32 %v331, %v331
    %v347 = vmul.f32 %v332, %v332
    %v350 = vrot.slane %v347, 7
    %v351 = vsel %vm336, %v350, %v346
    %352 = vrot.lane.b32.xlu0 %v351, 32
    %v353 = vpop.permute.xlu0 %352
    %v355 = vsel %vm341, %v353, 0.0
    %356 = vadd.xlane.f32.xlu0 %v355
    %v357 = vpop.xlane.xlu0 %356
    %v358 = vmul.f32 %v357, 0.03125
    %v359 = vmul.f32 %v345, %v345
    %v360 = vsub.f32 %v358, %v359
    %v361 = vadd.f32 %v360, 1e-06
    %v362 = vrsqrt.pop %v361
    %v364 = vlaneseq
    %v365 = vshrl.u32 %v364, 7
    %v366 = vsub.s32 0, %v365
    %v367 = vrot.slane %v118, %v366
    %v369 = vmul.f32 %v367, %v362
    %v371 = vrot.slane %v369, 1
    %372 = vrot.lane.b32.xlu0 %v369, 96
    %v373 = vpop.permute.xlu0 %372
    %374 = vrot.lane.b32.xlu0 %v371, 96
    %v375 = vpop.permute.xlu0 %374
    %v378 = vmul.f32 %v331, %v373
    %v379 = vmul.f32 %v332, %v375
    %v380 = vmul.f32 %v345, %v369
    %v382 = vlaneseq
    %v383 = vshrl.u32 %v382, 7
    %v384 = vsub.s32 0, %v383
    %v385 = vrot.slane %v119, %v384
    %v387 = vsub.f32 %v385, %v380
    %v389 = vrot.slane %v387, 1
    %390 = vrot.lane.b32.xlu0 %v387, 96
    %v391 = vpop.permute.xlu0 %390
    %392 = vrot.lane.b32.xlu0 %v389, 96
    %v393 = vpop.permute.xlu0 %392
    %v396 = vadd.f32 %v378, %v391
    %v397 = vadd.f32 %v379, %v393
    %398 = vmatprep.subr.mxu0 0.0
    %399 = vmatpush1.msra.mxu0 %v113
    %400 = vmatprep.subr.mxu0 0.0
    %401 = vmatpush1.msra.mxu0 %v114
    %402 = vmatprep.subr.mxu0 0.0
    %403 = vmatpush1.msra.mxu0 %v115
    %404 = vmatprep.subr.mxu0 0.0
    %405 = vmatpush1.msra.mxu0 %v116
    %406 = vmatprep.subr.mxu0 0.0
    %407 = vmatpush1.msra.mxu0 0.0
    %408 = vmatprep.subr.mxu0 0.0
    %409 = vmatpush1.msra.mxu0 0.0
    %410 = vmatprep.subr.mxu0 0.0
    %411 = vmatpush1.msra.mxu0 0.0
    %412 = vmatprep.subr.mxu0 0.0
    %413 = vmatpush1.msra.mxu0 0.0
    %414 = vmatprep.subr.mxu0 0.0
    %415 = vmatpush1.msra.mxu0 0.0
    %416 = vmatprep.subr.mxu0 0.0
    %417 = vmatpush1.msra.mxu0 0.0
    %418 = vmatprep.subr.mxu0 0.0
    %419 = vmatpush1.msra.mxu0 0.0
    %420 = vmatprep.subr.mxu0 0.0
    %421 = vmatpush1.msra.mxu0 0.0
    %422 = vmatprep.subr.mxu0 0.0
    %423 = vmatpush1.msra.mxu0 0.0
    %424 = vmatprep.subr.mxu0 0.0
    %425 = vmatpush1.msra.mxu0 0.0
    %426 = vmatprep.subr.mxu0 0.0
    %427 = vmatpush1.msra.mxu0 0.0
    %428 = vmatprep.subr.mxu0 0.0
    %429 = vmatpush1.msra.mxu0 0.0
    %430 = vmatprep.subr.mxu0 0.0
    %431 = vmatpush1.msra.mxu0 0.0
    %432 = vmatprep.subr.mxu0 0.0
    %433 = vmatpush1.msra.mxu0 0.0
    %434 = vmatprep.subr.mxu0 0.0
    %435 = vmatpush1.msra.mxu0 0.0
    %436 = vmatprep.subr.mxu0 0.0
    %437 = vmatpush1.msra.mxu0 0.0
    %438 = vmatprep.subr.mxu0 0.0
    %439 = vmatpush1.msra.mxu0 0.0
    %440 = vmatprep.subr.mxu0 0.0
    %441 = vmatpush1.msra.mxu0 0.0
    %442 = vmatprep.subr.mxu0 0.0
    %443 = vmatpush1.msra.mxu0 0.0
    %444 = vmatprep.subr.mxu0 0.0
    %445 = vmatpush1.msra.mxu0 0.0
    %446 = vmatprep.subr.mxu0 0.0
    %447 = vmatpush1.msra.mxu0 0.0
    %448 = vmatprep.subr.mxu0 0.0
    %449 = vmatpush1.msra.mxu0 0.0
    %450 = vmatprep.subr.mxu0 0.0
    %451 = vmatpush1.msra.mxu0 0.0
    %452 = vmatprep.subr.mxu0 0.0
    %453 = vmatpush1.msra.mxu0 0.0
    %454 = vmatprep.subr.mxu0 0.0
    %455 = vmatpush1.msra.mxu0 0.0
    %456 = vmatprep.subr.mxu0 0.0
    %457 = vmatpush1.msra.mxu0 0.0
    %458 = vmatprep.subr.mxu0 0.0
    %459 = vmatpush1.msra.mxu0 0.0
    %460 = vmatprep.subr.mxu0 0.0
    %461 = vmatpush1.msra.mxu0 0.0
    %462 = vmatprep.mubr.f32.mxu0 0.0
    %463 = vmatmul.mubr.f32.gmra.mrb[0].mxu0 %v215
    %v464 = vpop.f32.mrb[0].mxu0
    %v465 = vadd.f32 0.0, %v464
    %v466 = vpop.f32.mrb[0].mxu0
    %467 = vdwg.mxu0
    %v470 = vrot.slane %v397, 7
    %v471 = vsel %vm336, %v470, %v396
    %472 = vrot.lane.b32.xlu0 %v471, 32
    %v473 = vpop.permute.xlu0 %472
    %v474 = vsel %vm213, %v473, 0
    %476 = vmatprep.subr.mxu0 0.0
    %477 = vmatpush1.msra.mxu0 %v109
    %478 = vmatprep.subr.mxu0 0.0
    %479 = vmatpush1.msra.mxu0 %v110
    %480 = vmatprep.subr.mxu0 0.0
    %481 = vmatpush1.msra.mxu0 %v111
    %482 = vmatprep.subr.mxu0 0.0
    %483 = vmatpush1.msra.mxu0 %v112
    %484 = vmatprep.subr.mxu0 0.0
    %485 = vmatpush1.msra.mxu0 0.0
    %486 = vmatprep.subr.mxu0 0.0
    %487 = vmatpush1.msra.mxu0 0.0
    %488 = vmatprep.subr.mxu0 0.0
    %489 = vmatpush1.msra.mxu0 0.0
    %490 = vmatprep.subr.mxu0 0.0
    %491 = vmatpush1.msra.mxu0 0.0
    %492 = vmatprep.subr.mxu0 0.0
    %493 = vmatpush1.msra.mxu0 0.0
    %494 = vmatprep.subr.mxu0 0.0
    %495 = vmatpush1.msra.mxu0 0.0
    %496 = vmatprep.subr.mxu0 0.0
    %497 = vmatpush1.msra.mxu0 0.0
    %498 = vmatprep.subr.mxu0 0.0
    %499 = vmatpush1.msra.mxu0 0.0
    %500 = vmatprep.subr.mxu0 0.0
    %501 = vmatpush1.msra.mxu0 0.0
    %502 = vmatprep.subr.mxu0 0.0
    %503 = vmatpush1.msra.mxu0 0.0
    %504 = vmatprep.subr.mxu0 0.0
    %505 = vmatpush1.msra.mxu0 0.0
    %506 = vmatprep.subr.mxu0 0.0
    %507 = vmatpush1.msra.mxu0 0.0
    %508 = vmatprep.subr.mxu0 0.0
    %509 = vmatpush1.msra.mxu0 0.0
    %510 = vmatprep.subr.mxu0 0.0
    %511 = vmatpush1.msra.mxu0 0.0
    %512 = vmatprep.subr.mxu0 0.0
    %513 = vmatpush1.msra.mxu0 0.0
    %514 = vmatprep.subr.mxu0 0.0
    %515 = vmatpush1.msra.mxu0 0.0
    %516 = vmatprep.subr.mxu0 0.0
    %517 = vmatpush1.msra.mxu0 0.0
    %518 = vmatprep.subr.mxu0 0.0
    %519 = vmatpush1.msra.mxu0 0.0
    %520 = vmatprep.subr.mxu0 0.0
    %521 = vmatpush1.msra.mxu0 0.0
    %522 = vmatprep.subr.mxu0 0.0
    %523 = vmatpush1.msra.mxu0 0.0
    %524 = vmatprep.subr.mxu0 0.0
    %525 = vmatpush1.msra.mxu0 0.0
    %526 = vmatprep.subr.mxu0 0.0
    %527 = vmatpush1.msra.mxu0 0.0
    %528 = vmatprep.subr.mxu0 0.0
    %529 = vmatpush1.msra.mxu0 0.0
    %530 = vmatprep.subr.mxu0 0.0
    %531 = vmatpush1.msra.mxu0 0.0
    %532 = vmatprep.subr.mxu0 0.0
    %533 = vmatpush1.msra.mxu0 0.0
    %534 = vmatprep.subr.mxu0 0.0
    %535 = vmatpush1.msra.mxu0 0.0
    %536 = vmatprep.subr.mxu0 0.0
    %537 = vmatpush1.msra.mxu0 0.0
    %538 = vmatprep.subr.mxu0 0.0
    %539 = vmatpush1.msra.mxu0 0.0
    %540 = vmatprep.mubr.f32.mxu0 0.0
    %541 = vmatmul.mubr.f32.gmra.mrb[0].mxu0 %v474
    %v542 = vpop.f32.mrb[0].mxu0
    %v543 = vadd.f32 %v465, %v542
    %v544 = vpop.f32.mrb[0].mxu0
    %545 = vdwg.mxu0
    %v547 = vlaneseq
    %v548 = vshrl.u32 %v547, 7
    %v549 = vsub.s32 0, %v548
    %v550 = vrot.slane %v117, %v549
    %v552 = vadd.f32 %v543, %v550
    %v553 = vtanh.pop %v552
    %v554 = vmul.f32 %v553, 0.5
    %v555 = vadd.f32 %v554, 0.5
    %v556 = vmul.f32 %v555, 0.0
    %558 = vrot.lane.b32.xlu0 %v553, 64
    %v559 = vpop.permute.xlu0 %558
    %v561 = vmul.f32 %v555, %v559
    %563 = vrot.lane.b32.xlu0 %v561, 32
    %v564 = vpop.permute.xlu0 %563
    %v566 = vadd.f32 %v556, %v564
    %v567 = vtanh.pop %v566
    %569 = vrot.lane.b32.xlu0 %v567, 64
    %v570 = vpop.permute.xlu0 %569
    %v572 = vmul.f32 %v555, %v570
    %v575 = vunpack.c.l.s4 1966171168
    %v576 = vunpack.c.0.s8 %v575
    %v577 = vlaneseq
    %v578 = vshrl.u32 %v577, 7
    %v579 = vsub.s32 %v576, %v578
    %v580 = vrot.slane %v572, %v579
    %v581 = vcombine.high %v580, %v580
    %v583 = vunpack.c.l.s4 1966171168
    %v584 = vunpack.c.0.s8 %v583
    %v585 = vlaneseq
    %v586 = vshrl.u32 %v585, 7
    %v587 = vsub.s32 %v584, %v586
    %v588 = vrot.slane %v580, %v587
    %v590 = vunpack.c.l.s4 1966171168
    %v591 = vunpack.c.0.s8 %v590
    %v592 = vlaneseq
    %v593 = vshrl.u32 %v592, 7
    %v594 = vsub.s32 %v591, %v593
    %v595 = vrot.slane %v581, %v594
    %v596 = vlaneseq
    %v597 = vshrl.u32 %v596, 7
    %v598 = vsub.s32 0, %v597
    %v599 = vrot.slane %v588, %v598
    %v600 = vlaneseq
    %v601 = vshrl.u32 %v600, 7
    %v602 = vsub.s32 0, %v601
    %v603 = vrot.slane %v595, %v602
    %604 = vrot.lane.b32.xlu0 %v599, 32
    %v605 = vpop.permute.xlu0 %604
    %606 = vrot.lane.b32.xlu0 %v603, 32
    %v607 = vpop.permute.xlu0 %606
    %vm610 = vcmask 253952
    %611 = vst.msk [vmem:[#allocation11] sm:$0x1] %vm610, %v605
    %612 = vst.msk [vmem:[#allocation11 + $0x8] sm:$0x1] %vm610, %v607
    %v613 = vsel %vm213, %v339, 0
    %615 = vmatprep.subr.mxu0 0.0
    %616 = vmatpush1.msra.mxu0 %v105
    %617 = vmatprep.subr.mxu0 0.0
    %618 = vmatpush1.msra.mxu0 %v106
    %619 = vmatprep.subr.mxu0 0.0
    %620 = vmatpush1.msra.mxu0 %v107
    %621 = vmatprep.subr.mxu0 0.0
    %622 = vmatpush1.msra.mxu0 %v108
    %623 = vmatprep.subr.mxu0 0.0
    %624 = vmatpush1.msra.mxu0 0.0
    %625 = vmatprep.subr.mxu0 0.0
    %626 = vmatpush1.msra.mxu0 0.0
    %627 = vmatprep.subr.mxu0 0.0
    %628 = vmatpush1.msra.mxu0 0.0
    %629 = vmatprep.subr.mxu0 0.0
    %630 = vmatpush1.msra.mxu0 0.0
    %631 = vmatprep.subr.mxu0 0.0
    %632 = vmatpush1.msra.mxu0 0.0
    %633 = vmatprep.subr.mxu0 0.0
    %634 = vmatpush1.msra.mxu0 0.0
    %635 = vmatprep.subr.mxu0 0.0
    %636 = vmatpush1.msra.mxu0 0.0
    %637 = vmatprep.subr.mxu0 0.0
    %638 = vmatpush1.msra.mxu0 0.0
    %639 = vmatprep.subr.mxu0 0.0
    %640 = vmatpush1.msra.mxu0 0.0
    %641 = vmatprep.subr.mxu0 0.0
    %642 = vmatpush1.msra.mxu0 0.0
    %643 = vmatprep.subr.mxu0 0.0
    %644 = vmatpush1.msra.mxu0 0.0
    %645 = vmatprep.subr.mxu0 0.0
    %646 = vmatpush1.msra.mxu0 0.0
    %647 = vmatprep.subr.mxu0 0.0
    %648 = vmatpush1.msra.mxu0 0.0
    %649 = vmatprep.subr.mxu0 0.0
    %650 = vmatpush1.msra.mxu0 0.0
    %651 = vmatprep.subr.mxu0 0.0
    %652 = vmatpush1.msra.mxu0 0.0
    %653 = vmatprep.subr.mxu0 0.0
    %654 = vmatpush1.msra.mxu0 0.0
    %655 = vmatprep.subr.mxu0 0.0
    %656 = vmatpush1.msra.mxu0 0.0
    %657 = vmatprep.subr.mxu0 0.0
    %658 = vmatpush1.msra.mxu0 0.0
    %659 = vmatprep.subr.mxu0 0.0
    %660 = vmatpush1.msra.mxu0 0.0
    %661 = vmatprep.subr.mxu0 0.0
    %662 = vmatpush1.msra.mxu0 0.0
    %663 = vmatprep.subr.mxu0 0.0
    %664 = vmatpush1.msra.mxu0 0.0
    %665 = vmatprep.subr.mxu0 0.0
    %666 = vmatpush1.msra.mxu0 0.0
    %667 = vmatprep.subr.mxu0 0.0
    %668 = vmatpush1.msra.mxu0 0.0
    %669 = vmatprep.subr.mxu0 0.0
    %670 = vmatpush1.msra.mxu0 0.0
    %671 = vmatprep.subr.mxu0 0.0
    %672 = vmatpush1.msra.mxu0 0.0
    %673 = vmatprep.subr.mxu0 0.0
    %674 = vmatpush1.msra.mxu0 0.0
    %675 = vmatprep.subr.mxu0 0.0
    %676 = vmatpush1.msra.mxu0 0.0
    %677 = vmatprep.subr.mxu0 0.0
    %678 = vmatpush1.msra.mxu0 0.0
    %679 = vmatprep.mubr.f32.mxu0 0.0
    %680 = vmatmul.mubr.f32.gmra.mrb[0].mxu0 %v613
    %v681 = vpop.f32.mrb[0].mxu0
    %v682 = vadd.f32 0.0, %v681
    %v683 = vpop.f32.mrb[0].mxu0
    %684 = vdwg.mxu0
    %v686 = vrot.slane %v682, 7
    %v689 = vadd.f32 %v205, %v686
    %v690 = vadd.f32 %v210, %v682
    %v691 = vtanh.pop %v689
    %v692 = vtanh.pop %v690
    %v693 = vmul.f32 %v691, 0.5
    %v694 = vmul.f32 %v692, 0.5
    %v695 = vadd.f32 %v693, 0.5
    %v696 = vadd.f32 %v694, 0.5
    %v699 = vrot.slane %v319, 7
    %v700 = vrot.slane %v320, 7
    %v703 = vmul.f32 %v695, %v699
    %v704 = vmul.f32 %v696, %v700
    %707 = vrot.lane.b32.xlu0 %v691, 64
    %v708 = vpop.permute.xlu0 %707
    %709 = vrot.lane.b32.xlu0 %v692, 64
    %v710 = vpop.permute.xlu0 %709
    %v713 = vmul.f32 %v695, %v708
    %v714 = vmul.f32 %v696, %v710
    %717 = vrot.lane.b32.xlu0 %v713, 32
    %v718 = vpop.permute.xlu0 %717
    %719 = vrot.lane.b32.xlu0 %v714, 32
    %v720 = vpop.permute.xlu0 %719
    %v723 = vadd.f32 %v703, %v718
    %v724 = vadd.f32 %v704, %v720
    %v725 = vtanh.pop %v723
    %v726 = vtanh.pop %v724
    %729 = vrot.lane.b32.xlu0 %v725, 64
    %v730 = vpop.permute.xlu0 %729
    %731 = vrot.lane.b32.xlu0 %v726, 64
    %v732 = vpop.permute.xlu0 %731
    %v735 = vmul.f32 %v695, %v730
    %v736 = vmul.f32 %v696, %v732
    %v739 = vrot.slane %v736, 7
    %vm740 = vcmask 1042434
    %v741 = vsel %vm740, %v739, %v735
    %742 = vrot.lane.b32.xlu0 %v741, 32
    %v743 = vpop.permute.xlu0 %742
    %vm745 = vcmask 256001
    %v746 = vsel %vm745, %v743, 0.0
    %747 = vadd.xlane.f32.xlu0 %v746
    %v748 = vpop.xlane.xlu0 %747
    %v749 = vmul.f32 %v748, 0.03125
    %v750 = vmul.f32 %v735, %v735
    %v751 = vmul.f32 %v736, %v736
    %v754 = vrot.slane %v751, 7
    %v755 = vsel %vm740, %v754, %v750
    %756 = vrot.lane.b32.xlu0 %v755, 32
    %v757 = vpop.permute.xlu0 %756
    %v759 = vsel %vm745, %v757, 0.0
    %760 = vadd.xlane.f32.xlu0 %v759
    %v761 = vpop.xlane.xlu0 %760
    %v762 = vmul.f32 %v761, 0.03125
    %v763 = vmul.f32 %v749, %v749
    %v764 = vsub.f32 %v762, %v763
    %v765 = vadd.f32 %v764, 1e-06
    %v766 = vrsqrt.pop %v765
    %v767 = vmul.f32 %v367, %v766
    %v769 = vrot.slane %v767, 1
    %770 = vrot.lane.b32.xlu0 %v767, 96
    %v771 = vpop.permute.xlu0 %770
    %772 = vrot.lane.b32.xlu0 %v769, 96
    %v773 = vpop.permute.xlu0 %772
    %v776 = vmul.f32 %v735, %v771
    %v777 = vmul.f32 %v736, %v773
    %v778 = vmul.f32 %v749, %v767
    %v779 = vsub.f32 %v385, %v778
    %v781 = vrot.slane %v779, 1
    %782 = vrot.lane.b32.xlu0 %v779, 96
    %v783 = vpop.permute.xlu0 %782
    %784 = vrot.lane.b32.xlu0 %v781, 96
    %v785 = vpop.permute.xlu0 %784
    %v788 = vadd.f32 %v776, %v783
    %v789 = vadd.f32 %v777, %v785
    %790 = vrot.lane.b32.xlu0 %v572, 32
    %v791 = vpop.permute.xlu0 %790
    %v792 = vsel %vm213, %v791, 0
    %794 = vmatprep.subr.mxu0 0.0
    %795 = vmatpush1.msra.mxu0 %v113
    %796 = vmatprep.subr.mxu0 0.0
    %797 = vmatpush1.msra.mxu0 %v114
    %798 = vmatprep.subr.mxu0 0.0
    %799 = vmatpush1.msra.mxu0 %v115
    %800 = vmatprep.subr.mxu0 0.0
    %801 = vmatpush1.msra.mxu0 %v116
    %802 = vmatprep.subr.mxu0 0.0
    %803 = vmatpush1.msra.mxu0 0.0
    %804 = vmatprep.subr.mxu0 0.0
    %805 = vmatpush1.msra.mxu0 0.0
    %806 = vmatprep.subr.mxu0 0.0
    %807 = vmatpush1.msra.mxu0 0.0
    %808 = vmatprep.subr.mxu0 0.0
    %809 = vmatpush1.msra.mxu0 0.0
    %810 = vmatprep.subr.mxu0 0.0
    %811 = vmatpush1.msra.mxu0 0.0
    %812 = vmatprep.subr.mxu0 0.0
    %813 = vmatpush1.msra.mxu0 0.0
    %814 = vmatprep.subr.mxu0 0.0
    %815 = vmatpush1.msra.mxu0 0.0
    %816 = vmatprep.subr.mxu0 0.0
    %817 = vmatpush1.msra.mxu0 0.0
    %818 = vmatprep.subr.mxu0 0.0
    %819 = vmatpush1.msra.mxu0 0.0
    %820 = vmatprep.subr.mxu0 0.0
    %821 = vmatpush1.msra.mxu0 0.0
    %822 = vmatprep.subr.mxu0 0.0
    %823 = vmatpush1.msra.mxu0 0.0
    %824 = vmatprep.subr.mxu0 0.0
    %825 = vmatpush1.msra.mxu0 0.0
    %826 = vmatprep.subr.mxu0 0.0
    %827 = vmatpush1.msra.mxu0 0.0
    %828 = vmatprep.subr.mxu0 0.0
    %829 = vmatpush1.msra.mxu0 0.0
    %830 = vmatprep.subr.mxu0 0.0
    %831 = vmatpush1.msra.mxu0 0.0
    %832 = vmatprep.subr.mxu0 0.0
    %833 = vmatpush1.msra.mxu0 0.0
    %834 = vmatprep.subr.mxu0 0.0
    %835 = vmatpush1.msra.mxu0 0.0
    %836 = vmatprep.subr.mxu0 0.0
    %837 = vmatpush1.msra.mxu0 0.0
    %838 = vmatprep.subr.mxu0 0.0
    %839 = vmatpush1.msra.mxu0 0.0
    %840 = vmatprep.subr.mxu0 0.0
    %841 = vmatpush1.msra.mxu0 0.0
    %842 = vmatprep.subr.mxu0 0.0
    %843 = vmatpush1.msra.mxu0 0.0
    %844 = vmatprep.subr.mxu0 0.0
    %845 = vmatpush1.msra.mxu0 0.0
    %846 = vmatprep.subr.mxu0 0.0
    %847 = vmatpush1.msra.mxu0 0.0
    %848 = vmatprep.subr.mxu0 0.0
    %849 = vmatpush1.msra.mxu0 0.0
    %850 = vmatprep.subr.mxu0 0.0
    %851 = vmatpush1.msra.mxu0 0.0
    %852 = vmatprep.subr.mxu0 0.0
    %853 = vmatpush1.msra.mxu0 0.0
    %854 = vmatprep.subr.mxu0 0.0
    %855 = vmatpush1.msra.mxu0 0.0
    %856 = vmatprep.subr.mxu0 0.0
    %857 = vmatpush1.msra.mxu0 0.0
    %858 = vmatprep.mubr.f32.mxu0 0.0
    %859 = vmatmul.mubr.f32.gmra.mrb[0].mxu0 %v792
    %v860 = vpop.f32.mrb[0].mxu0
    %v861 = vadd.f32 0.0, %v860
    %v862 = vpop.f32.mrb[0].mxu0
    %863 = vdwg.mxu0
    %v866 = vrot.slane %v788, 1
    %v867 = vsel %vm336, %v789, %v866
    %868 = vrot.lane.b32.xlu0 %v867, 32
    %v869 = vpop.permute.xlu0 %868
    %v870 = vsel %vm213, %v869, 0
    %872 = vmatprep.subr.mxu0 0.0
    %873 = vmatpush1.msra.mxu0 %v109
    %874 = vmatprep.subr.mxu0 0.0
    %875 = vmatpush1.msra.mxu0 %v110
    %876 = vmatprep.subr.mxu0 0.0
    %877 = vmatpush1.msra.mxu0 %v111
    %878 = vmatprep.subr.mxu0 0.0
    %879 = vmatpush1.msra.mxu0 %v112
    %880 = vmatprep.subr.mxu0 0.0
    %881 = vmatpush1.msra.mxu0 0.0
    %882 = vmatprep.subr.mxu0 0.0
    %883 = vmatpush1.msra.mxu0 0.0
    %884 = vmatprep.subr.mxu0 0.0
    %885 = vmatpush1.msra.mxu0 0.0
    %886 = vmatprep.subr.mxu0 0.0
    %887 = vmatpush1.msra.mxu0 0.0
    %888 = vmatprep.subr.mxu0 0.0
    %889 = vmatpush1.msra.mxu0 0.0
    %890 = vmatprep.subr.mxu0 0.0
    %891 = vmatpush1.msra.mxu0 0.0
    %892 = vmatprep.subr.mxu0 0.0
    %893 = vmatpush1.msra.mxu0 0.0
    %894 = vmatprep.subr.mxu0 0.0
    %895 = vmatpush1.msra.mxu0 0.0
    %896 = vmatprep.subr.mxu0 0.0
    %897 = vmatpush1.msra.mxu0 0.0
    %898 = vmatprep.subr.mxu0 0.0
    %899 = vmatpush1.msra.mxu0 0.0
    %900 = vmatprep.subr.mxu0 0.0
    %901 = vmatpush1.msra.mxu0 0.0
    %902 = vmatprep.subr.mxu0 0.0
    %903 = vmatpush1.msra.mxu0 0.0
    %904 = vmatprep.subr.mxu0 0.0
    %905 = vmatpush1.msra.mxu0 0.0
    %906 = vmatprep.subr.mxu0 0.0
    %907 = vmatpush1.msra.mxu0 0.0
    %908 = vmatprep.subr.mxu0 0.0
    %909 = vmatpush1.msra.mxu0 0.0
    %910 = vmatprep.subr.mxu0 0.0
    %911 = vmatpush1.msra.mxu0 0.0
    %912 = vmatprep.subr.mxu0 0.0
    %913 = vmatpush1.msra.mxu0 0.0
    %914 = vmatprep.subr.mxu0 0.0
    %915 = vmatpush1.msra.mxu0 0.0
    %916 = vmatprep.subr.mxu0 0.0
    %917 = vmatpush1.msra.mxu0 0.0
    %918 = vmatprep.subr.mxu0 0.0
    %919 = vmatpush1.msra.mxu0 0.0
    %920 = vmatprep.subr.mxu0 0.0
    %921 = vmatpush1.msra.mxu0 0.0
    %922 = vmatprep.subr.mxu0 0.0
    %923 = vmatpush1.msra.mxu0 0.0
    %924 = vmatprep.subr.mxu0 0.0
    %925 = vmatpush1.msra.mxu0 0.0
    %926 = vmatprep.subr.mxu0 0.0
    %927 = vmatpush1.msra.mxu0 0.0
    %928 = vmatprep.subr.mxu0 0.0
    %929 = vmatpush1.msra.mxu0 0.0
    %930 = vmatprep.subr.mxu0 0.0
    %931 = vmatpush1.msra.mxu0 0.0
    %932 = vmatprep.subr.mxu0 0.0
    %933 = vmatpush1.msra.mxu0 0.0
    %934 = vmatprep.subr.mxu0 0.0
    %935 = vmatpush1.msra.mxu0 0.0
    %936 = vmatprep.mubr.f32.mxu0 0.0
    %937 = vmatmul.mubr.f32.gmra.mrb[0].mxu0 %v870
    %v938 = vpop.f32.mrb[0].mxu0
    %v939 = vadd.f32 %v861, %v938
    %v940 = vpop.f32.mrb[0].mxu0
    %941 = vdwg.mxu0
    %v942 = vadd.f32 %v939, %v550
    %v943 = vtanh.pop %v942
    %v944 = vmul.f32 %v943, 0.5
    %v945 = vadd.f32 %v944, 0.5
    %v946 = vmul.f32 %v945, %v566
    %948 = vrot.lane.b32.xlu0 %v943, 64
    %v949 = vpop.permute.xlu0 %948
    %v951 = vmul.f32 %v945, %v949
    %953 = vrot.lane.b32.xlu0 %v951, 32
    %v954 = vpop.permute.xlu0 %953
    %v956 = vadd.f32 %v946, %v954
    %v957 = vtanh.pop %v956
    %959 = vrot.lane.b32.xlu0 %v957, 64
    %v960 = vpop.permute.xlu0 %959
    %v962 = vmul.f32 %v945, %v960
    %v965 = vunpack.c.l.s4 1966171168
    %v966 = vunpack.c.0.s8 %v965
    %v967 = vlaneseq
    %v968 = vshrl.u32 %v967, 7
    %v969 = vsub.s32 %v966, %v968
    %v970 = vrot.slane %v962, %v969
    %v971 = vcombine.high %v970, %v970
    %v973 = vunpack.c.l.s4 1966171168
    %v974 = vunpack.c.0.s8 %v973
    %v975 = vlaneseq
    %v976 = vshrl.u32 %v975, 7
    %v977 = vsub.s32 %v974, %v976
    %v978 = vrot.slane %v970, %v977
    %v980 = vunpack.c.l.s4 1966171168
    %v981 = vunpack.c.0.s8 %v980
    %v982 = vlaneseq
    %v983 = vshrl.u32 %v982, 7
    %v984 = vsub.s32 %v981, %v983
    %v985 = vrot.slane %v971, %v984
    %v986 = vlaneseq
    %v987 = vshrl.u32 %v986, 7
    %v988 = vsub.s32 0, %v987
    %v989 = vrot.slane %v978, %v988
    %v990 = vlaneseq
    %v991 = vshrl.u32 %v990, 7
    %v992 = vsub.s32 0, %v991
    %v993 = vrot.slane %v985, %v992
    %994 = vrot.lane.b32.xlu0 %v989, 32
    %v995 = vpop.permute.xlu0 %994
    %996 = vrot.lane.b32.xlu0 %v993, 32
    %v997 = vpop.permute.xlu0 %996
    %1000 = vst.msk [vmem:[#allocation11 + $0x1] sm:$0x1] %vm610, %v995
    %1001 = vst.msk [vmem:[#allocation11 + $0x9] sm:$0x1] %vm610, %v997
    %v1002 = vrot.slane %v735, 1
    %v1003 = vsel %vm336, %v736, %v1002
    %1004 = vrot.lane.b32.xlu0 %v1003, 32
    %v1005 = vpop.permute.xlu0 %1004
    %v1006 = vsel %vm213, %v1005, 0
    %1008 = vmatprep.subr.mxu0 0.0
    %1009 = vmatpush1.msra.mxu0 %v105
    %1010 = vmatprep.subr.mxu0 0.0
    %1011 = vmatpush1.msra.mxu0 %v106
    %1012 = vmatprep.subr.mxu0 0.0
    %1013 = vmatpush1.msra.mxu0 %v107
    %1014 = vmatprep.subr.mxu0 0.0
    %1015 = vmatpush1.msra.mxu0 %v108
    %1016 = vmatprep.subr.mxu0 0.0
    %1017 = vmatpush1.msra.mxu0 0.0
    %1018 = vmatprep.subr.mxu0 0.0
    %1019 = vmatpush1.msra.mxu0 0.0
    %1020 = vmatprep.subr.mxu0 0.0
    %1021 = vmatpush1.msra.mxu0 0.0
    %1022 = vmatprep.subr.mxu0 0.0
    %1023 = vmatpush1.msra.mxu0 0.0
    %1024 = vmatprep.subr.mxu0 0.0
    %1025 = vmatpush1.msra.mxu0 0.0
    %1026 = vmatprep.subr.mxu0 0.0
    %1027 = vmatpush1.msra.mxu0 0.0
    %1028 = vmatprep.subr.mxu0 0.0
    %1029 = vmatpush1.msra.mxu0 0.0
    %1030 = vmatprep.subr.mxu0 0.0
    %1031 = vmatpush1.msra.mxu0 0.0
    %1032 = vmatprep.subr.mxu0 0.0
    %1033 = vmatpush1.msra.mxu0 0.0
    %1034 = vmatprep.subr.mxu0 0.0
    %1035 = vmatpush1.msra.mxu0 0.0
    %1036 = vmatprep.subr.mxu0 0.0
    %1037 = vmatpush1.msra.mxu0 0.0
    %1038 = vmatprep.subr.mxu0 0.0
    %1039 = vmatpush1.msra.mxu0 0.0
    %1040 = vmatprep.subr.mxu0 0.0
    %1041 = vmatpush1.msra.mxu0 0.0
    %1042 = vmatprep.subr.mxu0 0.0
    %1043 = vmatpush1.msra.mxu0 0.0
    %1044 = vmatprep.subr.mxu0 0.0
    %1045 = vmatpush1.msra.mxu0 0.0
    %1046 = vmatprep.subr.mxu0 0.0
    %1047 = vmatpush1.msra.mxu0 0.0
    %1048 = vmatprep.subr.mxu0 0.0
    %1049 = vmatpush1.msra.mxu0 0.0
    %1050 = vmatprep.subr.mxu0 0.0
    %1051 = vmatpush1.msra.mxu0 0.0
    %1052 = vmatprep.subr.mxu0 0.0
    %1053 = vmatpush1.msra.mxu0 0.0
    %1054 = vmatprep.subr.mxu0 0.0
    %1055 = vmatpush1.msra.mxu0 0.0
    %1056 = vmatprep.subr.mxu0 0.0
    %1057 = vmatpush1.msra.mxu0 0.0
    %1058 = vmatprep.subr.mxu0 0.0
    %1059 = vmatpush1.msra.mxu0 0.0
    %1060 = vmatprep.subr.mxu0 0.0
    %1061 = vmatpush1.msra.mxu0 0.0
    %1062 = vmatprep.subr.mxu0 0.0
    %1063 = vmatpush1.msra.mxu0 0.0
    %1064 = vmatprep.subr.mxu0 0.0
    %1065 = vmatpush1.msra.mxu0 0.0
    %1066 = vmatprep.subr.mxu0 0.0
    %1067 = vmatpush1.msra.mxu0 0.0
    %1068 = vmatprep.subr.mxu0 0.0
    %1069 = vmatpush1.msra.mxu0 0.0
    %1070 = vmatprep.subr.mxu0 0.0
    %1071 = vmatpush1.msra.mxu0 0.0
    %1072 = vmatprep.mubr.f32.mxu0 0.0
    %1073 = vmatmul.mubr.f32.gmra.mrb[0].mxu0 %v1006
    %v1074 = vpop.f32.mrb[0].mxu0
    %v1075 = vadd.f32 0.0, %v1074
    %v1076 = vpop.f32.mrb[0].mxu0
    %1077 = vdwg.mxu0
    %v1079 = vrot.slane %v1075, 6
    %v1080 = vrot.slane %v1075, 7
    %v1083 = vadd.f32 %v205, %v1079
    %v1084 = vadd.f32 %v210, %v1080
    %v1085 = vtanh.pop %v1083
    %v1086 = vtanh.pop %v1084
    %v1087 = vmul.f32 %v1085, 0.5
    %v1088 = vmul.f32 %v1086, 0.5
    %v1089 = vadd.f32 %v1087, 0.5
    %v1090 = vadd.f32 %v1088, 0.5
    %v1093 = vrot.slane %v723, 7
    %v1094 = vrot.slane %v724, 7
    %v1097 = vmul.f32 %v1089, %v1093
    %v1098 = vmul.f32 %v1090, %v1094
    %1101 = vrot.lane.b32.xlu0 %v1085, 64
    %v1102 = vpop.permute.xlu0 %1101
    %1103 = vrot.lane.b32.xlu0 %v1086, 64
    %v1104 = vpop.permute.xlu0 %1103
    %v1107 = vmul.f32 %v1089, %v1102
    %v1108 = vmul.f32 %v1090, %v1104
    %1111 = vrot.lane.b32.xlu0 %v1107, 32
    %v1112 = vpop.permute.xlu0 %1111
    %1113 = vrot.lane.b32.xlu0 %v1108, 32
    %v1114 = vpop.permute.xlu0 %1113
    %v1117 = vadd.f32 %v1097, %v1112
    %v1118 = vadd.f32 %v1098, %v1114
    %v1119 = vtanh.pop %v1117
    %v1120 = vtanh.pop %v1118
    %1123 = vrot.lane.b32.xlu0 %v1119, 64
    %v1124 = vpop.permute.xlu0 %1123
    %1125 = vrot.lane.b32.xlu0 %v1120, 64
    %v1126 = vpop.permute.xlu0 %1125
    %v1129 = vmul.f32 %v1089, %v1124
    %v1130 = vmul.f32 %v1090, %v1126
    %v1133 = vrot.slane %v1130, 7
    %vm1134 = vcmask 1043459
    %v1135 = vsel %vm1134, %v1133, %v1129
    %1136 = vrot.lane.b32.xlu0 %v1135, 32
    %v1137 = vpop.permute.xlu0 %1136
    %vm1139 = vcmask 257026
    %v1140 = vsel %vm1139, %v1137, 0.0
    %1141 = vadd.xlane.f32.xlu0 %v1140
    %v1142 = vpop.xlane.xlu0 %1141
    %v1143 = vmul.f32 %v1142, 0.03125
    %v1144 = vmul.f32 %v1129, %v1129
    %v1145 = vmul.f32 %v1130, %v1130
    %v1148 = vrot.slane %v1145, 7
    %v1149 = vsel %vm1134, %v1148, %v1144
    %1150 = vrot.lane.b32.xlu0 %v1149, 32
    %v1151 = vpop.permute.xlu0 %1150
    %v1153 = vsel %vm1139, %v1151, 0.0
    %1154 = vadd.xlane.f32.xlu0 %v1153
    %v1155 = vpop.xlane.xlu0 %1154
    %v1156 = vmul.f32 %v1155, 0.03125
    %v1157 = vmul.f32 %v1143, %v1143
    %v1158 = vsub.f32 %v1156, %v1157
    %v1159 = vadd.f32 %v1158, 1e-06
    %v1160 = vrsqrt.pop %v1159
    %v1161 = vmul.f32 %v367, %v1160
    %v1163 = vrot.slane %v1161, 1
    %1164 = vrot.lane.b32.xlu0 %v1161, 96
    %v1165 = vpop.permute.xlu0 %1164
    %1166 = vrot.lane.b32.xlu0 %v1163, 96
    %v1167 = vpop.permute.xlu0 %1166
    %v1170 = vmul.f32 %v1129, %v1165
    %v1171 = vmul.f32 %v1130, %v1167
    %v1172 = vmul.f32 %v1143, %v1161
    %v1173 = vsub.f32 %v385, %v1172
    %v1175 = vrot.slane %v1173, 1
    %1176 = vrot.lane.b32.xlu0 %v1173, 96
    %v1177 = vpop.permute.xlu0 %1176
    %1178 = vrot.lane.b32.xlu0 %v1175, 96
    %v1179 = vpop.permute.xlu0 %1178
    %v1182 = vadd.f32 %v1170, %v1177
    %v1183 = vadd.f32 %v1171, %v1179
    %1184 = vrot.lane.b32.xlu0 %v962, 32
    %v1185 = vpop.permute.xlu0 %1184
    %v1186 = vsel %vm213, %v1185, 0
    %1188 = vmatprep.subr.mxu0 0.0
    %1189 = vmatpush1.msra.mxu0 %v113
    %1190 = vmatprep.subr.mxu0 0.0
    %1191 = vmatpush1.msra.mxu0 %v114
    %1192 = vmatprep.subr.mxu0 0.0
    %1193 = vmatpush1.msra.mxu0 %v115
    %1194 = vmatprep.subr.mxu0 0.0
    %1195 = vmatpush1.msra.mxu0 %v116
    %1196 = vmatprep.subr.mxu0 0.0
    %1197 = vmatpush1.msra.mxu0 0.0
    %1198 = vmatprep.subr.mxu0 0.0
    %1199 = vmatpush1.msra.mxu0 0.0
    %1200 = vmatprep.subr.mxu0 0.0
    %1201 = vmatpush1.msra.mxu0 0.0
    %1202 = vmatprep.subr.mxu0 0.0
    %1203 = vmatpush1.msra.mxu0 0.0
    %1204 = vmatprep.subr.mxu0 0.0
    %1205 = vmatpush1.msra.mxu0 0.0
    %1206 = vmatprep.subr.mxu0 0.0
    %1207 = vmatpush1.msra.mxu0 0.0
    %1208 = vmatprep.subr.mxu0 0.0
    %1209 = vmatpush1.msra.mxu0 0.0
    %1210 = vmatprep.subr.mxu0 0.0
    %1211 = vmatpush1.msra.mxu0 0.0
    %1212 = vmatprep.subr.mxu0 0.0
    %1213 = vmatpush1.msra.mxu0 0.0
    %1214 = vmatprep.subr.mxu0 0.0
    %1215 = vmatpush1.msra.mxu0 0.0
    %1216 = vmatprep.subr.mxu0 0.0
    %1217 = vmatpush1.msra.mxu0 0.0
    %1218 = vmatprep.subr.mxu0 0.0
    %1219 = vmatpush1.msra.mxu0 0.0
    %1220 = vmatprep.subr.mxu0 0.0
    %1221 = vmatpush1.msra.mxu0 0.0
    %1222 = vmatprep.subr.mxu0 0.0
    %1223 = vmatpush1.msra.mxu0 0.0
    %1224 = vmatprep.subr.mxu0 0.0
    %1225 = vmatpush1.msra.mxu0 0.0
    %1226 = vmatprep.subr.mxu0 0.0
    %1227 = vmatpush1.msra.mxu0 0.0
    %1228 = vmatprep.subr.mxu0 0.0
    %1229 = vmatpush1.msra.mxu0 0.0
    %1230 = vmatprep.subr.mxu0 0.0
    %1231 = vmatpush1.msra.mxu0 0.0
    %1232 = vmatprep.subr.mxu0 0.0
    %1233 = vmatpush1.msra.mxu0 0.0
    %1234 = vmatprep.subr.mxu0 0.0
    %1235 = vmatpush1.msra.mxu0 0.0
    %1236 = vmatprep.subr.mxu0 0.0
    %1237 = vmatpush1.msra.mxu0 0.0
    %1238 = vmatprep.subr.mxu0 0.0
    %1239 = vmatpush1.msra.mxu0 0.0
    %1240 = vmatprep.subr.mxu0 0.0
    %1241 = vmatpush1.msra.mxu0 0.0
    %1242 = vmatprep.subr.mxu0 0.0
    %1243 = vmatpush1.msra.mxu0 0.0
    %1244 = vmatprep.subr.mxu0 0.0
    %1245 = vmatpush1.msra.mxu0 0.0
    %1246 = vmatprep.subr.mxu0 0.0
    %1247 = vmatpush1.msra.mxu0 0.0
    %1248 = vmatprep.subr.mxu0 0.0
    %1249 = vmatpush1.msra.mxu0 0.0
    %1250 = vmatprep.subr.mxu0 0.0
    %1251 = vmatpush1.msra.mxu0 0.0
    %1252 = vmatprep.mubr.f32.mxu0 0.0
    %1253 = vmatmul.mubr.f32.gmra.mrb[0].mxu0 %v1186
    %v1254 = vpop.f32.mrb[0].mxu0
    %v1255 = vadd.f32 0.0, %v1254
    %v1256 = vpop.f32.mrb[0].mxu0
    %1257 = vdwg.mxu0
    %v1260 = vrot.slane %v1182, 2
    %v1261 = vrot.slane %v1183, 1
    %v1262 = vsel %vm336, %v1261, %v1260
    %1263 = vrot.lane.b32.xlu0 %v1262, 32
    %v1264 = vpop.permute.xlu0 %1263
    %v1265 = vsel %vm213, %v1264, 0
    %1267 = vmatprep.subr.mxu0 0.0
    %1268 = vmatpush1.msra.mxu0 %v109
    %1269 = vmatprep.subr.mxu0 0.0
    %1270 = vmatpush1.msra.mxu0 %v110
    %1271 = vmatprep.subr.mxu0 0.0
    %1272 = vmatpush1.msra.mxu0 %v111
    %1273 = vmatprep.subr.mxu0 0.0
    %1274 = vmatpush1.msra.mxu0 %v112
    %1275 = vmatprep.subr.mxu0 0.0
    %1276 = vmatpush1.msra.mxu0 0.0
    %1277 = vmatprep.subr.mxu0 0.0
    %1278 = vmatpush1.msra.mxu0 0.0
    %1279 = vmatprep.subr.mxu0 0.0
    %1280 = vmatpush1.msra.mxu0 0.0
    %1281 = vmatprep.subr.mxu0 0.0
    %1282 = vmatpush1.msra.mxu0 0.0
    %1283 = vmatprep.subr.mxu0 0.0
    %1284 = vmatpush1.msra.mxu0 0.0
    %1285 = vmatprep.subr.mxu0 0.0
    %1286 = vmatpush1.msra.mxu0 0.0
    %1287 = vmatprep.subr.mxu0 0.0
    %1288 = vmatpush1.msra.mxu0 0.0
    %1289 = vmatprep.subr.mxu0 0.0
    %1290 = vmatpush1.msra.mxu0 0.0
    %1291 = vmatprep.subr.mxu0 0.0
    %1292 = vmatpush1.msra.mxu0 0.0
    %1293 = vmatprep.subr.mxu0 0.0
    %1294 = vmatpush1.msra.mxu0 0.0
    %1295 = vmatprep.subr.mxu0 0.0
    %1296 = vmatpush1.msra.mxu0 0.0
    %1297 = vmatprep.subr.mxu0 0.0
    %1298 = vmatpush1.msra.mxu0 0.0
    %1299 = vmatprep.subr.mxu0 0.0
    %1300 = vmatpush1.msra.mxu0 0.0
    %1301 = vmatprep.subr.mxu0 0.0
    %1302 = vmatpush1.msra.mxu0 0.0
    %1303 = vmatprep.subr.mxu0 0.0
    %1304 = vmatpush1.msra.mxu0 0.0
    %1305 = vmatprep.subr.mxu0 0.0
    %1306 = vmatpush1.msra.mxu0 0.0
    %1307 = vmatprep.subr.mxu0 0.0
    %1308 = vmatpush1.msra.mxu0 0.0
    %1309 = vmatprep.subr.mxu0 0.0
    %1310 = vmatpush1.msra.mxu0 0.0
    %1311 = vmatprep.subr.mxu0 0.0
    %1312 = vmatpush1.msra.mxu0 0.0
    %1313 = vmatprep.subr.mxu0 0.0
    %1314 = vmatpush1.msra.mxu0 0.0
    %1315 = vmatprep.subr.mxu0 0.0
    %1316 = vmatpush1.msra.mxu0 0.0
    %1317 = vmatprep.subr.mxu0 0.0
    %1318 = vmatpush1.msra.mxu0 0.0
    %1319 = vmatprep.subr.mxu0 0.0
    %1320 = vmatpush1.msra.mxu0 0.0
    %1321 = vmatprep.subr.mxu0 0.0
    %1322 = vmatpush1.msra.mxu0 0.0
    %1323 = vmatprep.subr.mxu0 0.0
    %1324 = vmatpush1.msra.mxu0 0.0
    %1325 = vmatprep.subr.mxu0 0.0
    %1326 = vmatpush1.msra.mxu0 0.0
    %1327 = vmatprep.subr.mxu0 0.0
    %1328 = vmatpush1.msra.mxu0 0.0
    %1329 = vmatprep.subr.mxu0 0.0
    %1330 = vmatpush1.msra.mxu0 0.0
    %1331 = vmatprep.mubr.f32.mxu0 0.0
    %1332 = vmatmul.mubr.f32.gmra.mrb[0].mxu0 %v1265
    %v1333 = vpop.f32.mrb[0].mxu0
    %v1334 = vadd.f32 %v1255, %v1333
    %v1335 = vpop.f32.mrb[0].mxu0
    %1336 = vdwg.mxu0
    %v1337 = vadd.f32 %v1334, %v550
    %v1338 = vtanh.pop %v1337
    %v1339 = vmul.f32 %v1338, 0.5
    %v1340 = vadd.f32 %v1339, 0.5
    %v1341 = vmul.f32 %v1340, %v956
    %1343 = vrot.lane.b32.xlu0 %v1338, 64
    %v1344 = vpop.permute.xlu0 %1343
    %v1346 = vmul.f32 %v1340, %v1344
    %1348 = vrot.lane.b32.xlu0 %v1346, 32
    %v1349 = vpop.permute.xlu0 %1348
    %v1351 = vadd.f32 %v1341, %v1349
    %v1352 = vtanh.pop %v1351
    %1354 = vrot.lane.b32.xlu0 %v1352, 64
    %v1355 = vpop.permute.xlu0 %1354
    %v1357 = vmul.f32 %v1340, %v1355
    %v1360 = vunpack.c.l.s4 1966171168
    %v1361 = vunpack.c.0.s8 %v1360
    %v1362 = vlaneseq
    %v1363 = vshrl.u32 %v1362, 7
    %v1364 = vsub.s32 %v1361, %v1363
    %v1365 = vrot.slane %v1357, %v1364
    %v1366 = vcombine.high %v1365, %v1365
    %v1368 = vunpack.c.l.s4 1966171168
    %v1369 = vunpack.c.0.s8 %v1368
    %v1370 = vlaneseq
    %v1371 = vshrl.u32 %v1370, 7
    %v1372 = vsub.s32 %v1369, %v1371
    %v1373 = vrot.slane %v1365, %v1372
    %v1375 = vunpack.c.l.s4 1966171168
    %v1376 = vunpack.c.0.s8 %v1375
    %v1377 = vlaneseq
    %v1378 = vshrl.u32 %v1377, 7
    %v1379 = vsub.s32 %v1376, %v1378
    %v1380 = vrot.slane %v1366, %v1379
    %v1381 = vlaneseq
    %v1382 = vshrl.u32 %v1381, 7
    %v1383 = vsub.s32 0, %v1382
    %v1384 = vrot.slane %v1373, %v1383
    %v1385 = vlaneseq
    %v1386 = vshrl.u32 %v1385, 7
    %v1387 = vsub.s32 0, %v1386
    %v1388 = vrot.slane %v1380, %v1387
    %1389 = vrot.lane.b32.xlu0 %v1384, 32
    %v1390 = vpop.permute.xlu0 %1389
    %1391 = vrot.lane.b32.xlu0 %v1388, 32
    %v1392 = vpop.permute.xlu0 %1391
    %1395 = vst.msk [vmem:[#allocation11 + $0x2] sm:$0x1] %vm610, %v1390
    %1396 = vst.msk [vmem:[#allocation11 + $0xa] sm:$0x1] %vm610, %v1392
    %v1397 = vrot.slane %v1129, 2
    %v1398 = vrot.slane %v1130, 1
    %v1399 = vsel %vm336, %v1398, %v1397
    %1400 = vrot.lane.b32.xlu0 %v1399, 32
    %v1401 = vpop.permute.xlu0 %1400
    %v1402 = vsel %vm213, %v1401, 0
    %1404 = vmatprep.subr.mxu0 0.0
    %1405 = vmatpush1.msra.mxu0 %v105
    %1406 = vmatprep.subr.mxu0 0.0
    %1407 = vmatpush1.msra.mxu0 %v106
    %1408 = vmatprep.subr.mxu0 0.0
    %1409 = vmatpush1.msra.mxu0 %v107
    %1410 = vmatprep.subr.mxu0 0.0
    %1411 = vmatpush1.msra.mxu0 %v108
    %1412 = vmatprep.subr.mxu0 0.0
    %1413 = vmatpush1.msra.mxu0 0.0
    %1414 = vmatprep.subr.mxu0 0.0
    %1415 = vmatpush1.msra.mxu0 0.0
    %1416 = vmatprep.subr.mxu0 0.0
    %1417 = vmatpush1.msra.mxu0 0.0
    %1418 = vmatprep.subr.mxu0 0.0
    %1419 = vmatpush1.msra.mxu0 0.0
    %1420 = vmatprep.subr.mxu0 0.0
    %1421 = vmatpush1.msra.mxu0 0.0
    %1422 = vmatprep.subr.mxu0 0.0
    %1423 = vmatpush1.msra.mxu0 0.0
    %1424 = vmatprep.subr.mxu0 0.0
    %1425 = vmatpush1.msra.mxu0 0.0
    %1426 = vmatprep.subr.mxu0 0.0
    %1427 = vmatpush1.msra.mxu0 0.0
    %1428 = vmatprep.subr.mxu0 0.0
    %1429 = vmatpush1.msra.mxu0 0.0
    %1430 = vmatprep.subr.mxu0 0.0
    %1431 = vmatpush1.msra.mxu0 0.0
    %1432 = vmatprep.subr.mxu0 0.0
    %1433 = vmatpush1.msra.mxu0 0.0
    %1434 = vmatprep.subr.mxu0 0.0
    %1435 = vmatpush1.msra.mxu0 0.0
    %1436 = vmatprep.subr.mxu0 0.0
    %1437 = vmatpush1.msra.mxu0 0.0
    %1438 = vmatprep.subr.mxu0 0.0
    %1439 = vmatpush1.msra.mxu0 0.0
    %1440 = vmatprep.subr.mxu0 0.0
    %1441 = vmatpush1.msra.mxu0 0.0
    %1442 = vmatprep.subr.mxu0 0.0
    %1443 = vmatpush1.msra.mxu0 0.0
    %1444 = vmatprep.subr.mxu0 0.0
    %1445 = vmatpush1.msra.mxu0 0.0
    %1446 = vmatprep.subr.mxu0 0.0
    %1447 = vmatpush1.msra.mxu0 0.0
    %1448 = vmatprep.subr.mxu0 0.0
    %1449 = vmatpush1.msra.mxu0 0.0
    %1450 = vmatprep.subr.mxu0 0.0
    %1451 = vmatpush1.msra.mxu0 0.0
    %1452 = vmatprep.subr.mxu0 0.0
    %1453 = vmatpush1.msra.mxu0 0.0
    %1454 = vmatprep.subr.mxu0 0.0
    %1455 = vmatpush1.msra.mxu0 0.0
    %1456 = vmatprep.subr.mxu0 0.0
    %1457 = vmatpush1.msra.mxu0 0.0
    %1458 = vmatprep.subr.mxu0 0.0
    %1459 = vmatpush1.msra.mxu0 0.0
    %1460 = vmatprep.subr.mxu0 0.0
    %1461 = vmatpush1.msra.mxu0 0.0
    %1462 = vmatprep.subr.mxu0 0.0
    %1463 = vmatpush1.msra.mxu0 0.0
    %1464 = vmatprep.subr.mxu0 0.0
    %1465 = vmatpush1.msra.mxu0 0.0
    %1466 = vmatprep.subr.mxu0 0.0
    %1467 = vmatpush1.msra.mxu0 0.0
    %1468 = vmatprep.mubr.f32.mxu0 0.0
    %1469 = vmatmul.mubr.f32.gmra.mrb[0].mxu0 %v1402
    %v1470 = vpop.f32.mrb[0].mxu0
    %v1471 = vadd.f32 0.0, %v1470
    %v1472 = vpop.f32.mrb[0].mxu0
    %1473 = vdwg.mxu0
    %v1475 = vrot.slane %v1471, 5
    %v1476 = vrot.slane %v1471, 6
    %v1479 = vadd.f32 %v205, %v1475
    %v1480 = vadd.f32 %v210, %v1476
    %v1481 = vtanh.pop %v1479
    %v1482 = vtanh.pop %v1480
    %v1483 = vmul.f32 %v1481, 0.5
    %v1484 = vmul.f32 %v1482, 0.5
    %v1485 = vadd.f32 %v1483, 0.5
    %v1486 = vadd.f32 %v1484, 0.5
    %v1489 = vrot.slane %v1117, 7
    %v1490 = vrot.slane %v1118, 7
    %v1493 = vmul.f32 %v1485, %v1489
    %v1494 = vmul.f32 %v1486, %v1490
    %1497 = vrot.lane.b32.xlu0 %v1481, 64
    %v1498 = vpop.permute.xlu0 %1497
    %1499 = vrot.lane.b32.xlu0 %v1482, 64
    %v1500 = vpop.permute.xlu0 %1499
    %v1503 = vmul.f32 %v1485, %v1498
    %v1504 = vmul.f32 %v1486, %v1500
    %1507 = vrot.lane.b32.xlu0 %v1503, 32
    %v1508 = vpop.permute.xlu0 %1507
    %1509 = vrot.lane.b32.xlu0 %v1504, 32
    %v1510 = vpop.permute.xlu0 %1509
    %v1513 = vadd.f32 %v1493, %v1508
    %v1514 = vadd.f32 %v1494, %v1510
    %v1515 = vtanh.pop %v1513
    %v1516 = vtanh.pop %v1514
    %1519 = vrot.lane.b32.xlu0 %v1515, 64
    %v1520 = vpop.permute.xlu0 %1519
    %1521 = vrot.lane.b32.xlu0 %v1516, 64
    %v1522 = vpop.permute.xlu0 %1521
    %v1525 = vmul.f32 %v1485, %v1520
    %v1526 = vmul.f32 %v1486, %v1522
    %v1529 = vrot.slane %v1526, 7
    %vm1530 = vcmask 1044484
    %v1531 = vsel %vm1530, %v1529, %v1525
    %1532 = vrot.lane.b32.xlu0 %v1531, 32
    %v1533 = vpop.permute.xlu0 %1532
    %vm1535 = vcmask 258051
    %v1536 = vsel %vm1535, %v1533, 0.0
    %1537 = vadd.xlane.f32.xlu0 %v1536
    %v1538 = vpop.xlane.xlu0 %1537
    %v1539 = vmul.f32 %v1538, 0.03125
    %v1540 = vmul.f32 %v1525, %v1525
    %v1541 = vmul.f32 %v1526, %v1526
    %v1544 = vrot.slane %v1541, 7
    %v1545 = vsel %vm1530, %v1544, %v1540
    %1546 = vrot.lane.b32.xlu0 %v1545, 32
    %v1547 = vpop.permute.xlu0 %1546
    %v1549 = vsel %vm1535, %v1547, 0.0
    %1550 = vadd.xlane.f32.xlu0 %v1549
    %v1551 = vpop.xlane.xlu0 %1550
    %v1552 = vmul.f32 %v1551, 0.03125
    %v1553 = vmul.f32 %v1539, %v1539
    %v1554 = vsub.f32 %v1552, %v1553
    %v1555 = vadd.f32 %v1554, 1e-06
    %v1556 = vrsqrt.pop %v1555
    %v1557 = vmul.f32 %v367, %v1556
    %v1559 = vrot.slane %v1557, 1
    %1560 = vrot.lane.b32.xlu0 %v1557, 96
    %v1561 = vpop.permute.xlu0 %1560
    %1562 = vrot.lane.b32.xlu0 %v1559, 96
    %v1563 = vpop.permute.xlu0 %1562
    %v1566 = vmul.f32 %v1525, %v1561
    %v1567 = vmul.f32 %v1526, %v1563
    %v1568 = vmul.f32 %v1539, %v1557
    %v1569 = vsub.f32 %v385, %v1568
    %v1571 = vrot.slane %v1569, 1
    %1572 = vrot.lane.b32.xlu0 %v1569, 96
    %v1573 = vpop.permute.xlu0 %1572
    %1574 = vrot.lane.b32.xlu0 %v1571, 96
    %v1575 = vpop.permute.xlu0 %1574
    %v1578 = vadd.f32 %v1566, %v1573
    %v1579 = vadd.f32 %v1567, %v1575
    %1580 = vrot.lane.b32.xlu0 %v1357, 32
    %v1581 = vpop.permute.xlu0 %1580
    %v1582 = vsel %vm213, %v1581, 0
    %1584 = vmatprep.subr.mxu0 0.0
    %1585 = vmatpush1.msra.mxu0 %v113
    %1586 = vmatprep.subr.mxu0 0.0
    %1587 = vmatpush1.msra.mxu0 %v114
    %1588 = vmatprep.subr.mxu0 0.0
    %1589 = vmatpush1.msra.mxu0 %v115
    %1590 = vmatprep.subr.mxu0 0.0
    %1591 = vmatpush1.msra.mxu0 %v116
    %1592 = vmatprep.subr.mxu0 0.0
    %1593 = vmatpush1.msra.mxu0 0.0
    %1594 = vmatprep.subr.mxu0 0.0
    %1595 = vmatpush1.msra.mxu0 0.0
    %1596 = vmatprep.subr.mxu0 0.0
    %1597 = vmatpush1.msra.mxu0 0.0
    %1598 = vmatprep.subr.mxu0 0.0
    %1599 = vmatpush1.msra.mxu0 0.0
    %1600 = vmatprep.subr.mxu0 0.0
    %1601 = vmatpush1.msra.mxu0 0.0
    %1602 = vmatprep.subr.mxu0 0.0
    %1603 = vmatpush1.msra.mxu0 0.0
    %1604 = vmatprep.subr.mxu0 0.0
    %1605 = vmatpush1.msra.mxu0 0.0
    %1606 = vmatprep.subr.mxu0 0.0
    %1607 = vmatpush1.msra.mxu0 0.0
    %1608 = vmatprep.subr.mxu0 0.0
    %1609 = vmatpush1.msra.mxu0 0.0
    %1610 = vmatprep.subr.mxu0 0.0
    %1611 = vmatpush1.msra.mxu0 0.0
    %1612 = vmatprep.subr.mxu0 0.0
    %1613 = vmatpush1.msra.mxu0 0.0
    %1614 = vmatprep.subr.mxu0 0.0
    %1615 = vmatpush1.msra.mxu0 0.0
    %1616 = vmatprep.subr.mxu0 0.0
    %1617 = vmatpush1.msra.mxu0 0.0
    %1618 = vmatprep.subr.mxu0 0.0
    %1619 = vmatpush1.msra.mxu0 0.0
    %1620 = vmatprep.subr.mxu0 0.0
    %1621 = vmatpush1.msra.mxu0 0.0
    %1622 = vmatprep.subr.mxu0 0.0
    %1623 = vmatpush1.msra.mxu0 0.0
    %1624 = vmatprep.subr.mxu0 0.0
    %1625 = vmatpush1.msra.mxu0 0.0
    %1626 = vmatprep.subr.mxu0 0.0
    %1627 = vmatpush1.msra.mxu0 0.0
    %1628 = vmatprep.subr.mxu0 0.0
    %1629 = vmatpush1.msra.mxu0 0.0
    %1630 = vmatprep.subr.mxu0 0.0
    %1631 = vmatpush1.msra.mxu0 0.0
    %1632 = vmatprep.subr.mxu0 0.0
    %1633 = vmatpush1.msra.mxu0 0.0
    %1634 = vmatprep.subr.mxu0 0.0
    %1635 = vmatpush1.msra.mxu0 0.0
    %1636 = vmatprep.subr.mxu0 0.0
    %1637 = vmatpush1.msra.mxu0 0.0
    %1638 = vmatprep.subr.mxu0 0.0
    %1639 = vmatpush1.msra.mxu0 0.0
    %1640 = vmatprep.subr.mxu0 0.0
    %1641 = vmatpush1.msra.mxu0 0.0
    %1642 = vmatprep.subr.mxu0 0.0
    %1643 = vmatpush1.msra.mxu0 0.0
    %1644 = vmatprep.subr.mxu0 0.0
    %1645 = vmatpush1.msra.mxu0 0.0
    %1646 = vmatprep.subr.mxu0 0.0
    %1647 = vmatpush1.msra.mxu0 0.0
    %1648 = vmatprep.mubr.f32.mxu0 0.0
    %1649 = vmatmul.mubr.f32.gmra.mrb[0].mxu0 %v1582
    %v1650 = vpop.f32.mrb[0].mxu0
    %v1651 = vadd.f32 0.0, %v1650
    %v1652 = vpop.f32.mrb[0].mxu0
    %1653 = vdwg.mxu0
    %v1656 = vrot.slane %v1578, 3
    %v1657 = vrot.slane %v1579, 2
    %v1658 = vsel %vm336, %v1657, %v1656
    %1659 = vrot.lane.b32.xlu0 %v1658, 32
    %v1660 = vpop.permute.xlu0 %1659
    %v1661 = vsel %vm213, %v1660, 0
    %1663 = vmatprep.subr.mxu0 0.0
    %1664 = vmatpush1.msra.mxu0 %v109
    %1665 = vmatprep.subr.mxu0 0.0
    %1666 = vmatpush1.msra.mxu0 %v110
    %1667 = vmatprep.subr.mxu0 0.0
    %1668 = vmatpush1.msra.mxu0 %v111
    %1669 = vmatprep.subr.mxu0 0.0
    %1670 = vmatpush1.msra.mxu0 %v112
    %1671 = vmatprep.subr.mxu0 0.0
    %1672 = vmatpush1.msra.mxu0 0.0
    %1673 = vmatprep.subr.mxu0 0.0
    %1674 = vmatpush1.msra.mxu0 0.0
    %1675 = vmatprep.subr.mxu0 0.0
    %1676 = vmatpush1.msra.mxu0 0.0
    %1677 = vmatprep.subr.mxu0 0.0
    %1678 = vmatpush1.msra.mxu0 0.0
    %1679 = vmatprep.subr.mxu0 0.0
    %1680 = vmatpush1.msra.mxu0 0.0
    %1681 = vmatprep.subr.mxu0 0.0
    %1682 = vmatpush1.msra.mxu0 0.0
    %1683 = vmatprep.subr.mxu0 0.0
    %1684 = vmatpush1.msra.mxu0 0.0
    %1685 = vmatprep.subr.mxu0 0.0
    %1686 = vmatpush1.msra.mxu0 0.0
    %1687 = vmatprep.subr.mxu0 0.0
    %1688 = vmatpush1.msra.mxu0 0.0
    %1689 = vmatprep.subr.mxu0 0.0
    %1690 = vmatpush1.msra.mxu0 0.0
    %1691 = vmatprep.subr.mxu0 0.0
    %1692 = vmatpush1.msra.mxu0 0.0
    %1693 = vmatprep.subr.mxu0 0.0
    %1694 = vmatpush1.msra.mxu0 0.0
    %1695 = vmatprep.subr.mxu0 0.0
    %1696 = vmatpush1.msra.mxu0 0.0
    %1697 = vmatprep.subr.mxu0 0.0
    %1698 = vmatpush1.msra.mxu0 0.0
    %1699 = vmatprep.subr.mxu0 0.0
    %1700 = vmatpush1.msra.mxu0 0.0
    %1701 = vmatprep.subr.mxu0 0.0
    %1702 = vmatpush1.msra.mxu0 0.0
    %1703 = vmatprep.subr.mxu0 0.0
    %1704 = vmatpush1.msra.mxu0 0.0
    %1705 = vmatprep.subr.mxu0 0.0
    %1706 = vmatpush1.msra.mxu0 0.0
    %1707 = vmatprep.subr.mxu0 0.0
    %1708 = vmatpush1.msra.mxu0 0.0
    %1709 = vmatprep.subr.mxu0 0.0
    %1710 = vmatpush1.msra.mxu0 0.0
    %1711 = vmatprep.subr.mxu0 0.0
    %1712 = vmatpush1.msra.mxu0 0.0
    %1713 = vmatprep.subr.mxu0 0.0
    %1714 = vmatpush1.msra.mxu0 0.0
    %1715 = vmatprep.subr.mxu0 0.0
    %1716 = vmatpush1.msra.mxu0 0.0
    %1717 = vmatprep.subr.mxu0 0.0
    %1718 = vmatpush1.msra.mxu0 0.0
    %1719 = vmatprep.subr.mxu0 0.0
    %1720 = vmatpush1.msra.mxu0 0.0
    %1721 = vmatprep.subr.mxu0 0.0
    %1722 = vmatpush1.msra.mxu0 0.0
    %1723 = vmatprep.subr.mxu0 0.0
    %1724 = vmatpush1.msra.mxu0 0.0
    %1725 = vmatprep.subr.mxu0 0.0
    %1726 = vmatpush1.msra.mxu0 0.0
    %1727 = vmatprep.mubr.f32.mxu0 0.0
    %1728 = vmatmul.mubr.f32.gmra.mrb[0].mxu0 %v1661
    %v1729 = vpop.f32.mrb[0].mxu0
    %v1730 = vadd.f32 %v1651, %v1729
    %v1731 = vpop.f32.mrb[0].mxu0
    %1732 = vdwg.mxu0
    %v1733 = vadd.f32 %v1730, %v550
    %v1734 = vtanh.pop %v1733
    %v1735 = vmul.f32 %v1734, 0.5
    %v1736 = vadd.f32 %v1735, 0.5
    %v1737 = vmul.f32 %v1736, %v1351
    %1739 = vrot.lane.b32.xlu0 %v1734, 64
    %v1740 = vpop.permute.xlu0 %1739
    %v1742 = vmul.f32 %v1736, %v1740
    %1744 = vrot.lane.b32.xlu0 %v1742, 32
    %v1745 = vpop.permute.xlu0 %1744
    %v1747 = vadd.f32 %v1737, %v1745
    %v1748 = vtanh.pop %v1747
    %1750 = vrot.lane.b32.xlu0 %v1748, 64
    %v1751 = vpop.permute.xlu0 %1750
    %v1753 = vmul.f32 %v1736, %v1751
    %v1756 = vunpack.c.l.s4 1966171168
    %v1757 = vunpack.c.0.s8 %v1756
    %v1758 = vlaneseq
    %v1759 = vshrl.u32 %v1758, 7
    %v1760 = vsub.s32 %v1757, %v1759
    %v1761 = vrot.slane %v1753, %v1760
    %v1762 = vcombine.high %v1761, %v1761
    %v1764 = vunpack.c.l.s4 1966171168
    %v1765 = vunpack.c.0.s8 %v1764
    %v1766 = vlaneseq
    %v1767 = vshrl.u32 %v1766, 7
    %v1768 = vsub.s32 %v1765, %v1767
    %v1769 = vrot.slane %v1761, %v1768
    %v1771 = vunpack.c.l.s4 1966171168
    %v1772 = vunpack.c.0.s8 %v1771
    %v1773 = vlaneseq
    %v1774 = vshrl.u32 %v1773, 7
    %v1775 = vsub.s32 %v1772, %v1774
    %v1776 = vrot.slane %v1762, %v1775
    %v1777 = vlaneseq
    %v1778 = vshrl.u32 %v1777, 7
    %v1779 = vsub.s32 0, %v1778
    %v1780 = vrot.slane %v1769, %v1779
    %v1781 = vlaneseq
    %v1782 = vshrl.u32 %v1781, 7
    %v1783 = vsub.s32 0, %v1782
    %v1784 = vrot.slane %v1776, %v1783
    %1785 = vrot.lane.b32.xlu0 %v1780, 32
    %v1786 = vpop.permute.xlu0 %1785
    %1787 = vrot.lane.b32.xlu0 %v1784, 32
    %v1788 = vpop.permute.xlu0 %1787
    %1791 = vst.msk [vmem:[#allocation11 + $0x3] sm:$0x1] %vm610, %v1786
    %1792 = vst.msk [vmem:[#allocation11 + $0xb] sm:$0x1] %vm610, %v1788
    %v1793 = vrot.slane %v1525, 3
    %v1794 = vrot.slane %v1526, 2
    %v1795 = vsel %vm336, %v1794, %v1793
    %1796 = vrot.lane.b32.xlu0 %v1795, 32
    %v1797 = vpop.permute.xlu0 %1796
    %v1798 = vsel %vm213, %v1797, 0
    %1800 = vmatprep.subr.mxu0 0.0
    %1801 = vmatpush1.msra.mxu0 %v105
    %1802 = vmatprep.subr.mxu0 0.0
    %1803 = vmatpush1.msra.mxu0 %v106
    %1804 = vmatprep.subr.mxu0 0.0
    %1805 = vmatpush1.msra.mxu0 %v107
    %1806 = vmatprep.subr.mxu0 0.0
    %1807 = vmatpush1.msra.mxu0 %v108
    %1808 = vmatprep.subr.mxu0 0.0
    %1809 = vmatpush1.msra.mxu0 0.0
    %1810 = vmatprep.subr.mxu0 0.0
    %1811 = vmatpush1.msra.mxu0 0.0
    %1812 = vmatprep.subr.mxu0 0.0
    %1813 = vmatpush1.msra.mxu0 0.0
    %1814 = vmatprep.subr.mxu0 0.0
    %1815 = vmatpush1.msra.mxu0 0.0
    %1816 = vmatprep.subr.mxu0 0.0
    %1817 = vmatpush1.msra.mxu0 0.0
    %1818 = vmatprep.subr.mxu0 0.0
    %1819 = vmatpush1.msra.mxu0 0.0
    %1820 = vmatprep.subr.mxu0 0.0
    %1821 = vmatpush1.msra.mxu0 0.0
    %1822 = vmatprep.subr.mxu0 0.0
    %1823 = vmatpush1.msra.mxu0 0.0
    %1824 = vmatprep.subr.mxu0 0.0
    %1825 = vmatpush1.msra.mxu0 0.0
    %1826 = vmatprep.subr.mxu0 0.0
    %1827 = vmatpush1.msra.mxu0 0.0
    %1828 = vmatprep.subr.mxu0 0.0
    %1829 = vmatpush1.msra.mxu0 0.0
    %1830 = vmatprep.subr.mxu0 0.0
    %1831 = vmatpush1.msra.mxu0 0.0
    %1832 = vmatprep.subr.mxu0 0.0
    %1833 = vmatpush1.msra.mxu0 0.0
    %1834 = vmatprep.subr.mxu0 0.0
    %1835 = vmatpush1.msra.mxu0 0.0
    %1836 = vmatprep.subr.mxu0 0.0
    %1837 = vmatpush1.msra.mxu0 0.0
    %1838 = vmatprep.subr.mxu0 0.0
    %1839 = vmatpush1.msra.mxu0 0.0
    %1840 = vmatprep.subr.mxu0 0.0
    %1841 = vmatpush1.msra.mxu0 0.0
    %1842 = vmatprep.subr.mxu0 0.0
    %1843 = vmatpush1.msra.mxu0 0.0
    %1844 = vmatprep.subr.mxu0 0.0
    %1845 = vmatpush1.msra.mxu0 0.0
    %1846 = vmatprep.subr.mxu0 0.0
    %1847 = vmatpush1.msra.mxu0 0.0
    %1848 = vmatprep.subr.mxu0 0.0
    %1849 = vmatpush1.msra.mxu0 0.0
    %1850 = vmatprep.subr.mxu0 0.0
    %1851 = vmatpush1.msra.mxu0 0.0
    %1852 = vmatprep.subr.mxu0 0.0
    %1853 = vmatpush1.msra.mxu0 0.0
    %1854 = vmatprep.subr.mxu0 0.0
    %1855 = vmatpush1.msra.mxu0 0.0
    %1856 = vmatprep.subr.mxu0 0.0
    %1857 = vmatpush1.msra.mxu0 0.0
    %1858 = vmatprep.subr.mxu0 0.0
    %1859 = vmatpush1.msra.mxu0 0.0
    %1860 = vmatprep.subr.mxu0 0.0
    %1861 = vmatpush1.msra.mxu0 0.0
    %1862 = vmatprep.subr.mxu0 0.0
    %1863 = vmatpush1.msra.mxu0 0.0
    %1864 = vmatprep.mubr.f32.mxu0 0.0
    %1865 = vmatmul.mubr.f32.gmra.mrb[0].mxu0 %v1798
    %v1866 = vpop.f32.mrb[0].mxu0
    %v1867 = vadd.f32 0.0, %v1866
    %v1868 = vpop.f32.mrb[0].mxu0
    %1869 = vdwg.mxu0
    %v1871 = vrot.slane %v1867, 4
    %v1872 = vrot.slane %v1867, 5
    %v1875 = vadd.f32 %v205, %v1871
    %v1876 = vadd.f32 %v210, %v1872
    %v1877 = vtanh.pop %v1875
    %v1878 = vtanh.pop %v1876
    %v1879 = vmul.f32 %v1877, 0.5
    %v1880 = vmul.f32 %v1878, 0.5
    %v1881 = vadd.f32 %v1879, 0.5
    %v1882 = vadd.f32 %v1880, 0.5
    %v1885 = vrot.slane %v1513, 7
    %v1886 = vrot.slane %v1514, 7
    %v1889 = vmul.f32 %v1881, %v1885
    %v1890 = vmul.f32 %v1882, %v1886
    %1893 = vrot.lane.b32.xlu0 %v1877, 64
    %v1894 = vpop.permute.xlu0 %1893
    %1895 = vrot.lane.b32.xlu0 %v1878, 64
    %v1896 = vpop.permute.xlu0 %1895
    %v1899 = vmul.f32 %v1881, %v1894
    %v1900 = vmul.f32 %v1882, %v1896
    %1903 = vrot.lane.b32.xlu0 %v1899, 32
    %v1904 = vpop.permute.xlu0 %1903
    %1905 = vrot.lane.b32.xlu0 %v1900, 32
    %v1906 = vpop.permute.xlu0 %1905
    %v1909 = vadd.f32 %v1889, %v1904
    %v1910 = vadd.f32 %v1890, %v1906
    %v1911 = vtanh.pop %v1909
    %v1912 = vtanh.pop %v1910
    %1915 = vrot.lane.b32.xlu0 %v1911, 64
    %v1916 = vpop.permute.xlu0 %1915
    %1917 = vrot.lane.b32.xlu0 %v1912, 64
    %v1918 = vpop.permute.xlu0 %1917
    %v1921 = vmul.f32 %v1881, %v1916
    %v1922 = vmul.f32 %v1882, %v1918
    %v1925 = vrot.slane %v1922, 7
    %vm1926 = vcmask 1045509
    %v1927 = vsel %vm1926, %v1925, %v1921
    %1928 = vrot.lane.b32.xlu0 %v1927, 32
    %v1929 = vpop.permute.xlu0 %1928
    %vm1931 = vcmask 259076
    %v1932 = vsel %vm1931, %v1929, 0.0
    %1933 = vadd.xlane.f32.xlu0 %v1932
    %v1934 = vpop.xlane.xlu0 %1933
    %v1935 = vmul.f32 %v1934, 0.03125
    %v1936 = vmul.f32 %v1921, %v1921
    %v1937 = vmul.f32 %v1922, %v1922
    %v1940 = vrot.slane %v1937, 7
    %v1941 = vsel %vm1926, %v1940, %v1936
    %1942 = vrot.lane.b32.xlu0 %v1941, 32
    %v1943 = vpop.permute.xlu0 %1942
    %v1945 = vsel %vm1931, %v1943, 0.0
    %1946 = vadd.xlane.f32.xlu0 %v1945
    %v1947 = vpop.xlane.xlu0 %1946
    %v1948 = vmul.f32 %v1947, 0.03125
    %v1949 = vmul.f32 %v1935, %v1935
    %v1950 = vsub.f32 %v1948, %v1949
    %v1951 = vadd.f32 %v1950, 1e-06
    %v1952 = vrsqrt.pop %v1951
    %v1953 = vmul.f32 %v367, %v1952
    %v1955 = vrot.slane %v1953, 1
    %1956 = vrot.lane.b32.xlu0 %v1953, 96
    %v1957 = vpop.permute.xlu0 %1956
    %1958 = vrot.lane.b32.xlu0 %v1955, 96
    %v1959 = vpop.permute.xlu0 %1958
    %v1962 = vmul.f32 %v1921, %v1957
    %v1963 = vmul.f32 %v1922, %v1959
    %v1964 = vmul.f32 %v1935, %v1953
    %v1965 = vsub.f32 %v385, %v1964
    %v1967 = vrot.slane %v1965, 1
    %1968 = vrot.lane.b32.xlu0 %v1965, 96
    %v1969 = vpop.permute.xlu0 %1968
    %1970 = vrot.lane.b32.xlu0 %v1967, 96
    %v1971 = vpop.permute.xlu0 %1970
    %v1974 = vadd.f32 %v1962, %v1969
    %v1975 = vadd.f32 %v1963, %v1971
    %1976 = vrot.lane.b32.xlu0 %v1753, 32
    %v1977 = vpop.permute.xlu0 %1976
    %v1978 = vsel %vm213, %v1977, 0
    %1980 = vmatprep.subr.mxu0 0.0
    %1981 = vmatpush1.msra.mxu0 %v113
    %1982 = vmatprep.subr.mxu0 0.0
    %1983 = vmatpush1.msra.mxu0 %v114
    %1984 = vmatprep.subr.mxu0 0.0
    %1985 = vmatpush1.msra.mxu0 %v115
    %1986 = vmatprep.subr.mxu0 0.0
    %1987 = vmatpush1.msra.mxu0 %v116
    %1988 = vmatprep.subr.mxu0 0.0
    %1989 = vmatpush1.msra.mxu0 0.0
    %1990 = vmatprep.subr.mxu0 0.0
    %1991 = vmatpush1.msra.mxu0 0.0
    %1992 = vmatprep.subr.mxu0 0.0
    %1993 = vmatpush1.msra.mxu0 0.0
    %1994 = vmatprep.subr.mxu0 0.0
    %1995 = vmatpush1.msra.mxu0 0.0
    %1996 = vmatprep.subr.mxu0 0.0
    %1997 = vmatpush1.msra.mxu0 0.0
    %1998 = vmatprep.subr.mxu0 0.0
    %1999 = vmatpush1.msra.mxu0 0.0
    %2000 = vmatprep.subr.mxu0 0.0
    %2001 = vmatpush1.msra.mxu0 0.0
    %2002 = vmatprep.subr.mxu0 0.0
    %2003 = vmatpush1.msra.mxu0 0.0
    %2004 = vmatprep.subr.mxu0 0.0
    %2005 = vmatpush1.msra.mxu0 0.0
    %2006 = vmatprep.subr.mxu0 0.0
    %2007 = vmatpush1.msra.mxu0 0.0
    %2008 = vmatprep.subr.mxu0 0.0
    %2009 = vmatpush1.msra.mxu0 0.0
    %2010 = vmatprep.subr.mxu0 0.0
    %2011 = vmatpush1.msra.mxu0 0.0
    %2012 = vmatprep.subr.mxu0 0.0
    %2013 = vmatpush1.msra.mxu0 0.0
    %2014 = vmatprep.subr.mxu0 0.0
    %2015 = vmatpush1.msra.mxu0 0.0
    %2016 = vmatprep.subr.mxu0 0.0
    %2017 = vmatpush1.msra.mxu0 0.0
    %2018 = vmatprep.subr.mxu0 0.0
    %2019 = vmatpush1.msra.mxu0 0.0
    %2020 = vmatprep.subr.mxu0 0.0
    %2021 = vmatpush1.msra.mxu0 0.0
    %2022 = vmatprep.subr.mxu0 0.0
    %2023 = vmatpush1.msra.mxu0 0.0
    %2024 = vmatprep.subr.mxu0 0.0
    %2025 = vmatpush1.msra.mxu0 0.0
    %2026 = vmatprep.subr.mxu0 0.0
    %2027 = vmatpush1.msra.mxu0 0.0
    %2028 = vmatprep.subr.mxu0 0.0
    %2029 = vmatpush1.msra.mxu0 0.0
    %2030 = vmatprep.subr.mxu0 0.0
    %2031 = vmatpush1.msra.mxu0 0.0
    %2032 = vmatprep.subr.mxu0 0.0
    %2033 = vmatpush1.msra.mxu0 0.0
    %2034 = vmatprep.subr.mxu0 0.0
    %2035 = vmatpush1.msra.mxu0 0.0
    %2036 = vmatprep.subr.mxu0 0.0
    %2037 = vmatpush1.msra.mxu0 0.0
    %2038 = vmatprep.subr.mxu0 0.0
    %2039 = vmatpush1.msra.mxu0 0.0
    %2040 = vmatprep.subr.mxu0 0.0
    %2041 = vmatpush1.msra.mxu0 0.0
    %2042 = vmatprep.subr.mxu0 0.0
    %2043 = vmatpush1.msra.mxu0 0.0
    %2044 = vmatprep.mubr.f32.mxu0 0.0
    %2045 = vmatmul.mubr.f32.gmra.mrb[0].mxu0 %v1978
    %v2046 = vpop.f32.mrb[0].mxu0
    %v2047 = vadd.f32 0.0, %v2046
    %v2048 = vpop.f32.mrb[0].mxu0
    %2049 = vdwg.mxu0
    %v2052 = vrot.slane %v1974, 4
    %v2053 = vrot.slane %v1975, 3
    %v2054 = vsel %vm336, %v2053, %v2052
    %2055 = vrot.lane.b32.xlu0 %v2054, 32
    %v2056 = vpop.permute.xlu0 %2055
    %v2057 = vsel %vm213, %v2056, 0
    %2059 = vmatprep.subr.mxu0 0.0
    %2060 = vmatpush1.msra.mxu0 %v109
    %2061 = vmatprep.subr.mxu0 0.0
    %2062 = vmatpush1.msra.mxu0 %v110
    %2063 = vmatprep.subr.mxu0 0.0
    %2064 = vmatpush1.msra.mxu0 %v111
    %2065 = vmatprep.subr.mxu0 0.0
    %2066 = vmatpush1.msra.mxu0 %v112
    %2067 = vmatprep.subr.mxu0 0.0
    %2068 = vmatpush1.msra.mxu0 0.0
    %2069 = vmatprep.subr.mxu0 0.0
    %2070 = vmatpush1.msra.mxu0 0.0
    %2071 = vmatprep.subr.mxu0 0.0
    %2072 = vmatpush1.msra.mxu0 0.0
    %2073 = vmatprep.subr.mxu0 0.0
    %2074 = vmatpush1.msra.mxu0 0.0
    %2075 = vmatprep.subr.mxu0 0.0
    %2076 = vmatpush1.msra.mxu0 0.0
    %2077 = vmatprep.subr.mxu0 0.0
    %2078 = vmatpush1.msra.mxu0 0.0
    %2079 = vmatprep.subr.mxu0 0.0
    %2080 = vmatpush1.msra.mxu0 0.0
    %2081 = vmatprep.subr.mxu0 0.0
    %2082 = vmatpush1.msra.mxu0 0.0
    %2083 = vmatprep.subr.mxu0 0.0
    %2084 = vmatpush1.msra.mxu0 0.0
    %2085 = vmatprep.subr.mxu0 0.0
    %2086 = vmatpush1.msra.mxu0 0.0
    %2087 = vmatprep.subr.mxu0 0.0
    %2088 = vmatpush1.msra.mxu0 0.0
    %2089 = vmatprep.subr.mxu0 0.0
    %2090 = vmatpush1.msra.mxu0 0.0
    %2091 = vmatprep.subr.mxu0 0.0
    %2092 = vmatpush1.msra.mxu0 0.0
    %2093 = vmatprep.subr.mxu0 0.0
    %2094 = vmatpush1.msra.mxu0 0.0
    %2095 = vmatprep.subr.mxu0 0.0
    %2096 = vmatpush1.msra.mxu0 0.0
    %2097 = vmatprep.subr.mxu0 0.0
    %2098 = vmatpush1.msra.mxu0 0.0
    %2099 = vmatprep.subr.mxu0 0.0
    %2100 = vmatpush1.msra.mxu0 0.0
    %2101 = vmatprep.subr.mxu0 0.0
    %2102 = vmatpush1.msra.mxu0 0.0
    %2103 = vmatprep.subr.mxu0 0.0
    %2104 = vmatpush1.msra.mxu0 0.0
    %2105 = vmatprep.subr.mxu0 0.0
    %2106 = vmatpush1.msra.mxu0 0.0
    %2107 = vmatprep.subr.mxu0 0.0
    %2108 = vmatpush1.msra.mxu0 0.0
    %2109 = vmatprep.subr.mxu0 0.0
    %2110 = vmatpush1.msra.mxu0 0.0
    %2111 = vmatprep.subr.mxu0 0.0
    %2112 = vmatpush1.msra.mxu0 0.0
    %2113 = vmatprep.subr.mxu0 0.0
    %2114 = vmatpush1.msra.mxu0 0.0
    %2115 = vmatprep.subr.mxu0 0.0
    %2116 = vmatpush1.msra.mxu0 0.0
    %2117 = vmatprep.subr.mxu0 0.0
    %2118 = vmatpush1.msra.mxu0 0.0
    %2119 = vmatprep.subr.mxu0 0.0
    %2120 = vmatpush1.msra.mxu0 0.0
    %2121 = vmatprep.subr.mxu0 0.0
    %2122 = vmatpush1.msra.mxu0 0.0
    %2123 = vmatprep.mubr.f32.mxu0 0.0
    %2124 = vmatmul.mubr.f32.gmra.mrb[0].mxu0 %v2057
    %v2125 = vpop.f32.mrb[0].mxu0
    %v2126 = vadd.f32 %v2047, %v2125
    %v2127 = vpop.f32.mrb[0].mxu0
    %2128 = vdwg.mxu0
    %v2129 = vadd.f32 %v2126, %v550
    %v2130 = vtanh.pop %v2129
    %v2131 = vmul.f32 %v2130, 0.5
    %v2132 = vadd.f32 %v2131, 0.5
    %v2133 = vmul.f32 %v2132, %v1747
    %2135 = vrot.lane.b32.xlu0 %v2130, 64
    %v2136 = vpop.permute.xlu0 %2135
    %v2138 = vmul.f32 %v2132, %v2136
    %2140 = vrot.lane.b32.xlu0 %v2138, 32
    %v2141 = vpop.permute.xlu0 %2140
    %v2143 = vadd.f32 %v2133, %v2141
    %v2144 = vtanh.pop %v2143
    %2146 = vrot.lane.b32.xlu0 %v2144, 64
    %v2147 = vpop.permute.xlu0 %2146
    %v2149 = vmul.f32 %v2132, %v2147
    %v2152 = vunpack.c.l.s4 1966171168
    %v2153 = vunpack.c.0.s8 %v2152
    %v2154 = vlaneseq
    %v2155 = vshrl.u32 %v2154, 7
    %v2156 = vsub.s32 %v2153, %v2155
    %v2157 = vrot.slane %v2149, %v2156
    %v2158 = vcombine.high %v2157, %v2157
    %v2160 = vunpack.c.l.s4 1966171168
    %v2161 = vunpack.c.0.s8 %v2160
    %v2162 = vlaneseq
    %v2163 = vshrl.u32 %v2162, 7
    %v2164 = vsub.s32 %v2161, %v2163
    %v2165 = vrot.slane %v2157, %v2164
    %v2167 = vunpack.c.l.s4 1966171168
    %v2168 = vunpack.c.0.s8 %v2167
    %v2169 = vlaneseq
    %v2170 = vshrl.u32 %v2169, 7
    %v2171 = vsub.s32 %v2168, %v2170
    %v2172 = vrot.slane %v2158, %v2171
    %v2173 = vlaneseq
    %v2174 = vshrl.u32 %v2173, 7
    %v2175 = vsub.s32 0, %v2174
    %v2176 = vrot.slane %v2165, %v2175
    %v2177 = vlaneseq
    %v2178 = vshrl.u32 %v2177, 7
    %v2179 = vsub.s32 0, %v2178
    %v2180 = vrot.slane %v2172, %v2179
    %2181 = vrot.lane.b32.xlu0 %v2176, 32
    %v2182 = vpop.permute.xlu0 %2181
    %2183 = vrot.lane.b32.xlu0 %v2180, 32
    %v2184 = vpop.permute.xlu0 %2183
    %2187 = vst.msk [vmem:[#allocation11 + $0x4] sm:$0x1] %vm610, %v2182
    %2188 = vst.msk [vmem:[#allocation11 + $0xc] sm:$0x1] %vm610, %v2184
    %v2189 = vrot.slane %v1921, 4
    %v2190 = vrot.slane %v1922, 3
    %v2191 = vsel %vm336, %v2190, %v2189
    %2192 = vrot.lane.b32.xlu0 %v2191, 32
    %v2193 = vpop.permute.xlu0 %2192
    %v2194 = vsel %vm213, %v2193, 0
    %2196 = vmatprep.subr.mxu0 0.0
    %2197 = vmatpush1.msra.mxu0 %v105
    %2198 = vmatprep.subr.mxu0 0.0
    %2199 = vmatpush1.msra.mxu0 %v106
    %2200 = vmatprep.subr.mxu0 0.0
    %2201 = vmatpush1.msra.mxu0 %v107
    %2202 = vmatprep.subr.mxu0 0.0
    %2203 = vmatpush1.msra.mxu0 %v108
    %2204 = vmatprep.subr.mxu0 0.0
    %2205 = vmatpush1.msra.mxu0 0.0
    %2206 = vmatprep.subr.mxu0 0.0
    %2207 = vmatpush1.msra.mxu0 0.0
    %2208 = vmatprep.subr.mxu0 0.0
    %2209 = vmatpush1.msra.mxu0 0.0
    %2210 = vmatprep.subr.mxu0 0.0
    %2211 = vmatpush1.msra.mxu0 0.0
    %2212 = vmatprep.subr.mxu0 0.0
    %2213 = vmatpush1.msra.mxu0 0.0
    %2214 = vmatprep.subr.mxu0 0.0
    %2215 = vmatpush1.msra.mxu0 0.0
    %2216 = vmatprep.subr.mxu0 0.0
    %2217 = vmatpush1.msra.mxu0 0.0
    %2218 = vmatprep.subr.mxu0 0.0
    %2219 = vmatpush1.msra.mxu0 0.0
    %2220 = vmatprep.subr.mxu0 0.0
    %2221 = vmatpush1.msra.mxu0 0.0
    %2222 = vmatprep.subr.mxu0 0.0
    %2223 = vmatpush1.msra.mxu0 0.0
    %2224 = vmatprep.subr.mxu0 0.0
    %2225 = vmatpush1.msra.mxu0 0.0
    %2226 = vmatprep.subr.mxu0 0.0
    %2227 = vmatpush1.msra.mxu0 0.0
    %2228 = vmatprep.subr.mxu0 0.0
    %2229 = vmatpush1.msra.mxu0 0.0
    %2230 = vmatprep.subr.mxu0 0.0
    %2231 = vmatpush1.msra.mxu0 0.0
    %2232 = vmatprep.subr.mxu0 0.0
    %2233 = vmatpush1.msra.mxu0 0.0
    %2234 = vmatprep.subr.mxu0 0.0
    %2235 = vmatpush1.msra.mxu0 0.0
    %2236 = vmatprep.subr.mxu0 0.0
    %2237 = vmatpush1.msra.mxu0 0.0
    %2238 = vmatprep.subr.mxu0 0.0
    %2239 = vmatpush1.msra.mxu0 0.0
    %2240 = vmatprep.subr.mxu0 0.0
    %2241 = vmatpush1.msra.mxu0 0.0
    %2242 = vmatprep.subr.mxu0 0.0
    %2243 = vmatpush1.msra.mxu0 0.0
    %2244 = vmatprep.subr.mxu0 0.0
    %2245 = vmatpush1.msra.mxu0 0.0
    %2246 = vmatprep.subr.mxu0 0.0
    %2247 = vmatpush1.msra.mxu0 0.0
    %2248 = vmatprep.subr.mxu0 0.0
    %2249 = vmatpush1.msra.mxu0 0.0
    %2250 = vmatprep.subr.mxu0 0.0
    %2251 = vmatpush1.msra.mxu0 0.0
    %2252 = vmatprep.subr.mxu0 0.0
    %2253 = vmatpush1.msra.mxu0 0.0
    %2254 = vmatprep.subr.mxu0 0.0
    %2255 = vmatpush1.msra.mxu0 0.0
    %2256 = vmatprep.subr.mxu0 0.0
    %2257 = vmatpush1.msra.mxu0 0.0
    %2258 = vmatprep.subr.mxu0 0.0
    %2259 = vmatpush1.msra.mxu0 0.0
    %2260 = vmatprep.mubr.f32.mxu0 0.0
    %2261 = vmatmul.mubr.f32.gmra.mrb[0].mxu0 %v2194
    %v2262 = vpop.f32.mrb[0].mxu0
    %v2263 = vadd.f32 0.0, %v2262
    %v2264 = vpop.f32.mrb[0].mxu0
    %2265 = vdwg.mxu0
    %v2267 = vrot.slane %v2263, 3
    %v2268 = vrot.slane %v2263, 4
    %v2271 = vadd.f32 %v205, %v2267
    %v2272 = vadd.f32 %v210, %v2268
    %v2273 = vtanh.pop %v2271
    %v2274 = vtanh.pop %v2272
    %v2275 = vmul.f32 %v2273, 0.5
    %v2276 = vmul.f32 %v2274, 0.5
    %v2277 = vadd.f32 %v2275, 0.5
    %v2278 = vadd.f32 %v2276, 0.5
    %v2281 = vrot.slane %v1909, 7
    %v2282 = vrot.slane %v1910, 7
    %v2285 = vmul.f32 %v2277, %v2281
    %v2286 = vmul.f32 %v2278, %v2282
    %2289 = vrot.lane.b32.xlu0 %v2273, 64
    %v2290 = vpop.permute.xlu0 %2289
    %2291 = vrot.lane.b32.xlu0 %v2274, 64
    %v2292 = vpop.permute.xlu0 %2291
    %v2295 = vmul.f32 %v2277, %v2290
    %v2296 = vmul.f32 %v2278, %v2292
    %2299 = vrot.lane.b32.xlu0 %v2295, 32
    %v2300 = vpop.permute.xlu0 %2299
    %2301 = vrot.lane.b32.xlu0 %v2296, 32
    %v2302 = vpop.permute.xlu0 %2301
    %v2305 = vadd.f32 %v2285, %v2300
    %v2306 = vadd.f32 %v2286, %v2302
    %v2307 = vtanh.pop %v2305
    %v2308 = vtanh.pop %v2306
    %2311 = vrot.lane.b32.xlu0 %v2307, 64
    %v2312 = vpop.permute.xlu0 %2311
    %2313 = vrot.lane.b32.xlu0 %v2308, 64
    %v2314 = vpop.permute.xlu0 %2313
    %v2317 = vmul.f32 %v2277, %v2312
    %v2318 = vmul.f32 %v2278, %v2314
    %v2321 = vrot.slane %v2318, 7
    %vm2322 = vcmask 1046534
    %v2323 = vsel %vm2322, %v2321, %v2317
    %2324 = vrot.lane.b32.xlu0 %v2323, 32
    %v2325 = vpop.permute.xlu0 %2324
    %vm2327 = vcmask 260101
    %v2328 = vsel %vm2327, %v2325, 0.0
    %2329 = vadd.xlane.f32.xlu0 %v2328
    %v2330 = vpop.xlane.xlu0 %2329
    %v2331 = vmul.f32 %v2330, 0.03125
    %v2332 = vmul.f32 %v2317, %v2317
    %v2333 = vmul.f32 %v2318, %v2318
    %v2336 = vrot.slane %v2333, 7
    %v2337 = vsel %vm2322, %v2336, %v2332
    %2338 = vrot.lane.b32.xlu0 %v2337, 32
    %v2339 = vpop.permute.xlu0 %2338
    %v2341 = vsel %vm2327, %v2339, 0.0
    %2342 = vadd.xlane.f32.xlu0 %v2341
    %v2343 = vpop.xlane.xlu0 %2342
    %v2344 = vmul.f32 %v2343, 0.03125
    %v2345 = vmul.f32 %v2331, %v2331
    %v2346 = vsub.f32 %v2344, %v2345
    %v2347 = vadd.f32 %v2346, 1e-06
    %v2348 = vrsqrt.pop %v2347
    %v2349 = vmul.f32 %v367, %v2348
    %v2351 = vrot.slane %v2349, 1
    %2352 = vrot.lane.b32.xlu0 %v2349, 96
    %v2353 = vpop.permute.xlu0 %2352
    %2354 = vrot.lane.b32.xlu0 %v2351, 96
    %v2355 = vpop.permute.xlu0 %2354
    %v2358 = vmul.f32 %v2317, %v2353
    %v2359 = vmul.f32 %v2318, %v2355
    %v2360 = vmul.f32 %v2331, %v2349
    %v2361 = vsub.f32 %v385, %v2360
    %v2363 = vrot.slane %v2361, 1
    %2364 = vrot.lane.b32.xlu0 %v2361, 96
    %v2365 = vpop.permute.xlu0 %2364
    %2366 = vrot.lane.b32.xlu0 %v2363, 96
    %v2367 = vpop.permute.xlu0 %2366
    %v2370 = vadd.f32 %v2358, %v2365
    %v2371 = vadd.f32 %v2359, %v2367
    %2372 = vrot.lane.b32.xlu0 %v2149, 32
    %v2373 = vpop.permute.xlu0 %2372
    %v2374 = vsel %vm213, %v2373, 0
    %2376 = vmatprep.subr.mxu0 0.0
    %2377 = vmatpush1.msra.mxu0 %v113
    %2378 = vmatprep.subr.mxu0 0.0
    %2379 = vmatpush1.msra.mxu0 %v114
    %2380 = vmatprep.subr.mxu0 0.0
    %2381 = vmatpush1.msra.mxu0 %v115
    %2382 = vmatprep.subr.mxu0 0.0
    %2383 = vmatpush1.msra.mxu0 %v116
    %2384 = vmatprep.subr.mxu0 0.0
    %2385 = vmatpush1.msra.mxu0 0.0
    %2386 = vmatprep.subr.mxu0 0.0
    %2387 = vmatpush1.msra.mxu0 0.0
    %2388 = vmatprep.subr.mxu0 0.0
    %2389 = vmatpush1.msra.mxu0 0.0
    %2390 = vmatprep.subr.mxu0 0.0
    %2391 = vmatpush1.msra.mxu0 0.0
    %2392 = vmatprep.subr.mxu0 0.0
    %2393 = vmatpush1.msra.mxu0 0.0
    %2394 = vmatprep.subr.mxu0 0.0
    %2395 = vmatpush1.msra.mxu0 0.0
    %2396 = vmatprep.subr.mxu0 0.0
    %2397 = vmatpush1.msra.mxu0 0.0
    %2398 = vmatprep.subr.mxu0 0.0
    %2399 = vmatpush1.msra.mxu0 0.0
    %2400 = vmatprep.subr.mxu0 0.0
    %2401 = vmatpush1.msra.mxu0 0.0
    %2402 = vmatprep.subr.mxu0 0.0
    %2403 = vmatpush1.msra.mxu0 0.0
    %2404 = vmatprep.subr.mxu0 0.0
    %2405 = vmatpush1.msra.mxu0 0.0
    %2406 = vmatprep.subr.mxu0 0.0
    %2407 = vmatpush1.msra.mxu0 0.0
    %2408 = vmatprep.subr.mxu0 0.0
    %2409 = vmatpush1.msra.mxu0 0.0
    %2410 = vmatprep.subr.mxu0 0.0
    %2411 = vmatpush1.msra.mxu0 0.0
    %2412 = vmatprep.subr.mxu0 0.0
    %2413 = vmatpush1.msra.mxu0 0.0
    %2414 = vmatprep.subr.mxu0 0.0
    %2415 = vmatpush1.msra.mxu0 0.0
    %2416 = vmatprep.subr.mxu0 0.0
    %2417 = vmatpush1.msra.mxu0 0.0
    %2418 = vmatprep.subr.mxu0 0.0
    %2419 = vmatpush1.msra.mxu0 0.0
    %2420 = vmatprep.subr.mxu0 0.0
    %2421 = vmatpush1.msra.mxu0 0.0
    %2422 = vmatprep.subr.mxu0 0.0
    %2423 = vmatpush1.msra.mxu0 0.0
    %2424 = vmatprep.subr.mxu0 0.0
    %2425 = vmatpush1.msra.mxu0 0.0
    %2426 = vmatprep.subr.mxu0 0.0
    %2427 = vmatpush1.msra.mxu0 0.0
    %2428 = vmatprep.subr.mxu0 0.0
    %2429 = vmatpush1.msra.mxu0 0.0
    %2430 = vmatprep.subr.mxu0 0.0
    %2431 = vmatpush1.msra.mxu0 0.0
    %2432 = vmatprep.subr.mxu0 0.0
    %2433 = vmatpush1.msra.mxu0 0.0
    %2434 = vmatprep.subr.mxu0 0.0
    %2435 = vmatpush1.msra.mxu0 0.0
    %2436 = vmatprep.subr.mxu0 0.0
    %2437 = vmatpush1.msra.mxu0 0.0
    %2438 = vmatprep.subr.mxu0 0.0
    %2439 = vmatpush1.msra.mxu0 0.0
    %2440 = vmatprep.mubr.f32.mxu0 0.0
    %2441 = vmatmul.mubr.f32.gmra.mrb[0].mxu0 %v2374
    %v2442 = vpop.f32.mrb[0].mxu0
    %v2443 = vadd.f32 0.0, %v2442
    %v2444 = vpop.f32.mrb[0].mxu0
    %2445 = vdwg.mxu0
    %v2448 = vrot.slane %v2370, 5
    %v2449 = vrot.slane %v2371, 4
    %v2450 = vsel %vm336, %v2449, %v2448
    %2451 = vrot.lane.b32.xlu0 %v2450, 32
    %v2452 = vpop.permute.xlu0 %2451
    %v2453 = vsel %vm213, %v2452, 0
    %2455 = vmatprep.subr.mxu0 0.0
    %2456 = vmatpush1.msra.mxu0 %v109
    %2457 = vmatprep.subr.mxu0 0.0
    %2458 = vmatpush1.msra.mxu0 %v110
    %2459 = vmatprep.subr.mxu0 0.0
    %2460 = vmatpush1.msra.mxu0 %v111
    %2461 = vmatprep.subr.mxu0 0.0
    %2462 = vmatpush1.msra.mxu0 %v112
    %2463 = vmatprep.subr.mxu0 0.0
    %2464 = vmatpush1.msra.mxu0 0.0
    %2465 = vmatprep.subr.mxu0 0.0
    %2466 = vmatpush1.msra.mxu0 0.0
    %2467 = vmatprep.subr.mxu0 0.0
    %2468 = vmatpush1.msra.mxu0 0.0
    %2469 = vmatprep.subr.mxu0 0.0
    %2470 = vmatpush1.msra.mxu0 0.0
    %2471 = vmatprep.subr.mxu0 0.0
    %2472 = vmatpush1.msra.mxu0 0.0
    %2473 = vmatprep.subr.mxu0 0.0
    %2474 = vmatpush1.msra.mxu0 0.0
    %2475 = vmatprep.subr.mxu0 0.0
    %2476 = vmatpush1.msra.mxu0 0.0
    %2477 = vmatprep.subr.mxu0 0.0
    %2478 = vmatpush1.msra.mxu0 0.0
    %2479 = vmatprep.subr.mxu0 0.0
    %2480 = vmatpush1.msra.mxu0 0.0
    %2481 = vmatprep.subr.mxu0 0.0
    %2482 = vmatpush1.msra.mxu0 0.0
    %2483 = vmatprep.subr.mxu0 0.0
    %2484 = vmatpush1.msra.mxu0 0.0
    %2485 = vmatprep.subr.mxu0 0.0
    %2486 = vmatpush1.msra.mxu0 0.0
    %2487 = vmatprep.subr.mxu0 0.0
    %2488 = vmatpush1.msra.mxu0 0.0
    %2489 = vmatprep.subr.mxu0 0.0
    %2490 = vmatpush1.msra.mxu0 0.0
    %2491 = vmatprep.subr.mxu0 0.0
    %2492 = vmatpush1.msra.mxu0 0.0
    %2493 = vmatprep.subr.mxu0 0.0
    %2494 = vmatpush1.msra.mxu0 0.0
    %2495 = vmatprep.subr.mxu0 0.0
    %2496 = vmatpush1.msra.mxu0 0.0
    %2497 = vmatprep.subr.mxu0 0.0
    %2498 = vmatpush1.msra.mxu0 0.0
    %2499 = vmatprep.subr.mxu0 0.0
    %2500 = vmatpush1.msra.mxu0 0.0
    %2501 = vmatprep.subr.mxu0 0.0
    %2502 = vmatpush1.msra.mxu0 0.0
    %2503 = vmatprep.subr.mxu0 0.0
    %2504 = vmatpush1.msra.mxu0 0.0
    %2505 = vmatprep.subr.mxu0 0.0
    %2506 = vmatpush1.msra.mxu0 0.0
    %2507 = vmatprep.subr.mxu0 0.0
    %2508 = vmatpush1.msra.mxu0 0.0
    %2509 = vmatprep.subr.mxu0 0.0
    %2510 = vmatpush1.msra.mxu0 0.0
    %2511 = vmatprep.subr.mxu0 0.0
    %2512 = vmatpush1.msra.mxu0 0.0
    %2513 = vmatprep.subr.mxu0 0.0
    %2514 = vmatpush1.msra.mxu0 0.0
    %2515 = vmatprep.subr.mxu0 0.0
    %2516 = vmatpush1.msra.mxu0 0.0
    %2517 = vmatprep.subr.mxu0 0.0
    %2518 = vmatpush1.msra.mxu0 0.0
    %2519 = vmatprep.mubr.f32.mxu0 0.0
    %2520 = vmatmul.mubr.f32.gmra.mrb[0].mxu0 %v2453
    %v2521 = vpop.f32.mrb[0].mxu0
    %v2522 = vadd.f32 %v2443, %v2521
    %v2523 = vpop.f32.mrb[0].mxu0
    %2524 = vdwg.mxu0
    %v2525 = vadd.f32 %v2522, %v550
    %v2526 = vtanh.pop %v2525
    %v2527 = vmul.f32 %v2526, 0.5
    %v2528 = vadd.f32 %v2527, 0.5
    %v2529 = vmul.f32 %v2528, %v2143
    %2531 = vrot.lane.b32.xlu0 %v2526, 64
    %v2532 = vpop.permute.xlu0 %2531
    %v2534 = vmul.f32 %v2528, %v2532
    %2536 = vrot.lane.b32.xlu0 %v2534, 32
    %v2537 = vpop.permute.xlu0 %2536
    %v2539 = vadd.f32 %v2529, %v2537
    %v2540 = vtanh.pop %v2539
    %2542 = vrot.lane.b32.xlu0 %v2540, 64
    %v2543 = vpop.permute.xlu0 %2542
    %v2545 = vmul.f32 %v2528, %v2543
    %v2548 = vunpack.c.l.s4 1966171168
    %v2549 = vunpack.c.0.s8 %v2548
    %v2550 = vlaneseq
    %v2551 = vshrl.u32 %v2550, 7
    %v2552 = vsub.s32 %v2549, %v2551
    %v2553 = vrot.slane %v2545, %v2552
    %v2554 = vcombine.high %v2553, %v2553
    %v2556 = vunpack.c.l.s4 1966171168
    %v2557 = vunpack.c.0.s8 %v2556
    %v2558 = vlaneseq
    %v2559 = vshrl.u32 %v2558, 7
    %v2560 = vsub.s32 %v2557, %v2559
    %v2561 = vrot.slane %v2553, %v2560
    %v2563 = vunpack.c.l.s4 1966171168
    %v2564 = vunpack.c.0.s8 %v2563
    %v2565 = vlaneseq
    %v2566 = vshrl.u32 %v2565, 7
    %v2567 = vsub.s32 %v2564, %v2566
    %v2568 = vrot.slane %v2554, %v2567
    %v2569 = vlaneseq
    %v2570 = vshrl.u32 %v2569, 7
    %v2571 = vsub.s32 0, %v2570
    %v2572 = vrot.slane %v2561, %v2571
    %v2573 = vlaneseq
    %v2574 = vshrl.u32 %v2573, 7
    %v2575 = vsub.s32 0, %v2574
    %v2576 = vrot.slane %v2568, %v2575
    %2577 = vrot.lane.b32.xlu0 %v2572, 32
    %v2578 = vpop.permute.xlu0 %2577
    %2579 = vrot.lane.b32.xlu0 %v2576, 32
    %v2580 = vpop.permute.xlu0 %2579
    %2583 = vst.msk [vmem:[#allocation11 + $0x5] sm:$0x1] %vm610, %v2578
    %2584 = vst.msk [vmem:[#allocation11 + $0xd] sm:$0x1] %vm610, %v2580
    %v2585 = vrot.slane %v2317, 5
    %v2586 = vrot.slane %v2318, 4
    %v2587 = vsel %vm336, %v2586, %v2585
    %2588 = vrot.lane.b32.xlu0 %v2587, 32
    %v2589 = vpop.permute.xlu0 %2588
    %v2590 = vsel %vm213, %v2589, 0
    %2592 = vmatprep.subr.mxu0 0.0
    %2593 = vmatpush1.msra.mxu0 %v105
    %2594 = vmatprep.subr.mxu0 0.0
    %2595 = vmatpush1.msra.mxu0 %v106
    %2596 = vmatprep.subr.mxu0 0.0
    %2597 = vmatpush1.msra.mxu0 %v107
    %2598 = vmatprep.subr.mxu0 0.0
    %2599 = vmatpush1.msra.mxu0 %v108
    %2600 = vmatprep.subr.mxu0 0.0
    %2601 = vmatpush1.msra.mxu0 0.0
    %2602 = vmatprep.subr.mxu0 0.0
    %2603 = vmatpush1.msra.mxu0 0.0
    %2604 = vmatprep.subr.mxu0 0.0
    %2605 = vmatpush1.msra.mxu0 0.0
    %2606 = vmatprep.subr.mxu0 0.0
    %2607 = vmatpush1.msra.mxu0 0.0
    %2608 = vmatprep.subr.mxu0 0.0
    %2609 = vmatpush1.msra.mxu0 0.0
    %2610 = vmatprep.subr.mxu0 0.0
    %2611 = vmatpush1.msra.mxu0 0.0
    %2612 = vmatprep.subr.mxu0 0.0
    %2613 = vmatpush1.msra.mxu0 0.0
    %2614 = vmatprep.subr.mxu0 0.0
    %2615 = vmatpush1.msra.mxu0 0.0
    %2616 = vmatprep.subr.mxu0 0.0
    %2617 = vmatpush1.msra.mxu0 0.0
    %2618 = vmatprep.subr.mxu0 0.0
    %2619 = vmatpush1.msra.mxu0 0.0
    %2620 = vmatprep.subr.mxu0 0.0
    %2621 = vmatpush1.msra.mxu0 0.0
    %2622 = vmatprep.subr.mxu0 0.0
    %2623 = vmatpush1.msra.mxu0 0.0
    %2624 = vmatprep.subr.mxu0 0.0
    %2625 = vmatpush1.msra.mxu0 0.0
    %2626 = vmatprep.subr.mxu0 0.0
    %2627 = vmatpush1.msra.mxu0 0.0
    %2628 = vmatprep.subr.mxu0 0.0
    %2629 = vmatpush1.msra.mxu0 0.0
    %2630 = vmatprep.subr.mxu0 0.0
    %2631 = vmatpush1.msra.mxu0 0.0
    %2632 = vmatprep.subr.mxu0 0.0
    %2633 = vmatpush1.msra.mxu0 0.0
    %2634 = vmatprep.subr.mxu0 0.0
    %2635 = vmatpush1.msra.mxu0 0.0
    %2636 = vmatprep.subr.mxu0 0.0
    %2637 = vmatpush1.msra.mxu0 0.0
    %2638 = vmatprep.subr.mxu0 0.0
    %2639 = vmatpush1.msra.mxu0 0.0
    %2640 = vmatprep.subr.mxu0 0.0
    %2641 = vmatpush1.msra.mxu0 0.0
    %2642 = vmatprep.subr.mxu0 0.0
    %2643 = vmatpush1.msra.mxu0 0.0
    %2644 = vmatprep.subr.mxu0 0.0
    %2645 = vmatpush1.msra.mxu0 0.0
    %2646 = vmatprep.subr.mxu0 0.0
    %2647 = vmatpush1.msra.mxu0 0.0
    %2648 = vmatprep.subr.mxu0 0.0
    %2649 = vmatpush1.msra.mxu0 0.0
    %2650 = vmatprep.subr.mxu0 0.0
    %2651 = vmatpush1.msra.mxu0 0.0
    %2652 = vmatprep.subr.mxu0 0.0
    %2653 = vmatpush1.msra.mxu0 0.0
    %2654 = vmatprep.subr.mxu0 0.0
    %2655 = vmatpush1.msra.mxu0 0.0
    %2656 = vmatprep.mubr.f32.mxu0 0.0
    %2657 = vmatmul.mubr.f32.gmra.mrb[0].mxu0 %v2590
    %v2658 = vpop.f32.mrb[0].mxu0
    %v2659 = vadd.f32 0.0, %v2658
    %v2660 = vpop.f32.mrb[0].mxu0
    %2661 = vdwg.mxu0
    %v2663 = vrot.slane %v2659, 2
    %v2664 = vrot.slane %v2659, 3
    %v2667 = vadd.f32 %v205, %v2663
    %v2668 = vadd.f32 %v210, %v2664
    %v2669 = vtanh.pop %v2667
    %v2670 = vtanh.pop %v2668
    %v2671 = vmul.f32 %v2669, 0.5
    %v2672 = vmul.f32 %v2670, 0.5
    %v2673 = vadd.f32 %v2671, 0.5
    %v2674 = vadd.f32 %v2672, 0.5
    %v2677 = vrot.slane %v2305, 7
    %v2678 = vrot.slane %v2306, 7
    %v2681 = vmul.f32 %v2673, %v2677
    %v2682 = vmul.f32 %v2674, %v2678
    %2685 = vrot.lane.b32.xlu0 %v2669, 64
    %v2686 = vpop.permute.xlu0 %2685
    %2687 = vrot.lane.b32.xlu0 %v2670, 64
    %v2688 = vpop.permute.xlu0 %2687
    %v2691 = vmul.f32 %v2673, %v2686
    %v2692 = vmul.f32 %v2674, %v2688
    %2695 = vrot.lane.b32.xlu0 %v2691, 32
    %v2696 = vpop.permute.xlu0 %2695
    %2697 = vrot.lane.b32.xlu0 %v2692, 32
    %v2698 = vpop.permute.xlu0 %2697
    %v2701 = vadd.f32 %v2681, %v2696
    %v2702 = vadd.f32 %v2682, %v2698
    %v2703 = vtanh.pop %v2701
    %v2704 = vtanh.pop %v2702
    %2707 = vrot.lane.b32.xlu0 %v2703, 64
    %v2708 = vpop.permute.xlu0 %2707
    %2709 = vrot.lane.b32.xlu0 %v2704, 64
    %v2710 = vpop.permute.xlu0 %2709
    %v2713 = vmul.f32 %v2673, %v2708
    %v2714 = vmul.f32 %v2674, %v2710
    %v2717 = vrot.slane %v2714, 7
    %vm2718 = vcmask 1047559
    %v2719 = vsel %vm2718, %v2717, %v2713
    %2720 = vrot.lane.b32.xlu0 %v2719, 32
    %v2721 = vpop.permute.xlu0 %2720
    %vm2723 = vcmask 261126
    %v2724 = vsel %vm2723, %v2721, 0.0
    %2725 = vadd.xlane.f32.xlu0 %v2724
    %v2726 = vpop.xlane.xlu0 %2725
    %v2727 = vmul.f32 %v2726, 0.03125
    %v2728 = vmul.f32 %v2713, %v2713
    %v2729 = vmul.f32 %v2714, %v2714
    %v2732 = vrot.slane %v2729, 7
    %v2733 = vsel %vm2718, %v2732, %v2728
    %2734 = vrot.lane.b32.xlu0 %v2733, 32
    %v2735 = vpop.permute.xlu0 %2734
    %v2737 = vsel %vm2723, %v2735, 0.0
    %2738 = vadd.xlane.f32.xlu0 %v2737
    %v2739 = vpop.xlane.xlu0 %2738
    %v2740 = vmul.f32 %v2739, 0.03125
    %v2741 = vmul.f32 %v2727, %v2727
    %v2742 = vsub.f32 %v2740, %v2741
    %v2743 = vadd.f32 %v2742, 1e-06
    %v2744 = vrsqrt.pop %v2743
    %v2745 = vmul.f32 %v367, %v2744
    %v2747 = vrot.slane %v2745, 1
    %2748 = vrot.lane.b32.xlu0 %v2745, 96
    %v2749 = vpop.permute.xlu0 %2748
    %2750 = vrot.lane.b32.xlu0 %v2747, 96
    %v2751 = vpop.permute.xlu0 %2750
    %v2754 = vmul.f32 %v2713, %v2749
    %v2755 = vmul.f32 %v2714, %v2751
    %v2756 = vmul.f32 %v2727, %v2745
    %v2757 = vsub.f32 %v385, %v2756
    %v2759 = vrot.slane %v2757, 1
    %2760 = vrot.lane.b32.xlu0 %v2757, 96
    %v2761 = vpop.permute.xlu0 %2760
    %2762 = vrot.lane.b32.xlu0 %v2759, 96
    %v2763 = vpop.permute.xlu0 %2762
    %v2766 = vadd.f32 %v2754, %v2761
    %v2767 = vadd.f32 %v2755, %v2763
    %2768 = vrot.lane.b32.xlu0 %v2545, 32
    %v2769 = vpop.permute.xlu0 %2768
    %v2770 = vsel %vm213, %v2769, 0
    %2772 = vmatprep.subr.mxu0 0.0
    %2773 = vmatpush1.msra.mxu0 %v113
    %2774 = vmatprep.subr.mxu0 0.0
    %2775 = vmatpush1.msra.mxu0 %v114
    %2776 = vmatprep.subr.mxu0 0.0
    %2777 = vmatpush1.msra.mxu0 %v115
    %2778 = vmatprep.subr.mxu0 0.0
    %2779 = vmatpush1.msra.mxu0 %v116
    %2780 = vmatprep.subr.mxu0 0.0
    %2781 = vmatpush1.msra.mxu0 0.0
    %2782 = vmatprep.subr.mxu0 0.0
    %2783 = vmatpush1.msra.mxu0 0.0
    %2784 = vmatprep.subr.mxu0 0.0
    %2785 = vmatpush1.msra.mxu0 0.0
    %2786 = vmatprep.subr.mxu0 0.0
    %2787 = vmatpush1.msra.mxu0 0.0
    %2788 = vmatprep.subr.mxu0 0.0
    %2789 = vmatpush1.msra.mxu0 0.0
    %2790 = vmatprep.subr.mxu0 0.0
    %2791 = vmatpush1.msra.mxu0 0.0
    %2792 = vmatprep.subr.mxu0 0.0
    %2793 = vmatpush1.msra.mxu0 0.0
    %2794 = vmatprep.subr.mxu0 0.0
    %2795 = vmatpush1.msra.mxu0 0.0
    %2796 = vmatprep.subr.mxu0 0.0
    %2797 = vmatpush1.msra.mxu0 0.0
    %2798 = vmatprep.subr.mxu0 0.0
    %2799 = vmatpush1.msra.mxu0 0.0
    %2800 = vmatprep.subr.mxu0 0.0
    %2801 = vmatpush1.msra.mxu0 0.0
    %2802 = vmatprep.subr.mxu0 0.0
    %2803 = vmatpush1.msra.mxu0 0.0
    %2804 = vmatprep.subr.mxu0 0.0
    %2805 = vmatpush1.msra.mxu0 0.0
    %2806 = vmatprep.subr.mxu0 0.0
    %2807 = vmatpush1.msra.mxu0 0.0
    %2808 = vmatprep.subr.mxu0 0.0
    %2809 = vmatpush1.msra.mxu0 0.0
    %2810 = vmatprep.subr.mxu0 0.0
    %2811 = vmatpush1.msra.mxu0 0.0
    %2812 = vmatprep.subr.mxu0 0.0
    %2813 = vmatpush1.msra.mxu0 0.0
    %2814 = vmatprep.subr.mxu0 0.0
    %2815 = vmatpush1.msra.mxu0 0.0
    %2816 = vmatprep.subr.mxu0 0.0
    %2817 = vmatpush1.msra.mxu0 0.0
    %2818 = vmatprep.subr.mxu0 0.0
    %2819 = vmatpush1.msra.mxu0 0.0
    %2820 = vmatprep.subr.mxu0 0.0
    %2821 = vmatpush1.msra.mxu0 0.0
    %2822 = vmatprep.subr.mxu0 0.0
    %2823 = vmatpush1.msra.mxu0 0.0
    %2824 = vmatprep.subr.mxu0 0.0
    %2825 = vmatpush1.msra.mxu0 0.0
    %2826 = vmatprep.subr.mxu0 0.0
    %2827 = vmatpush1.msra.mxu0 0.0
    %2828 = vmatprep.subr.mxu0 0.0
    %2829 = vmatpush1.msra.mxu0 0.0
    %2830 = vmatprep.subr.mxu0 0.0
    %2831 = vmatpush1.msra.mxu0 0.0
    %2832 = vmatprep.subr.mxu0 0.0
    %2833 = vmatpush1.msra.mxu0 0.0
    %2834 = vmatprep.subr.mxu0 0.0
    %2835 = vmatpush1.msra.mxu0 0.0
    %2836 = vmatprep.mubr.f32.mxu0 0.0
    %2837 = vmatmul.mubr.f32.gmra.mrb[0].mxu0 %v2770
    %v2838 = vpop.f32.mrb[0].mxu0
    %v2839 = vadd.f32 0.0, %v2838
    %v2840 = vpop.f32.mrb[0].mxu0
    %2841 = vdwg.mxu0
    %v2844 = vrot.slane %v2766, 6
    %v2845 = vrot.slane %v2767, 5
    %v2846 = vsel %vm336, %v2845, %v2844
    %2847 = vrot.lane.b32.xlu0 %v2846, 32
    %v2848 = vpop.permute.xlu0 %2847
    %v2849 = vsel %vm213, %v2848, 0
    %2851 = vmatprep.subr.mxu0 0.0
    %2852 = vmatpush1.msra.mxu0 %v109
    %2853 = vmatprep.subr.mxu0 0.0
    %2854 = vmatpush1.msra.mxu0 %v110
    %2855 = vmatprep.subr.mxu0 0.0
    %2856 = vmatpush1.msra.mxu0 %v111
    %2857 = vmatprep.subr.mxu0 0.0
    %2858 = vmatpush1.msra.mxu0 %v112
    %2859 = vmatprep.subr.mxu0 0.0
    %2860 = vmatpush1.msra.mxu0 0.0
    %2861 = vmatprep.subr.mxu0 0.0
    %2862 = vmatpush1.msra.mxu0 0.0
    %2863 = vmatprep.subr.mxu0 0.0
    %2864 = vmatpush1.msra.mxu0 0.0
    %2865 = vmatprep.subr.mxu0 0.0
    %2866 = vmatpush1.msra.mxu0 0.0
    %2867 = vmatprep.subr.mxu0 0.0
    %2868 = vmatpush1.msra.mxu0 0.0
    %2869 = vmatprep.subr.mxu0 0.0
    %2870 = vmatpush1.msra.mxu0 0.0
    %2871 = vmatprep.subr.mxu0 0.0
    %2872 = vmatpush1.msra.mxu0 0.0
    %2873 = vmatprep.subr.mxu0 0.0
    %2874 = vmatpush1.msra.mxu0 0.0
    %2875 = vmatprep.subr.mxu0 0.0
    %2876 = vmatpush1.msra.mxu0 0.0
    %2877 = vmatprep.subr.mxu0 0.0
    %2878 = vmatpush1.msra.mxu0 0.0
    %2879 = vmatprep.subr.mxu0 0.0
    %2880 = vmatpush1.msra.mxu0 0.0
    %2881 = vmatprep.subr.mxu0 0.0
    %2882 = vmatpush1.msra.mxu0 0.0
    %2883 = vmatprep.subr.mxu0 0.0
    %2884 = vmatpush1.msra.mxu0 0.0
    %2885 = vmatprep.subr.mxu0 0.0
    %2886 = vmatpush1.msra.mxu0 0.0
    %2887 = vmatprep.subr.mxu0 0.0
    %2888 = vmatpush1.msra.mxu0 0.0
    %2889 = vmatprep.subr.mxu0 0.0
    %2890 = vmatpush1.msra.mxu0 0.0
    %2891 = vmatprep.subr.mxu0 0.0
    %2892 = vmatpush1.msra.mxu0 0.0
    %2893 = vmatprep.subr.mxu0 0.0
    %2894 = vmatpush1.msra.mxu0 0.0
    %2895 = vmatprep.subr.mxu0 0.0
    %2896 = vmatpush1.msra.mxu0 0.0
    %2897 = vmatprep.subr.mxu0 0.0
    %2898 = vmatpush1.msra.mxu0 0.0
    %2899 = vmatprep.subr.mxu0 0.0
    %2900 = vmatpush1.msra.mxu0 0.0
    %2901 = vmatprep.subr.mxu0 0.0
    %2902 = vmatpush1.msra.mxu0 0.0
    %2903 = vmatprep.subr.mxu0 0.0
    %2904 = vmatpush1.msra.mxu0 0.0
    %2905 = vmatprep.subr.mxu0 0.0
    %2906 = vmatpush1.msra.mxu0 0.0
    %2907 = vmatprep.subr.mxu0 0.0
    %2908 = vmatpush1.msra.mxu0 0.0
    %2909 = vmatprep.subr.mxu0 0.0
    %2910 = vmatpush1.msra.mxu0 0.0
    %2911 = vmatprep.subr.mxu0 0.0
    %2912 = vmatpush1.msra.mxu0 0.0
    %2913 = vmatprep.subr.mxu0 0.0
    %2914 = vmatpush1.msra.mxu0 0.0
    %2915 = vmatprep.mubr.f32.mxu0 0.0
    %2916 = vmatmul.mubr.f32.gmra.mrb[0].mxu0 %v2849
    %v2917 = vpop.f32.mrb[0].mxu0
    %v2918 = vadd.f32 %v2839, %v2917
    %v2919 = vpop.f32.mrb[0].mxu0
    %2920 = vdwg.mxu0
    %v2921 = vadd.f32 %v2918, %v550
    %v2922 = vtanh.pop %v2921
    %v2923 = vmul.f32 %v2922, 0.5
    %v2924 = vadd.f32 %v2923, 0.5
    %v2925 = vmul.f32 %v2924, %v2539
    %2927 = vrot.lane.b32.xlu0 %v2922, 64
    %v2928 = vpop.permute.xlu0 %2927
    %v2930 = vmul.f32 %v2924, %v2928
    %2932 = vrot.lane.b32.xlu0 %v2930, 32
    %v2933 = vpop.permute.xlu0 %2932
    %v2935 = vadd.f32 %v2925, %v2933
    %v2936 = vtanh.pop %v2935
    %2938 = vrot.lane.b32.xlu0 %v2936, 64
    %v2939 = vpop.permute.xlu0 %2938
    %v2941 = vmul.f32 %v2924, %v2939
    %v2944 = vunpack.c.l.s4 1966171168
    %v2945 = vunpack.c.0.s8 %v2944
    %v2946 = vlaneseq
    %v2947 = vshrl.u32 %v2946, 7
    %v2948 = vsub.s32 %v2945, %v2947
    %v2949 = vrot.slane %v2941, %v2948
    %v2950 = vcombine.high %v2949, %v2949
    %v2952 = vunpack.c.l.s4 1966171168
    %v2953 = vunpack.c.0.s8 %v2952
    %v2954 = vlaneseq
    %v2955 = vshrl.u32 %v2954, 7
    %v2956 = vsub.s32 %v2953, %v2955
    %v2957 = vrot.slane %v2949, %v2956
    %v2959 = vunpack.c.l.s4 1966171168
    %v2960 = vunpack.c.0.s8 %v2959
    %v2961 = vlaneseq
    %v2962 = vshrl.u32 %v2961, 7
    %v2963 = vsub.s32 %v2960, %v2962
    %v2964 = vrot.slane %v2950, %v2963
    %v2965 = vlaneseq
    %v2966 = vshrl.u32 %v2965, 7
    %v2967 = vsub.s32 0, %v2966
    %v2968 = vrot.slane %v2957, %v2967
    %v2969 = vlaneseq
    %v2970 = vshrl.u32 %v2969, 7
    %v2971 = vsub.s32 0, %v2970
    %v2972 = vrot.slane %v2964, %v2971
    %2973 = vrot.lane.b32.xlu0 %v2968, 32
    %v2974 = vpop.permute.xlu0 %2973
    %2975 = vrot.lane.b32.xlu0 %v2972, 32
    %v2976 = vpop.permute.xlu0 %2975
    %2979 = vst.msk [vmem:[#allocation11 + $0x6] sm:$0x1] %vm610, %v2974
    %2980 = vst.msk [vmem:[#allocation11 + $0xe] sm:$0x1] %vm610, %v2976
    %v2981 = vrot.slane %v2713, 6
    %v2982 = vrot.slane %v2714, 5
    %v2983 = vsel %vm336, %v2982, %v2981
    %2984 = vrot.lane.b32.xlu0 %v2983, 32
    %v2985 = vpop.permute.xlu0 %2984
    %v2986 = vsel %vm213, %v2985, 0
    %2988 = vmatprep.subr.mxu0 0.0
    %2989 = vmatpush1.msra.mxu0 %v105
    %2990 = vmatprep.subr.mxu0 0.0
    %2991 = vmatpush1.msra.mxu0 %v106
    %2992 = vmatprep.subr.mxu0 0.0
    %2993 = vmatpush1.msra.mxu0 %v107
    %2994 = vmatprep.subr.mxu0 0.0
    %2995 = vmatpush1.msra.mxu0 %v108
    %2996 = vmatprep.subr.mxu0 0.0
    %2997 = vmatpush1.msra.mxu0 0.0
    %2998 = vmatprep.subr.mxu0 0.0
    %2999 = vmatpush1.msra.mxu0 0.0
    %3000 = vmatprep.subr.mxu0 0.0
    %3001 = vmatpush1.msra.mxu0 0.0
    %3002 = vmatprep.subr.mxu0 0.0
    %3003 = vmatpush1.msra.mxu0 0.0
    %3004 = vmatprep.subr.mxu0 0.0
    %3005 = vmatpush1.msra.mxu0 0.0
    %3006 = vmatprep.subr.mxu0 0.0
    %3007 = vmatpush1.msra.mxu0 0.0
    %3008 = vmatprep.subr.mxu0 0.0
    %3009 = vmatpush1.msra.mxu0 0.0
    %3010 = vmatprep.subr.mxu0 0.0
    %3011 = vmatpush1.msra.mxu0 0.0
    %3012 = vmatprep.subr.mxu0 0.0
    %3013 = vmatpush1.msra.mxu0 0.0
    %3014 = vmatprep.subr.mxu0 0.0
    %3015 = vmatpush1.msra.mxu0 0.0
    %3016 = vmatprep.subr.mxu0 0.0
    %3017 = vmatpush1.msra.mxu0 0.0
    %3018 = vmatprep.subr.mxu0 0.0
    %3019 = vmatpush1.msra.mxu0 0.0
    %3020 = vmatprep.subr.mxu0 0.0
    %3021 = vmatpush1.msra.mxu0 0.0
    %3022 = vmatprep.subr.mxu0 0.0
    %3023 = vmatpush1.msra.mxu0 0.0
    %3024 = vmatprep.subr.mxu0 0.0
    %3025 = vmatpush1.msra.mxu0 0.0
    %3026 = vmatprep.subr.mxu0 0.0
    %3027 = vmatpush1.msra.mxu0 0.0
    %3028 = vmatprep.subr.mxu0 0.0
    %3029 = vmatpush1.msra.mxu0 0.0
    %3030 = vmatprep.subr.mxu0 0.0
    %3031 = vmatpush1.msra.mxu0 0.0
    %3032 = vmatprep.subr.mxu0 0.0
    %3033 = vmatpush1.msra.mxu0 0.0
    %3034 = vmatprep.subr.mxu0 0.0
    %3035 = vmatpush1.msra.mxu0 0.0
    %3036 = vmatprep.subr.mxu0 0.0
    %3037 = vmatpush1.msra.mxu0 0.0
    %3038 = vmatprep.subr.mxu0 0.0
    %3039 = vmatpush1.msra.mxu0 0.0
    %3040 = vmatprep.subr.mxu0 0.0
    %3041 = vmatpush1.msra.mxu0 0.0
    %3042 = vmatprep.subr.mxu0 0.0
    %3043 = vmatpush1.msra.mxu0 0.0
    %3044 = vmatprep.subr.mxu0 0.0
    %3045 = vmatpush1.msra.mxu0 0.0
    %3046 = vmatprep.subr.mxu0 0.0
    %3047 = vmatpush1.msra.mxu0 0.0
    %3048 = vmatprep.subr.mxu0 0.0
    %3049 = vmatpush1.msra.mxu0 0.0
    %3050 = vmatprep.subr.mxu0 0.0
    %3051 = vmatpush1.msra.mxu0 0.0
    %3052 = vmatprep.mubr.f32.mxu0 0.0
    %3053 = vmatmul.mubr.f32.gmra.mrb[0].mxu0 %v2986
    %v3054 = vpop.f32.mrb[0].mxu0
    %v3055 = vadd.f32 0.0, %v3054
    %v3056 = vpop.f32.mrb[0].mxu0
    %3057 = vdwg.mxu0
    %v3059 = vrot.slane %v3055, 1
    %v3060 = vrot.slane %v3055, 2
    %v3063 = vadd.f32 %v205, %v3059
    %v3064 = vadd.f32 %v210, %v3060
    %v3065 = vtanh.pop %v3063
    %v3066 = vtanh.pop %v3064
    %v3067 = vmul.f32 %v3065, 0.5
    %v3068 = vmul.f32 %v3066, 0.5
    %v3069 = vadd.f32 %v3067, 0.5
    %v3070 = vadd.f32 %v3068, 0.5
    %v3073 = vrot.slane %v2701, 7
    %v3074 = vrot.slane %v2702, 7
    %v3077 = vmul.f32 %v3069, %v3073
    %v3078 = vmul.f32 %v3070, %v3074
    %3081 = vrot.lane.b32.xlu0 %v3065, 64
    %v3082 = vpop.permute.xlu0 %3081
    %3083 = vrot.lane.b32.xlu0 %v3066, 64
    %v3084 = vpop.permute.xlu0 %3083
    %v3087 = vmul.f32 %v3069, %v3082
    %v3088 = vmul.f32 %v3070, %v3084
    %3091 = vrot.lane.b32.xlu0 %v3087, 32
    %v3092 = vpop.permute.xlu0 %3091
    %3093 = vrot.lane.b32.xlu0 %v3088, 32
    %v3094 = vpop.permute.xlu0 %3093
    %v3097 = vadd.f32 %v3077, %v3092
    %v3098 = vadd.f32 %v3078, %v3094
    %v3099 = vtanh.pop %v3097
    %v3100 = vtanh.pop %v3098
    %3103 = vrot.lane.b32.xlu0 %v3099, 64
    %v3104 = vpop.permute.xlu0 %3103
    %3105 = vrot.lane.b32.xlu0 %v3100, 64
    %v3106 = vpop.permute.xlu0 %3105
    %v3109 = vmul.f32 %v3069, %v3104
    %v3110 = vmul.f32 %v3070, %v3106
    %v3113 = vrot.slane %v3110, 7
    %3114 = vrot.lane.b32.xlu0 %v3109, 32
    %v3115 = vpop.permute.xlu0 %3114
    %3116 = vrot.lane.b32.xlu0 %v3113, 32
    %v3117 = vpop.permute.xlu0 %3116
    %vm3120 = vcmask 261127
    %v3121 = vsel %vm3120, %v3115, 0.0
    %3122 = vadd.xlane.f32.xlu0 %v3121
    %v3123 = vpop.xlane.xlu0 %3122
    %v3124 = vsel %vm610, %v3117, 0.0
    %3125 = vadd.xlane.f32.xlu0 %v3124
    %v3126 = vpop.xlane.xlu0 %3125
    %v3127 = vmul.f32 %v3123, 0.03125
    %v3128 = vmul.f32 %v3126, 0.03125
    %v3129 = vmul.f32 %v3109, %v3109
    %v3130 = vmul.f32 %v3110, %v3110
    %v3133 = vrot.slane %v3130, 7
    %3134 = vrot.lane.b32.xlu0 %v3129, 32
    %v3135 = vpop.permute.xlu0 %3134
    %3136 = vrot.lane.b32.xlu0 %v3133, 32
    %v3137 = vpop.permute.xlu0 %3136
    %v3140 = vsel %vm3120, %v3135, 0.0
    %3141 = vadd.xlane.f32.xlu0 %v3140
    %v3142 = vpop.xlane.xlu0 %3141
    %v3143 = vsel %vm610, %v3137, 0.0
    %3144 = vadd.xlane.f32.xlu0 %v3143
    %v3145 = vpop.xlane.xlu0 %3144
    %v3146 = vmul.f32 %v3142, 0.03125
    %v3147 = vmul.f32 %v3145, 0.03125
    %v3148 = vmul.f32 %v3127, %v3127
    %v3149 = vmul.f32 %v3128, %v3128
    %v3150 = vsub.f32 %v3146, %v3148
    %v3151 = vsub.f32 %v3147, %v3149
    %v3152 = vadd.f32 %v3150, 1e-06
    %v3153 = vadd.f32 %v3151, 1e-06
    %v3154 = vrsqrt.pop %v3152
    %v3155 = vrsqrt.pop %v3153
    %v3156 = vmul.f32 %v367, %v3154
    %v3157 = vmul.f32 %v367, %v3155
    %v3160 = vrot.slane %v3157, 1
    %3161 = vrot.lane.b32.xlu0 %v3156, 96
    %v3162 = vpop.permute.xlu0 %3161
    %3163 = vrot.lane.b32.xlu0 %v3160, 96
    %v3164 = vpop.permute.xlu0 %3163
    %v3167 = vmul.f32 %v3109, %v3162
    %v3168 = vmul.f32 %v3110, %v3164
    %v3169 = vmul.f32 %v3127, %v3156
    %v3170 = vmul.f32 %v3128, %v3157
    %v3171 = vsub.f32 %v385, %v3169
    %v3172 = vsub.f32 %v385, %v3170
    %v3175 = vrot.slane %v3172, 1
    %3176 = vrot.lane.b32.xlu0 %v3171, 96
    %v3177 = vpop.permute.xlu0 %3176
    %3178 = vrot.lane.b32.xlu0 %v3175, 96
    %v3179 = vpop.permute.xlu0 %3178
    %v3182 = vadd.f32 %v3167, %v3177
    %v3183 = vadd.f32 %v3168, %v3179
    %3184 = vrot.lane.b32.xlu0 %v2941, 32
    %v3185 = vpop.permute.xlu0 %3184
    %v3186 = vsel %vm213, %v3185, 0
    %3188 = vmatprep.subr.mxu0 0.0
    %3189 = vmatpush1.msra.mxu0 %v113
    %3190 = vmatprep.subr.mxu0 0.0
    %3191 = vmatpush1.msra.mxu0 %v114
    %3192 = vmatprep.subr.mxu0 0.0
    %3193 = vmatpush1.msra.mxu0 %v115
    %3194 = vmatprep.subr.mxu0 0.0
    %3195 = vmatpush1.msra.mxu0 %v116
    %3196 = vmatprep.subr.mxu0 0.0
    %3197 = vmatpush1.msra.mxu0 0.0
    %3198 = vmatprep.subr.mxu0 0.0
    %3199 = vmatpush1.msra.mxu0 0.0
    %3200 = vmatprep.subr.mxu0 0.0
    %3201 = vmatpush1.msra.mxu0 0.0
    %3202 = vmatprep.subr.mxu0 0.0
    %3203 = vmatpush1.msra.mxu0 0.0
    %3204 = vmatprep.subr.mxu0 0.0
    %3205 = vmatpush1.msra.mxu0 0.0
    %3206 = vmatprep.subr.mxu0 0.0
    %3207 = vmatpush1.msra.mxu0 0.0
    %3208 = vmatprep.subr.mxu0 0.0
    %3209 = vmatpush1.msra.mxu0 0.0
    %3210 = vmatprep.subr.mxu0 0.0
    %3211 = vmatpush1.msra.mxu0 0.0
    %3212 = vmatprep.subr.mxu0 0.0
    %3213 = vmatpush1.msra.mxu0 0.0
    %3214 = vmatprep.subr.mxu0 0.0
    %3215 = vmatpush1.msra.mxu0 0.0
    %3216 = vmatprep.subr.mxu0 0.0
    %3217 = vmatpush1.msra.mxu0 0.0
    %3218 = vmatprep.subr.mxu0 0.0
    %3219 = vmatpush1.msra.mxu0 0.0
    %3220 = vmatprep.subr.mxu0 0.0
    %3221 = vmatpush1.msra.mxu0 0.0
    %3222 = vmatprep.subr.mxu0 0.0
    %3223 = vmatpush1.msra.mxu0 0.0
    %3224 = vmatprep.subr.mxu0 0.0
    %3225 = vmatpush1.msra.mxu0 0.0
    %3226 = vmatprep.subr.mxu0 0.0
    %3227 = vmatpush1.msra.mxu0 0.0
    %3228 = vmatprep.subr.mxu0 0.0
    %3229 = vmatpush1.msra.mxu0 0.0
    %3230 = vmatprep.subr.mxu0 0.0
    %3231 = vmatpush1.msra.mxu0 0.0
    %3232 = vmatprep.subr.mxu0 0.0
    %3233 = vmatpush1.msra.mxu0 0.0
    %3234 = vmatprep.subr.mxu0 0.0
    %3235 = vmatpush1.msra.mxu0 0.0
    %3236 = vmatprep.subr.mxu0 0.0
    %3237 = vmatpush1.msra.mxu0 0.0
    %3238 = vmatprep.subr.mxu0 0.0
    %3239 = vmatpush1.msra.mxu0 0.0
    %3240 = vmatprep.subr.mxu0 0.0
    %3241 = vmatpush1.msra.mxu0 0.0
    %3242 = vmatprep.subr.mxu0 0.0
    %3243 = vmatpush1.msra.mxu0 0.0
    %3244 = vmatprep.subr.mxu0 0.0
    %3245 = vmatpush1.msra.mxu0 0.0
    %3246 = vmatprep.subr.mxu0 0.0
    %3247 = vmatpush1.msra.mxu0 0.0
    %3248 = vmatprep.subr.mxu0 0.0
    %3249 = vmatpush1.msra.mxu0 0.0
    %3250 = vmatprep.subr.mxu0 0.0
    %3251 = vmatpush1.msra.mxu0 0.0
    %3252 = vmatprep.mubr.f32.mxu0 0.0
    %3253 = vmatmul.mubr.f32.gmra.mrb[0].mxu0 %v3186
    %v3254 = vpop.f32.mrb[0].mxu0
    %v3255 = vadd.f32 0.0, %v3254
    %v3256 = vpop.f32.mrb[0].mxu0
    %3257 = vdwg.mxu0
    %v3260 = vrot.slane %v3182, 7
    %v3261 = vrot.slane %v3183, 6
    %v3262 = vsel %vm336, %v3261, %v3260
    %3263 = vrot.lane.b32.xlu0 %v3262, 32
    %v3264 = vpop.permute.xlu0 %3263
    %v3265 = vsel %vm213, %v3264, 0
    %3267 = vmatprep.subr.mxu0 0.0
    %3268 = vmatpush1.msra.mxu0 %v109
    %3269 = vmatprep.subr.mxu0 0.0
    %3270 = vmatpush1.msra.mxu0 %v110
    %3271 = vmatprep.subr.mxu0 0.0
    %3272 = vmatpush1.msra.mxu0 %v111
    %3273 = vmatprep.subr.mxu0 0.0
    %3274 = vmatpush1.msra.mxu0 %v112
    %3275 = vmatprep.subr.mxu0 0.0
    %3276 = vmatpush1.msra.mxu0 0.0
    %3277 = vmatprep.subr.mxu0 0.0
    %3278 = vmatpush1.msra.mxu0 0.0
    %3279 = vmatprep.subr.mxu0 0.0
    %3280 = vmatpush1.msra.mxu0 0.0
    %3281 = vmatprep.subr.mxu0 0.0
    %3282 = vmatpush1.msra.mxu0 0.0
    %3283 = vmatprep.subr.mxu0 0.0
    %3284 = vmatpush1.msra.mxu0 0.0
    %3285 = vmatprep.subr.mxu0 0.0
    %3286 = vmatpush1.msra.mxu0 0.0
    %3287 = vmatprep.subr.mxu0 0.0
    %3288 = vmatpush1.msra.mxu0 0.0
    %3289 = vmatprep.subr.mxu0 0.0
    %3290 = vmatpush1.msra.mxu0 0.0
    %3291 = vmatprep.subr.mxu0 0.0
    %3292 = vmatpush1.msra.mxu0 0.0
    %3293 = vmatprep.subr.mxu0 0.0
    %3294 = vmatpush1.msra.mxu0 0.0
    %3295 = vmatprep.subr.mxu0 0.0
    %3296 = vmatpush1.msra.mxu0 0.0
    %3297 = vmatprep.subr.mxu0 0.0
    %3298 = vmatpush1.msra.mxu0 0.0
    %3299 = vmatprep.subr.mxu0 0.0
    %3300 = vmatpush1.msra.mxu0 0.0
    %3301 = vmatprep.subr.mxu0 0.0
    %3302 = vmatpush1.msra.mxu0 0.0
    %3303 = vmatprep.subr.mxu0 0.0
    %3304 = vmatpush1.msra.mxu0 0.0
    %3305 = vmatprep.subr.mxu0 0.0
    %3306 = vmatpush1.msra.mxu0 0.0
    %3307 = vmatprep.subr.mxu0 0.0
    %3308 = vmatpush1.msra.mxu0 0.0
    %3309 = vmatprep.subr.mxu0 0.0
    %3310 = vmatpush1.msra.mxu0 0.0
    %3311 = vmatprep.subr.mxu0 0.0
    %3312 = vmatpush1.msra.mxu0 0.0
    %3313 = vmatprep.subr.mxu0 0.0
    %3314 = vmatpush1.msra.mxu0 0.0
    %3315 = vmatprep.subr.mxu0 0.0
    %3316 = vmatpush1.msra.mxu0 0.0
    %3317 = vmatprep.subr.mxu0 0.0
    %3318 = vmatpush1.msra.mxu0 0.0
    %3319 = vmatprep.subr.mxu0 0.0
    %3320 = vmatpush1.msra.mxu0 0.0
    %3321 = vmatprep.subr.mxu0 0.0
    %3322 = vmatpush1.msra.mxu0 0.0
    %3323 = vmatprep.subr.mxu0 0.0
    %3324 = vmatpush1.msra.mxu0 0.0
    %3325 = vmatprep.subr.mxu0 0.0
    %3326 = vmatpush1.msra.mxu0 0.0
    %3327 = vmatprep.subr.mxu0 0.0
    %3328 = vmatpush1.msra.mxu0 0.0
    %3329 = vmatprep.subr.mxu0 0.0
    %3330 = vmatpush1.msra.mxu0 0.0
    %3331 = vmatprep.mubr.f32.mxu0 0.0
    %3332 = vmatmul.mubr.f32.gmra.mrb[0].mxu0 %v3265
    %v3333 = vpop.f32.mrb[0].mxu0
    %v3334 = vadd.f32 %v3255, %v3333
    %v3335 = vpop.f32.mrb[0].mxu0
    %3336 = vdwg.mxu0
    %v3337 = vadd.f32 %v3334, %v550
    %v3338 = vtanh.pop %v3337
    %v3339 = vmul.f32 %v3338, 0.5
    %v3340 = vadd.f32 %v3339, 0.5
    %v3341 = vmul.f32 %v3340, %v2935
    %3343 = vrot.lane.b32.xlu0 %v3338, 64
    %v3344 = vpop.permute.xlu0 %3343
    %v3346 = vmul.f32 %v3340, %v3344
    %3348 = vrot.lane.b32.xlu0 %v3346, 32
    %v3349 = vpop.permute.xlu0 %3348
    %v3351 = vadd.f32 %v3341, %v3349
    %v3352 = vtanh.pop %v3351
    %3354 = vrot.lane.b32.xlu0 %v3352, 64
    %v3355 = vpop.permute.xlu0 %3354
    %v3357 = vmul.f32 %v3340, %v3355
    %v3360 = vunpack.c.l.s4 1966171168
    %v3361 = vunpack.c.0.s8 %v3360
    %v3362 = vlaneseq
    %v3363 = vshrl.u32 %v3362, 7
    %v3364 = vsub.s32 %v3361, %v3363
    %v3365 = vrot.slane %v3357, %v3364
    %v3366 = vcombine.high %v3365, %v3365
    %v3368 = vunpack.c.l.s4 1966171168
    %v3369 = vunpack.c.0.s8 %v3368
    %v3370 = vlaneseq
    %v3371 = vshrl.u32 %v3370, 7
    %v3372 = vsub.s32 %v3369, %v3371
    %v3373 = vrot.slane %v3365, %v3372
    %v3375 = vunpack.c.l.s4 1966171168
    %v3376 = vunpack.c.0.s8 %v3375
    %v3377 = vlaneseq
    %v3378 = vshrl.u32 %v3377, 7
    %v3379 = vsub.s32 %v3376, %v3378
    %v3380 = vrot.slane %v3366, %v3379
    %v3381 = vlaneseq
    %v3382 = vshrl.u32 %v3381, 7
    %v3383 = vsub.s32 0, %v3382
    %v3384 = vrot.slane %v3373, %v3383
    %v3385 = vlaneseq
    %v3386 = vshrl.u32 %v3385, 7
    %v3387 = vsub.s32 0, %v3386
    %v3388 = vrot.slane %v3380, %v3387
    %3389 = vrot.lane.b32.xlu0 %v3384, 32
    %v3390 = vpop.permute.xlu0 %3389
    %3391 = vrot.lane.b32.xlu0 %v3388, 32
    %v3392 = vpop.permute.xlu0 %3391
    %3395 = vst.msk [vmem:[#allocation11 + $0x7] sm:$0x1] %vm610, %v3390
    %3396 = vst.msk [vmem:[#allocation11 + $0xf] sm:$0x1] %vm610, %v3392
    %3397 = vrot.lane.b32.xlu0 %v3357, 32
    %v3398 = vpop.permute.xlu0 %3397
    %3400 = vst.msk [vmem:[#allocation12] sm:$0x3] %vm341, %v3398
    %3402 = vrot.lane.b32.xlu0 %v3351, 96
    %v3403 = vpop.permute.xlu0 %3402
    %3405 = vst.msk [vmem:[#allocation14] sm:$0x3] %vm341, %v3403
    // Predicated region
    $region58: #{rnn_encoder_forward.1} parent=1 // pred_check
      _
    $region59: #{rnn_encoder_forward.1} parent=1 // pred_check_branch
      %3407 = sbr.rel (0) target = $region61
    $region60: #{rnn_encoder_forward.1} parent=1 // pred_region
      %s3409 = ssub.s32 256, 256
      %3410 = vsyncadd [#allocation4], %s3409
      %s3411 = sshll.u32 [#allocation11], 4
      %s3412 = int_to_ptr.vmem [resolvable:$true] %s3411
      %3417 = dma.vmem_to_hbm [thread:$0]  %s3412, 256, %s9, [#allocation4], 128, 128, 8
    $region61: #{rnn_encoder_forward.1} parent=1 // pred_fallthru
      _
    // Predicated region
    $region62: #{rnn_encoder_forward.1} parent=1 // pred_check
      _
    $region63: #{rnn_encoder_forward.1} parent=1 // pred_check_branch
      %3419 = sbr.rel (0) target = $region65
    $region64: #{rnn_encoder_forward.1} parent=1 // pred_region
      %s3421 = ssub.s32 32, 32
      %3422 = vsyncadd [#allocation13], %s3421
      %s3424 = sshll.u32 [#allocation12], 4
      %s3425 = int_to_ptr.vmem [resolvable:$true] %s3424
      %3427 = dma.vmem_to_hbm [thread:$0]  %s3425, 32, %s10, [#allocation13]
    $region65: #{rnn_encoder_forward.1} parent=1 // pred_fallthru
      _
    // Predicated region
    $region66: #{rnn_encoder_forward.1} parent=1 // pred_check
      _
    $region67: #{rnn_encoder_forward.1} parent=1 // pred_check_branch
      %3429 = sbr.rel (0) target = $region69
    $region68: #{rnn_encoder_forward.1} parent=1 // pred_region
      %s3431 = ssub.s32 32, 32
      %3432 = vsyncadd [#allocation13], %s3431
      %s3434 = sshll.u32 [#allocation14], 4
      %s3435 = int_to_ptr.vmem [resolvable:$true] %s3434
      %3437 = dma.vmem_to_hbm [thread:$0]  %s3435, 32, %s11, [#allocation13]
    $region69: #{rnn_encoder_forward.1} parent=1 // pred_fallthru
      _
    // Predicated region
    $region70: #{rnn_encoder_forward.1} parent=1 // pred_check
      _
    $region71: #{rnn_encoder_forward.1} parent=1 // pred_check_branch
      %3439 = sbr.rel (0) target = $region73
    $region72: #{rnn_encoder_forward.1} parent=1 // pred_region
      %3440 = dma.done [#allocation4], 256
    $region73: #{rnn_encoder_forward.1} parent=1 // pred_fallthru
      _
    // Predicated region
    $region74: #{rnn_encoder_forward.1} parent=1 // pred_check
      _
    $region75: #{rnn_encoder_forward.1} parent=1 // pred_check_branch
      %3442 = sbr.rel (0) target = $region77
    $region76: #{rnn_encoder_forward.1} parent=1 // pred_region
      %3443 = dma.done [#allocation13], 32
    $region77: #{rnn_encoder_forward.1} parent=1 // pred_fallthru
      _
    // Predicated region
    $region78: #{rnn_encoder_forward.1} parent=1 // pred_check
      _
    $region79: #{rnn_encoder_forward.1} parent=1 // pred_check_branch
      %3445 = sbr.rel (0) target = $region81
    $region80: #{rnn_encoder_forward.1} parent=1 // pred_region
      %3446 = dma.done [#allocation13], 32
    $region81: #{rnn_encoder_forward.1} parent=1 // pred_fallthru
      _
    %3447 = vsyncpa [#allocation3], 1
    %3448 = vsyncpa [#allocation6], 1
    %3449 = vsyncpa [#allocation9], 1
    %3450 = vsyncpa [#allocation4], 1
    %3451 = vsyncpa [#allocation13], 1

</llo_original>
